<compile_context>
chip_gen: v5e
topology: v5e:2x2
jax: 0.10.0
libtpu: 0.0.40
codegen_flags: <defaults>
</compile_context>

<pallas_src>
import jax
import jax.numpy as jnp
from jax.experimental import pallas as pl
from jax.experimental.pallas import tpu as pltpu

D_IN = 1024 * 2       # ELMo concat feature dim
D_H = 300             # module hidden size
D_H_PAD = 384         # 3 * 128 lanes


# ---------------------------------------------------------------------------
# Pallas kernel: FeedForward(2048->300) -> k/v FeedForwards (300->300)
#                -> key . v_cls -> softmax over seq -> weighted sum of values
# ---------------------------------------------------------------------------
def question_focus_kernel(
    cat_ref,      # [TB, S, D_IN]      bf16
    w1_ref,       # [D_IN, D_H_PAD]    bf16   (elmo_reduction.linear_1, transposed, zero-padded)
    b1_ref,       # [1, D_H_PAD]       f32
    wk_ref,       # [D_H_PAD, D_H_PAD] bf16   (k.linear_1, transposed, zero-padded)
    bk_ref,       # [1, D_H_PAD]       f32
    wv_ref,       # [D_H_PAD, D_H_PAD] bf16   (v.linear_1, transposed, zero-padded)
    bv_ref,       # [1, D_H_PAD]       f32
    vcls_ref,     # [1, D_H_PAD]       f32    (v_cls as a row, zero-padded)
    wsum_ref,     # out: [TB, D_H_PAD] f32
    dot_ref,      # out: [TB, S]       f32    (lane-dense; unit dim added in wrapper)
):
    x = cat_ref[...]                       # bf16
    tb, s, d_in = x.shape
    d_h = w1_ref.shape[1]

    x2 = x.reshape(tb * s, d_in)

    # elmo_reduction: ReLU(Linear(2048 -> 384padded))   (dropout = identity in eval)
    redu = jnp.maximum(
        jnp.dot(x2, w1_ref[...], preferred_element_type=jnp.float32) + b1_ref[...],
        0.0,
    )
    redu_bf = redu.astype(jnp.bfloat16)

    # k / v projections: ReLU(Linear(300 -> 300), padded to 384)
    key = jnp.maximum(
        jnp.dot(redu_bf, wk_ref[...], preferred_element_type=jnp.float32) + bk_ref[...],
        0.0,
    )
    val = jnp.maximum(
        jnp.dot(redu_bf, wv_ref[...], preferred_element_type=jnp.float32) + bv_ref[...],
        0.0,
    )

    key3 = key.reshape(tb, s, d_h)
    val3 = val.reshape(tb, s, d_h)

    # dotProducSimi = key @ v_cls  -> VPU multiply + lane reduce (no N=1 MXU pass).
    dots = jnp.sum(key3 * vcls_ref[...], axis=-1)          # [TB, S] f32

    # softmax over the sequence dimension (dim=1 in the PyTorch module)
    m = jnp.max(dots, axis=1, keepdims=True)                # [TB, 1]
    e = jnp.exp(dots - m)                                   # [TB, S]
    inv = pl.reciprocal(jnp.sum(e, axis=1, keepdims=True), approx=True)
    p = e * inv                                             # [TB, S]

    # attVector = value * normedSimi ; weightedSum = sum over seq
    wsum = jnp.sum(val3 * p[:, :, None], axis=1)            # [TB, D_H_PAD]

    wsum_ref[...] = wsum
    dot_ref[...] = dots


# ---------------------------------------------------------------------------
# Wrapper
# ---------------------------------------------------------------------------
def _pad_last(x, target):
    pad = target - x.shape[-1]
    if pad == 0:
        return x
    return jnp.pad(x, [(0, 0)] * (x.ndim - 1) + [(0, pad)])


def _prepare_params(params):
    """Zero-pad hidden dim 300->384, cast weight matrices to bf16."""
    w1 = _pad_last(params["w1"], D_H_PAD).astype(jnp.bfloat16)             # [2048, 384]
    b1 = _pad_last(params["b1"], D_H_PAD).astype(jnp.float32)              # [1, 384]
    wk = _pad_last(jnp.pad(params["wk"], ((0, D_H_PAD - D_H), (0, 0))),
                   D_H_PAD).astype(jnp.bfloat16)                           # [384, 384]
    bk = _pad_last(params["bk"], D_H_PAD).astype(jnp.float32)
    wv = _pad_last(jnp.pad(params["wv"], ((0, D_H_PAD - D_H), (0, 0))),
                   D_H_PAD).astype(jnp.bfloat16)
    bv = _pad_last(params["bv"], D_H_PAD).astype(jnp.float32)
    vcls = _pad_last(params["v_cls"].reshape(1, D_H), D_H_PAD).astype(jnp.float32)
    return w1, b1, wk, bk, wv, bv, vcls


def _pick_batch_tile(B, S, target_rows=512):
    """Batch tile: full sequence per step (softmax spans S); ~target_rows rows/step."""
    if B * S <= target_rows:
        return B
    cand = max(1, target_rows // max(S, 1))
    for tb in range(min(cand, B), 0, -1):
        # (8,128) rule on the [TB, D_H_PAD] output block: TB==B or TB % 8 == 0
        if B % tb == 0 and (tb == B or tb % 8 == 0):
            return tb
    return B


def question_focus_forward(cat_embd, params):
    """cat_embd: [B, S, 2048]. Returns (weightedSum [B,300] f32, dotProducSimi [B,S,1] f32)."""
    B, S, d_in = cat_embd.shape
    assert d_in == D_IN

    w1, b1, wk, bk, wv, bv, vcls = _prepare_params(params)
    x = cat_embd.astype(jnp.bfloat16)

    TB = _pick_batch_tile(B, S)
    grid = (B // TB,)

    # Weights/biases: full block, constant index_map -> VMEM-resident across steps.
    const2d = lambda shape: pl.BlockSpec(shape, lambda i: (0, 0))

    in_specs = [
        pl.BlockSpec((TB, S, D_IN), lambda i: (i, 0, 0)),   # cat_embd, tiled by batch
        const2d((D_IN, D_H_PAD)),                           # w1
        const2d((1, D_H_PAD)),                              # b1
        const2d((D_H_PAD, D_H_PAD)),                        # wk
        const2d((1, D_H_PAD)),                              # bk
        const2d((D_H_PAD, D_H_PAD)),                        # wv
        const2d((1, D_H_PAD)),                              # bv
        const2d((1, D_H_PAD)),                              # v_cls (row)
    ]
    out_specs = (
        pl.BlockSpec((TB, D_H_PAD), lambda i: (i, 0)),      # weightedSum (padded)
        pl.BlockSpec((TB, S), lambda i: (i, 0)),            # dotProducSimi (lane-dense)
    )

    flops = (2 * B * S * D_IN * D_H_PAD          # reduction matmul
             + 4 * B * S * D_H_PAD * D_H_PAD     # k + v matmuls
             + 2 * B * S * D_H_PAD               # dot-product similarity
             + 2 * B * S * D_H_PAD)              # weighted sum
    bytes_accessed = (B * S * D_IN * 2                       # cat_embd (bf16)
                      + D_IN * D_H_PAD * 2                   # w1
                      + 2 * D_H_PAD * D_H_PAD * 2            # wk, wv
                      + 4 * D_H_PAD * 4                      # biases + v_cls
                      + B * D_H_PAD * 4 + B * S * 4)         # outputs

    wsum_pad, dots2d = pl.pallas_call(
        question_focus_kernel,
        out_shape=(
            jax.ShapeDtypeStruct((B, D_H_PAD), jnp.float32),
            jax.ShapeDtypeStruct((B, S), jnp.float32),
        ),
        grid_spec=pltpu.PrefetchScalarGridSpec(
            num_scalar_prefetch=0,
            grid=grid,
            in_specs=in_specs,
            out_specs=out_specs,
        ),
        compiler_params=pltpu.CompilerParams(
            dimension_semantics=("parallel",),
        ),
        cost_estimate=pl.CostEstimate(
            flops=flops,
            transcendentals=B * S,
            bytes_accessed=bytes_accessed,
        ),
    )(x, w1, b1, wk, bk, wv, bv, vcls)

    weighted_sum = wsum_pad[:, :D_H]            # drop the 300->384 padding
    dot_produc_simi = dots2d[:, :, None]        # restore the trailing unit dim
    return weighted_sum, dot_produc_simi


# ---------------------------------------------------------------------------
# Pure-JAX reference (mirrors the kernel's bf16 storage for a fair check)
# ---------------------------------------------------------------------------
def question_focus_ref(cat_embd, params):
    x = cat_embd.astype(jnp.bfloat16)
    w1 = params["w1"].astype(jnp.bfloat16)
    wk = params["wk"].astype(jnp.bfloat16)
    wv = params["wv"].astype(jnp.bfloat16)

    redu = jnp.maximum(
        jnp.dot(x, w1, preferred_element_type=jnp.float32) + params["b1"][0], 0.0)
    redu = redu.astype(jnp.bfloat16)
    key = jnp.maximum(
        jnp.dot(redu, wk, preferred_element_type=jnp.float32) + params["bk"][0], 0.0)
    val = jnp.maximum(
        jnp.dot(redu, wv, preferred_element_type=jnp.float32) + params["bv"][0], 0.0)

    dots = key @ params["v_cls"]                 # [B, S, 1]
    p = jax.nn.softmax(dots, axis=1)
    wsum = jnp.sum(val * p, axis=1)
    return wsum, dots


if __name__ == "__main__":
    # Shapes implied by the module: feature dim = 1024*2 = 2048, hidden = 300.
    B, S = 2, 8

    key0 = jax.random.PRNGKey(0)
    k_x, k_w1, k_b1, k_wk, k_bk, k_wv, k_bv, k_vcls = jax.random.split(key0, 8)

    # Synthetic stand-in for the concatenated ELMo representations.
    # TODO(synk): the pretrained ELMo biLM itself is not implemented (external model).
    cat_embd = jax.random.normal(k_x, (B, S, D_IN), dtype=jnp.float32)

    # Deterministic parameter init (weights stored as [in, out], i.e. W.T of nn.Linear).
    params = {
        "w1": jax.random.normal(k_w1, (D_IN, D_H), jnp.float32) * 0.02,
        "b1": jax.random.normal(k_b1, (1, D_H), jnp.float32) * 0.02,
        "wk": jax.random.normal(k_wk, (D_H, D_H), jnp.float32) * 0.05,
        "bk": jax.random.normal(k_bk, (1, D_H), jnp.float32) * 0.05,
        "wv": jax.random.normal(k_wv, (D_H, D_H), jnp.float32) * 0.05,
        "bv": jax.random.normal(k_bv, (1, D_H), jnp.float32) * 0.05,
        "v_cls": jax.random.normal(k_vcls, (D_H, 1), jnp.float32),
    }

    wsum, dots = jax.block_until_ready(question_focus_forward(cat_embd, params))
    wsum_ref, dots_ref = question_focus_ref(cat_embd, params)

    assert wsum.shape == (B, D_H) and dots.shape == (B, S, 1)
    assert jnp.allclose(wsum, wsum_ref, atol=2e-2, rtol=2e-2)
    assert jnp.allclose(dots, dots_ref, atol=2e-2, rtol=2e-2)

    print("KERNEL_OK")
</pallas_src>

<mosaic_0001>
module attributes {stable_mosaic.version = 11 : i64} {
  func.func @question_focus_kernel(%arg0: i32, %arg1: memref<2x8x2048xbf16, #tpu.memory_space<vmem>>, %arg2: memref<2048x384xbf16, #tpu.memory_space<vmem>>, %arg3: memref<1x384xf32, #tpu.memory_space<vmem>>, %arg4: memref<384x384xbf16, #tpu.memory_space<vmem>>, %arg5: memref<1x384xf32, #tpu.memory_space<vmem>>, %arg6: memref<384x384xbf16, #tpu.memory_space<vmem>>, %arg7: memref<1x384xf32, #tpu.memory_space<vmem>>, %arg8: memref<1x384xf32, #tpu.memory_space<vmem>>, %arg9: memref<2x384xf32, #tpu.memory_space<vmem>>, %arg10: memref<2x8xf32, #tpu.memory_space<vmem>>) attributes {dimension_semantics = [#tpu.dimension_semantics<parallel>], iteration_bounds = array<i64: 1>, scalar_prefetch = 0 : i64, scratch_operands = 0 : i64, tpu.core_type = #tpu.core_type<tc>, window_params = [{transform_indices = @transform_0, window_bounds = array<i64: 2, 8, 2048>}, {pipeline_mode = #tpu.pipeline_mode<synchronous>, transform_indices = @transform_1, window_bounds = array<i64: 2048, 384>}, {pipeline_mode = #tpu.pipeline_mode<synchronous>, transform_indices = @transform_2, window_bounds = array<i64: 1, 384>}, {pipeline_mode = #tpu.pipeline_mode<synchronous>, transform_indices = @transform_3, window_bounds = array<i64: 384, 384>}, {pipeline_mode = #tpu.pipeline_mode<synchronous>, transform_indices = @transform_4, window_bounds = array<i64: 1, 384>}, {pipeline_mode = #tpu.pipeline_mode<synchronous>, transform_indices = @transform_5, window_bounds = array<i64: 384, 384>}, {pipeline_mode = #tpu.pipeline_mode<synchronous>, transform_indices = @transform_6, window_bounds = array<i64: 1, 384>}, {pipeline_mode = #tpu.pipeline_mode<synchronous>, transform_indices = @transform_7, window_bounds = array<i64: 1, 384>}, {transform_indices = @transform_8, window_bounds = array<i64: 2, 384>}, {transform_indices = @transform_9, window_bounds = array<i64: 2, 8>}]} {
    %c0 = arith.constant 0 : index
    %c0_0 = arith.constant 0 : index
    %c0_1 = arith.constant 0 : index
    %0 = vector.load %arg1[%c0, %c0_0, %c0_1] : memref<2x8x2048xbf16, #tpu.memory_space<vmem>>, vector<2x8x2048xbf16>
    %1 = vector.shape_cast %0 : vector<2x8x2048xbf16> to vector<16x2048xbf16>
    %c0_2 = arith.constant 0 : index
    %c0_3 = arith.constant 0 : index
    %2 = vector.load %arg2[%c0_2, %c0_3] : memref<2048x384xbf16, #tpu.memory_space<vmem>>, vector<2048x384xbf16>
    %cst = arith.constant dense<0.000000e+00> : vector<16x384xf32>
    %3 = tpu.matmul %1, %2, %cst {dimension_numbers = #tpu.dot_dimension_numbers<[1], [0], [0], [1], [0, 0, 1, 1], [], []>} : vector<16x2048xbf16>, vector<2048x384xbf16>, vector<16x384xf32> -> vector<16x384xf32>
    %c0_4 = arith.constant 0 : index
    %c0_5 = arith.constant 0 : index
    %4 = vector.load %arg3[%c0_4, %c0_5] : memref<1x384xf32, #tpu.memory_space<vmem>>, vector<1x384xf32>
    %5 = vector.broadcast %4 : vector<1x384xf32> to vector<16x384xf32>
    %6 = arith.addf %3, %5 : vector<16x384xf32>
    %cst_6 = arith.constant 0.000000e+00 : f32
    %7 = vector.broadcast %cst_6 : f32 to vector<16x384xf32>
    %8 = arith.maximumf %6, %7 : vector<16x384xf32>
    %9 = arith.truncf %8 : vector<16x384xf32> to vector<16x384xbf16>
    %c0_7 = arith.constant 0 : index
    %c0_8 = arith.constant 0 : index
    %10 = vector.load %arg4[%c0_7, %c0_8] : memref<384x384xbf16, #tpu.memory_space<vmem>>, vector<384x384xbf16>
    %cst_9 = arith.constant dense<0.000000e+00> : vector<16x384xf32>
    %11 = tpu.matmul %9, %10, %cst_9 {dimension_numbers = #tpu.dot_dimension_numbers<[1], [0], [0], [1], [0, 0, 1, 1], [], []>} : vector<16x384xbf16>, vector<384x384xbf16>, vector<16x384xf32> -> vector<16x384xf32>
    %c0_10 = arith.constant 0 : index
    %c0_11 = arith.constant 0 : index
    %12 = vector.load %arg5[%c0_10, %c0_11] : memref<1x384xf32, #tpu.memory_space<vmem>>, vector<1x384xf32>
    %13 = vector.broadcast %12 : vector<1x384xf32> to vector<16x384xf32>
    %14 = arith.addf %11, %13 : vector<16x384xf32>
    %cst_12 = arith.constant 0.000000e+00 : f32
    %15 = vector.broadcast %cst_12 : f32 to vector<16x384xf32>
    %16 = arith.maximumf %14, %15 : vector<16x384xf32>
    %c0_13 = arith.constant 0 : index
    %c0_14 = arith.constant 0 : index
    %17 = vector.load %arg6[%c0_13, %c0_14] : memref<384x384xbf16, #tpu.memory_space<vmem>>, vector<384x384xbf16>
    %cst_15 = arith.constant dense<0.000000e+00> : vector<16x384xf32>
    %18 = tpu.matmul %9, %17, %cst_15 {dimension_numbers = #tpu.dot_dimension_numbers<[1], [0], [0], [1], [0, 0, 1, 1], [], []>} : vector<16x384xbf16>, vector<384x384xbf16>, vector<16x384xf32> -> vector<16x384xf32>
    %c0_16 = arith.constant 0 : index
    %c0_17 = arith.constant 0 : index
    %19 = vector.load %arg7[%c0_16, %c0_17] : memref<1x384xf32, #tpu.memory_space<vmem>>, vector<1x384xf32>
    %20 = vector.broadcast %19 : vector<1x384xf32> to vector<16x384xf32>
    %21 = arith.addf %18, %20 : vector<16x384xf32>
    %cst_18 = arith.constant 0.000000e+00 : f32
    %22 = vector.broadcast %cst_18 : f32 to vector<16x384xf32>
    %23 = arith.maximumf %21, %22 : vector<16x384xf32>
    %24 = vector.shape_cast %16 : vector<16x384xf32> to vector<2x8x384xf32>
    %25 = vector.shape_cast %23 : vector<16x384xf32> to vector<2x8x384xf32>
    %c0_19 = arith.constant 0 : index
    %c0_20 = arith.constant 0 : index
    %26 = vector.load %arg8[%c0_19, %c0_20] : memref<1x384xf32, #tpu.memory_space<vmem>>, vector<1x384xf32>
    %27 = vector.shape_cast %26 : vector<1x384xf32> to vector<1x1x384xf32>
    %28 = vector.broadcast %27 : vector<1x1x384xf32> to vector<2x8x384xf32>
    %29 = arith.mulf %24, %28 : vector<2x8x384xf32>
    %cst_21 = arith.constant dense<0.000000e+00> : vector<2x8xf32>
    %30 = vector.multi_reduction <add>, %29, %cst_21 [2] : vector<2x8x384xf32> to vector<2x8xf32>
    %cst_22 = arith.constant dense<0xFF800000> : vector<2xf32>
    %31 = vector.multi_reduction <maximumf>, %30, %cst_22 [1] : vector<2x8xf32> to vector<2xf32>
    %32 = vector.shape_cast %31 : vector<2xf32> to vector<2x1xf32>
    %33 = vector.broadcast %32 : vector<2x1xf32> to vector<2x8xf32>
    %34 = arith.subf %30, %33 : vector<2x8xf32>
    %35 = math.exp %34 : vector<2x8xf32>
    %cst_23 = arith.constant dense<0.000000e+00> : vector<2xf32>
    %36 = vector.multi_reduction <add>, %35, %cst_23 [1] : vector<2x8xf32> to vector<2xf32>
    %37 = vector.shape_cast %36 : vector<2xf32> to vector<2x1xf32>
    %38 = tpu.reciprocal %37 {approx = true} : vector<2x1xf32> -> vector<2x1xf32>
    %39 = vector.broadcast %38 : vector<2x1xf32> to vector<2x8xf32>
    %40 = arith.mulf %35, %39 : vector<2x8xf32>
    %41 = vector.shape_cast %40 : vector<2x8xf32> to vector<2x8x1xf32>
    %42 = vector.broadcast %41 : vector<2x8x1xf32> to vector<2x8x384xf32>
    %43 = arith.mulf %25, %42 : vector<2x8x384xf32>
    %cst_24 = arith.constant dense<0.000000e+00> : vector<2x384xf32>
    %44 = vector.multi_reduction <add>, %43, %cst_24 [1] : vector<2x8x384xf32> to vector<2x384xf32>
    %c0_25 = arith.constant 0 : index
    %c0_26 = arith.constant 0 : index
    %45 = vector.load %arg9[%c0_25, %c0_26] : memref<2x384xf32, #tpu.memory_space<vmem>>, vector<2x384xf32>
    tpu.vector_store %arg9[%c0_25, %c0_26], %44 {strides = array<i32>} : memref<2x384xf32, #tpu.memory_space<vmem>>, vector<2x384xf32>,
    %c0_27 = arith.constant 0 : index
    %c0_28 = arith.constant 0 : index
    %46 = vector.load %arg10[%c0_27, %c0_28] : memref<2x8xf32, #tpu.memory_space<vmem>>, vector<2x8xf32>
    tpu.vector_store %arg10[%c0_27, %c0_28], %30 {strides = array<i32>} : memref<2x8xf32, #tpu.memory_space<vmem>>, vector<2x8xf32>,
    return
  }
  func.func @transform_0(%arg0: i32) -> (i32, i32, i32) {
    %c0_i32 = arith.constant 0 : i32
    %c0_i32_0 = arith.constant 0 : i32
    %c0_i32_1 = arith.constant 0 : i32
    return %arg0, %c0_i32, %c0_i32_0 : i32, i32, i32
  }
  func.func @transform_1(%arg0: i32) -> (i32, i32) {
    %c0_i32 = arith.constant 0 : i32
    %c0_i32_0 = arith.constant 0 : i32
    %c0_i32_1 = arith.constant 0 : i32
    return %c0_i32, %c0_i32_0 : i32, i32
  }
  func.func @transform_2(%arg0: i32) -> (i32, i32) {
    %c0_i32 = arith.constant 0 : i32
    %c0_i32_0 = arith.constant 0 : i32
    %c0_i32_1 = arith.constant 0 : i32
    return %c0_i32, %c0_i32_0 : i32, i32
  }
  func.func @transform_3(%arg0: i32) -> (i32, i32) {
    %c0_i32 = arith.constant 0 : i32
    %c0_i32_0 = arith.constant 0 : i32
    %c0_i32_1 = arith.constant 0 : i32
    return %c0_i32, %c0_i32_0 : i32, i32
  }
  func.func @transform_4(%arg0: i32) -> (i32, i32) {
    %c0_i32 = arith.constant 0 : i32
    %c0_i32_0 = arith.constant 0 : i32
    %c0_i32_1 = arith.constant 0 : i32
    return %c0_i32, %c0_i32_0 : i32, i32
  }
  func.func @transform_5(%arg0: i32) -> (i32, i32) {
    %c0_i32 = arith.constant 0 : i32
    %c0_i32_0 = arith.constant 0 : i32
    %c0_i32_1 = arith.constant 0 : i32
    return %c0_i32, %c0_i32_0 : i32, i32
  }
  func.func @transform_6(%arg0: i32) -> (i32, i32) {
    %c0_i32 = arith.constant 0 : i32
    %c0_i32_0 = arith.constant 0 : i32
    %c0_i32_1 = arith.constant 0 : i32
    return %c0_i32, %c0_i32_0 : i32, i32
  }
  func.func @transform_7(%arg0: i32) -> (i32, i32) {
    %c0_i32 = arith.constant 0 : i32
    %c0_i32_0 = arith.constant 0 : i32
    %c0_i32_1 = arith.constant 0 : i32
    return %c0_i32, %c0_i32_0 : i32, i32
  }
  func.func @transform_8(%arg0: i32) -> (i32, i32) {
    %c0_i32 = arith.constant 0 : i32
    %c0_i32_0 = arith.constant 0 : i32
    return %arg0, %c0_i32 : i32, i32
  }
  func.func @transform_9(%arg0: i32) -> (i32, i32) {
    %c0_i32 = arith.constant 0 : i32
    %c0_i32_0 = arith.constant 0 : i32
    return %arg0, %c0_i32 : i32, i32
  }
}

</mosaic_0001>

<llo_original>
// kernel: tpu_custom_call.1
$region0: #{tpu_custom_call.1}
  #allocation0 [shape = 'u32[]', space=smem, size = 0x4, offset = 0x4, fixed_abs, tag = 'smem constant byte address 0x4 - core index']
  #allocation1 [shape = 'u32[72,128]{1,0:T(1,128)}', space=vmem, size = 0x9000, scoped, tag = 'internal scratch']
  %s0 = inlined_call_operand.hbm [shape: bf16[2,8,2048], index: 0, kind: input, shape index: {}]
  %s1 = inlined_call_operand.hbm [shape: bf16[2048,384], index: 1, kind: input, shape index: {}]
  %s2 = inlined_call_operand.hbm [shape: f32[1,384], index: 2, kind: input, shape index: {}]
  %s3 = inlined_call_operand.hbm [shape: bf16[384,384], index: 3, kind: input, shape index: {}]
  %s4 = inlined_call_operand.hbm [shape: f32[1,384], index: 4, kind: input, shape index: {}]
  %s5 = inlined_call_operand.hbm [shape: bf16[384,384], index: 5, kind: input, shape index: {}]
  %s6 = inlined_call_operand.hbm [shape: f32[1,384], index: 6, kind: input, shape index: {}]
  %s7 = inlined_call_operand.hbm [shape: f32[1,384], index: 7, kind: input, shape index: {}]
  %s8 = inlined_call_operand.hbm [shape: f32[2,384], index: 8, kind: output, shape index: {0}]
  %s9 = inlined_call_operand.hbm [shape: f32[2,8], index: 9, kind: output, shape index: {1}]
  %10 = xla_tuple %s8, %s9
  %s11 = sld [smem:[#allocation0]]
  $region82: #{tpu_custom_call.1} parent=0
    _
  %s13 = ssub.s32 1, %s11
  %s14 = scalar_select 0, %s13, %s11
  $region1: #{tpu_custom_call.1} parent=0
    #allocation2 [shape = 'u8[65536]{0}', space=vmem, size = 0x10000, scoped, tag = 'input window, operand 0, single buffered']
    #allocation3 [shape = 's32[1]{0}', space=sflag, size = 0x4, scoped, tag = 'scoped memory for tpu_custom_call.1']
    #allocation4 [shape = 's32[1]{0}', space=sflag, size = 0x4, scoped, tag = 'scoped memory for tpu_custom_call.1']
    #allocation5 [shape = 'u8[1572864]{0}', space=vmem, size = 0x180000, scoped, tag = 'input window, operand 1, single buffered']
    #allocation6 [shape = 's32[1]{0}', space=sflag, size = 0x4, scoped, tag = 'scoped memory for tpu_custom_call.1']
    #allocation7 [shape = 'u8[1536]{0}', space=vmem, size = 0x800, scoped, tag = 'input window, operand 2, single buffered']
    #allocation8 [shape = 'u8[294912]{0}', space=vmem, size = 0x48000, scoped, tag = 'input window, operand 3, single buffered']
    #allocation9 [shape = 's32[1]{0}', space=sflag, size = 0x4, scoped, tag = 'scoped memory for tpu_custom_call.1']
    #allocation10 [shape = 'u8[1536]{0}', space=vmem, size = 0x800, scoped, tag = 'input window, operand 4, single buffered']
    #allocation11 [shape = 'u8[294912]{0}', space=vmem, size = 0x48000, scoped, tag = 'input window, operand 5, single buffered']
    #allocation12 [shape = 's32[1]{0}', space=sflag, size = 0x4, scoped, tag = 'scoped memory for tpu_custom_call.1']
    #allocation13 [shape = 'u8[1536]{0}', space=vmem, size = 0x800, scoped, tag = 'input window, operand 6, single buffered']
    #allocation14 [shape = 'u8[1536]{0}', space=vmem, size = 0x800, scoped, tag = 'input window, operand 7, single buffered']
    #allocation15 [shape = 's32[1]{0}', space=sflag, size = 0x4, scoped, tag = 'scoped memory for tpu_custom_call.1']
    #allocation16 [shape = 'u8[3072]{0}', space=vmem, size = 0xc00, scoped, tag = 'output window, operand 0, single buffered']
    #allocation17 [shape = 'u8[1024]{0}', space=vmem, size = 0x400, scoped, tag = 'output window, operand 1, single buffered']
    #allocation18 [shape = 's32[1]{0}', space=sflag, size = 0x4, scoped, tag = 'scoped memory for tpu_custom_call.1']
    %15 = vsyncpa [#allocation3], 0
    %16 = vsyncpa [#allocation6], 0
    %17 = vsyncpa [#allocation9], 0
    %18 = vsyncpa [#allocation12], 0
    %19 = vsyncpa [#allocation15], 0
    %20 = vsyncpa [#allocation4], 0
    %21 = vsyncpa [#allocation18], 0
    // Predicated region
    $region2: #{tpu_custom_call.1} parent=1 // pred_check
      _
    $region3: #{tpu_custom_call.1} parent=1 // pred_check_branch
      %23 = sbr.rel (0) target = $region5
    $region4: #{tpu_custom_call.1} parent=1 // pred_region
      %25 = vsyncadd [#allocation3], 0
      %s26 = sshll.u32 %s0, 4
      %s27 = int_to_ptr.hbm [resolvable:$true] %s26
      %s28 = sshll.u32 [#allocation2], 4
      %s29 = int_to_ptr.vmem [resolvable:$true] %s28
      %34 = dma.hbm_to_vmem [thread:$0]  %s27, 2048, %s29, [#allocation3], 1024, 1024, 64
    $region5: #{tpu_custom_call.1} parent=1 // pred_fallthru
      _
    // Predicated region
    $region6: #{tpu_custom_call.1} parent=1 // pred_check
      _
    $region7: #{tpu_custom_call.1} parent=1 // pred_check_branch
      %36 = sbr.rel (0) target = $region9
    $region8: #{tpu_custom_call.1} parent=1 // pred_region
      %38 = vsyncadd [#allocation6], 0
      %s39 = sshll.u32 %s1, 4
      %s40 = int_to_ptr.hbm [resolvable:$true] %s39
      %s41 = sshll.u32 [#allocation5], 4
      %s42 = int_to_ptr.vmem [resolvable:$true] %s41
      %47 = dma.hbm_to_vmem [thread:$0]  %s40, 49152, %s42, [#allocation6], 192, 192, 12
    $region9: #{tpu_custom_call.1} parent=1 // pred_fallthru
      _
    // Predicated region
    $region10: #{tpu_custom_call.1} parent=1 // pred_check
      _
    $region11: #{tpu_custom_call.1} parent=1 // pred_check_branch
      %49 = sbr.rel (0) target = $region13
    $region12: #{tpu_custom_call.1} parent=1 // pred_region
      %51 = vsyncadd [#allocation6], 0
      %s53 = sshll.u32 %s2, 4
      %s54 = int_to_ptr.hbm [resolvable:$true] %s53
      %s55 = sshll.u32 [#allocation7], 4
      %s56 = int_to_ptr.vmem [resolvable:$true] %s55
      %58 = dma.hbm_to_vmem [thread:$0]  %s54, 48, %s56, [#allocation6]
    $region13: #{tpu_custom_call.1} parent=1 // pred_fallthru
      _
    // Predicated region
    $region14: #{tpu_custom_call.1} parent=1 // pred_check
      _
    $region15: #{tpu_custom_call.1} parent=1 // pred_check_branch
      %60 = sbr.rel (0) target = $region17
    $region16: #{tpu_custom_call.1} parent=1 // pred_region
      %62 = vsyncadd [#allocation9], 0
      %s63 = sshll.u32 %s3, 4
      %s64 = int_to_ptr.hbm [resolvable:$true] %s63
      %s65 = sshll.u32 [#allocation8], 4
      %s66 = int_to_ptr.vmem [resolvable:$true] %s65
      %71 = dma.hbm_to_vmem [thread:$0]  %s64, 9216, %s66, [#allocation9], 192, 192, 12
    $region17: #{tpu_custom_call.1} parent=1 // pred_fallthru
      _
    // Predicated region
    $region18: #{tpu_custom_call.1} parent=1 // pred_check
      _
    $region19: #{tpu_custom_call.1} parent=1 // pred_check_branch
      %73 = sbr.rel (0) target = $region21
    $region20: #{tpu_custom_call.1} parent=1 // pred_region
      %75 = vsyncadd [#allocation9], 0
      %s77 = sshll.u32 %s4, 4
      %s78 = int_to_ptr.hbm [resolvable:$true] %s77
      %s79 = sshll.u32 [#allocation10], 4
      %s80 = int_to_ptr.vmem [resolvable:$true] %s79
      %82 = dma.hbm_to_vmem [thread:$0]  %s78, 48, %s80, [#allocation9]
    $region21: #{tpu_custom_call.1} parent=1 // pred_fallthru
      _
    // Predicated region
    $region22: #{tpu_custom_call.1} parent=1 // pred_check
      _
    $region23: #{tpu_custom_call.1} parent=1 // pred_check_branch
      %84 = sbr.rel (0) target = $region25
    $region24: #{tpu_custom_call.1} parent=1 // pred_region
      %86 = vsyncadd [#allocation12], 0
      %s87 = sshll.u32 %s5, 4
      %s88 = int_to_ptr.hbm [resolvable:$true] %s87
      %s89 = sshll.u32 [#allocation11], 4
      %s90 = int_to_ptr.vmem [resolvable:$true] %s89
      %95 = dma.hbm_to_vmem [thread:$0]  %s88, 9216, %s90, [#allocation12], 192, 192, 12
    $region25: #{tpu_custom_call.1} parent=1 // pred_fallthru
      _
    // Predicated region
    $region26: #{tpu_custom_call.1} parent=1 // pred_check
      _
    $region27: #{tpu_custom_call.1} parent=1 // pred_check_branch
      %97 = sbr.rel (0) target = $region29
    $region28: #{tpu_custom_call.1} parent=1 // pred_region
      %99 = vsyncadd [#allocation12], 0
      %s101 = sshll.u32 %s6, 4
      %s102 = int_to_ptr.hbm [resolvable:$true] %s101
      %s103 = sshll.u32 [#allocation13], 4
      %s104 = int_to_ptr.vmem [resolvable:$true] %s103
      %106 = dma.hbm_to_vmem [thread:$0]  %s102, 48, %s104, [#allocation12]
    $region29: #{tpu_custom_call.1} parent=1 // pred_fallthru
      _
    // Predicated region
    $region30: #{tpu_custom_call.1} parent=1 // pred_check
      _
    $region31: #{tpu_custom_call.1} parent=1 // pred_check_branch
      %108 = sbr.rel (0) target = $region33
    $region32: #{tpu_custom_call.1} parent=1 // pred_region
      %110 = vsyncadd [#allocation15], 0
      %s112 = sshll.u32 %s7, 4
      %s113 = int_to_ptr.hbm [resolvable:$true] %s112
      %s114 = sshll.u32 [#allocation14], 4
      %s115 = int_to_ptr.vmem [resolvable:$true] %s114
      %117 = dma.hbm_to_vmem [thread:$0]  %s113, 48, %s115, [#allocation15]
    $region33: #{tpu_custom_call.1} parent=1 // pred_fallthru
      _
    // Predicated region
    $region34: #{tpu_custom_call.1} parent=1 // pred_check
      _
    $region35: #{tpu_custom_call.1} parent=1 // pred_check_branch
      %119 = sbr.rel (0) target = $region37
    $region36: #{tpu_custom_call.1} parent=1 // pred_region
      %121 = dma.done [#allocation3], 2048
    $region37: #{tpu_custom_call.1} parent=1 // pred_fallthru
      _
    // Predicated region
    $region38: #{tpu_custom_call.1} parent=1 // pred_check
      _
    $region39: #{tpu_custom_call.1} parent=1 // pred_check_branch
      %123 = sbr.rel (0) target = $region41
    $region40: #{tpu_custom_call.1} parent=1 // pred_region
      %125 = dma.done [#allocation6], 49152
    $region41: #{tpu_custom_call.1} parent=1 // pred_fallthru
      _
    // Predicated region
    $region42: #{tpu_custom_call.1} parent=1 // pred_check
      _
    $region43: #{tpu_custom_call.1} parent=1 // pred_check_branch
      %127 = sbr.rel (0) target = $region45
    $region44: #{tpu_custom_call.1} parent=1 // pred_region
      %129 = dma.done [#allocation6], 48
    $region45: #{tpu_custom_call.1} parent=1 // pred_fallthru
      _
    // Predicated region
    $region46: #{tpu_custom_call.1} parent=1 // pred_check
      _
    $region47: #{tpu_custom_call.1} parent=1 // pred_check_branch
      %131 = sbr.rel (0) target = $region49
    $region48: #{tpu_custom_call.1} parent=1 // pred_region
      %133 = dma.done [#allocation9], 9216
    $region49: #{tpu_custom_call.1} parent=1 // pred_fallthru
      _
    // Predicated region
    $region50: #{tpu_custom_call.1} parent=1 // pred_check
      _
    $region51: #{tpu_custom_call.1} parent=1 // pred_check_branch
      %135 = sbr.rel (0) target = $region53
    $region52: #{tpu_custom_call.1} parent=1 // pred_region
      %137 = dma.done [#allocation9], 48
    $region53: #{tpu_custom_call.1} parent=1 // pred_fallthru
      _
    // Predicated region
    $region54: #{tpu_custom_call.1} parent=1 // pred_check
      _
    $region55: #{tpu_custom_call.1} parent=1 // pred_check_branch
      %139 = sbr.rel (0) target = $region57
    $region56: #{tpu_custom_call.1} parent=1 // pred_region
      %141 = dma.done [#allocation12], 9216
    $region57: #{tpu_custom_call.1} parent=1 // pred_fallthru
      _
    // Predicated region
    $region58: #{tpu_custom_call.1} parent=1 // pred_check
      _
    $region59: #{tpu_custom_call.1} parent=1 // pred_check_branch
      %143 = sbr.rel (0) target = $region61
    $region60: #{tpu_custom_call.1} parent=1 // pred_region
      %145 = dma.done [#allocation12], 48
    $region61: #{tpu_custom_call.1} parent=1 // pred_fallthru
      _
    // Predicated region
    $region62: #{tpu_custom_call.1} parent=1 // pred_check
      _
    $region63: #{tpu_custom_call.1} parent=1 // pred_check_branch
      %147 = sbr.rel (0) target = $region65
    $region64: #{tpu_custom_call.1} parent=1 // pred_region
      %149 = dma.done [#allocation15], 48
    $region65: #{tpu_custom_call.1} parent=1 // pred_fallthru
      _
    %v150 = vld [vmem:[#allocation2] sm:$0xff]
    %v151 = vld [vmem:[#allocation2 + $0x8] sm:$0xff]
    %v152 = vld [vmem:[#allocation2 + $0x10] sm:$0xff]
    %v153 = vld [vmem:[#allocation2 + $0x18] sm:$0xff]
    %v154 = vld [vmem:[#allocation2 + $0x20] sm:$0xff]
    %v155 = vld [vmem:[#allocation2 + $0x28] sm:$0xff]
    %v156 = vld [vmem:[#allocation2 + $0x30] sm:$0xff]
    %v157 = vld [vmem:[#allocation2 + $0x38] sm:$0xff]
    %v158 = vld [vmem:[#allocation2 + $0x40] sm:$0xff]
    %v159 = vld [vmem:[#allocation2 + $0x48] sm:$0xff]
    %v160 = vld [vmem:[#allocation2 + $0x50] sm:$0xff]
    %v161 = vld [vmem:[#allocation2 + $0x58] sm:$0xff]
    %v162 = vld [vmem:[#allocation2 + $0x60] sm:$0xff]
    %v163 = vld [vmem:[#allocation2 + $0x68] sm:$0xff]
    %v164 = vld [vmem:[#allocation2 + $0x70] sm:$0xff]
    %v165 = vld [vmem:[#allocation2 + $0x78] sm:$0xff]
    %v166 = vld [vmem:[#allocation5] sm:$0xff]
    %v167 = vld [vmem:[#allocation5 + $0x8] sm:$0xf]
    %v168 = vld [vmem:[#allocation5 + $0xc] sm:$0xff]
    %v169 = vld [vmem:[#allocation5 + $0x14] sm:$0xf]
    %v170 = vld [vmem:[#allocation5 + $0x18] sm:$0xff]
    %v171 = vld [vmem:[#allocation5 + $0x20] sm:$0xf]
    %v172 = vld [vmem:[#allocation5 + $0x24] sm:$0xff]
    %v173 = vld [vmem:[#allocation5 + $0x2c] sm:$0xf]
    %v174 = vld [vmem:[#allocation5 + $0x30] sm:$0xff]
    %v175 = vld [vmem:[#allocation5 + $0x38] sm:$0xf]
    %v176 = vld [vmem:[#allocation5 + $0x3c] sm:$0xff]
    %v177 = vld [vmem:[#allocation5 + $0x44] sm:$0xf]
    %v178 = vld [vmem:[#allocation5 + $0x48] sm:$0xff]
    %v179 = vld [vmem:[#allocation5 + $0x50] sm:$0xf]
    %v180 = vld [vmem:[#allocation5 + $0x54] sm:$0xff]
    %v181 = vld [vmem:[#allocation5 + $0x5c] sm:$0xf]
    %v182 = vld [vmem:[#allocation5 + $0x60] sm:$0xff]
    %v183 = vld [vmem:[#allocation5 + $0x68] sm:$0xf]
    %v184 = vld [vmem:[#allocation5 + $0x6c] sm:$0xff]
    %v185 = vld [vmem:[#allocation5 + $0x74] sm:$0xf]
    %v186 = vld [vmem:[#allocation5 + $0x78] sm:$0xff]
    %v187 = vld [vmem:[#allocation5 + $0x80] sm:$0xf]
    %v188 = vld [vmem:[#allocation5 + $0x84] sm:$0xff]
    %v189 = vld [vmem:[#allocation5 + $0x8c] sm:$0xf]
    %v190 = vld [vmem:[#allocation5 + $0x90] sm:$0xff]
    %v191 = vld [vmem:[#allocation5 + $0x98] sm:$0xf]
    %v192 = vld [vmem:[#allocation5 + $0x9c] sm:$0xff]
    %v193 = vld [vmem:[#allocation5 + $0xa4] sm:$0xf]
    %v194 = vld [vmem:[#allocation5 + $0xa8] sm:$0xff]
    %v195 = vld [vmem:[#allocation5 + $0xb0] sm:$0xf]
    %v196 = vld [vmem:[#allocation5 + $0xb4] sm:$0xff]
    %v197 = vld [vmem:[#allocation5 + $0xbc] sm:$0xf]
    %v198 = vld [vmem:[#allocation5 + $0xc0] sm:$0xff]
    %v199 = vld [vmem:[#allocation5 + $0xc8] sm:$0xf]
    %v200 = vld [vmem:[#allocation5 + $0xcc] sm:$0xff]
    %v201 = vld [vmem:[#allocation5 + $0xd4] sm:$0xf]
    %v202 = vld [vmem:[#allocation5 + $0xd8] sm:$0xff]
    %v203 = vld [vmem:[#allocation5 + $0xe0] sm:$0xf]
    %v204 = vld [vmem:[#allocation5 + $0xe4] sm:$0xff]
    %v205 = vld [vmem:[#allocation5 + $0xec] sm:$0xf]
    %v206 = vld [vmem:[#allocation5 + $0xf0] sm:$0xff]
    %v207 = vld [vmem:[#allocation5 + $0xf8] sm:$0xf]
    %v208 = vld [vmem:[#allocation5 + $0xfc] sm:$0xff]
    %v209 = vld [vmem:[#allocation5 + $0x104] sm:$0xf]
    %v210 = vld [vmem:[#allocation5 + $0x108] sm:$0xff]
    %v211 = vld [vmem:[#allocation5 + $0x110] sm:$0xf]
    %v212 = vld [vmem:[#allocation5 + $0x114] sm:$0xff]
    %v213 = vld [vmem:[#allocation5 + $0x11c] sm:$0xf]
    %v214 = vld [vmem:[#allocation5 + $0x120] sm:$0xff]
    %v215 = vld [vmem:[#allocation5 + $0x128] sm:$0xf]
    %v216 = vld [vmem:[#allocation5 + $0x12c] sm:$0xff]
    %v217 = vld [vmem:[#allocation5 + $0x134] sm:$0xf]
    %v218 = vld [vmem:[#allocation5 + $0x138] sm:$0xff]
    %v219 = vld [vmem:[#allocation5 + $0x140] sm:$0xf]
    %v220 = vld [vmem:[#allocation5 + $0x144] sm:$0xff]
    %v221 = vld [vmem:[#allocation5 + $0x14c] sm:$0xf]
    %v222 = vld [vmem:[#allocation5 + $0x150] sm:$0xff]
    %v223 = vld [vmem:[#allocation5 + $0x158] sm:$0xf]
    %v224 = vld [vmem:[#allocation5 + $0x15c] sm:$0xff]
    %v225 = vld [vmem:[#allocation5 + $0x164] sm:$0xf]
    %v226 = vld [vmem:[#allocation5 + $0x168] sm:$0xff]
    %v227 = vld [vmem:[#allocation5 + $0x170] sm:$0xf]
    %v228 = vld [vmem:[#allocation5 + $0x174] sm:$0xff]
    %v229 = vld [vmem:[#allocation5 + $0x17c] sm:$0xf]
    %v230 = vld [vmem:[#allocation5 + $0x180] sm:$0xff]
    %v231 = vld [vmem:[#allocation5 + $0x188] sm:$0xf]
    %v232 = vld [vmem:[#allocation5 + $0x18c] sm:$0xff]
    %v233 = vld [vmem:[#allocation5 + $0x194] sm:$0xf]
    %v234 = vld [vmem:[#allocation5 + $0x198] sm:$0xff]
    %v235 = vld [vmem:[#allocation5 + $0x1a0] sm:$0xf]
    %v236 = vld [vmem:[#allocation5 + $0x1a4] sm:$0xff]
    %v237 = vld [vmem:[#allocation5 + $0x1ac] sm:$0xf]
    %v238 = vld [vmem:[#allocation5 + $0x1b0] sm:$0xff]
    %v239 = vld [vmem:[#allocation5 + $0x1b8] sm:$0xf]
    %v240 = vld [vmem:[#allocation5 + $0x1bc] sm:$0xff]
    %v241 = vld [vmem:[#allocation5 + $0x1c4] sm:$0xf]
    %v242 = vld [vmem:[#allocation5 + $0x1c8] sm:$0xff]
    %v243 = vld [vmem:[#allocation5 + $0x1d0] sm:$0xf]
    %v244 = vld [vmem:[#allocation5 + $0x1d4] sm:$0xff]
    %v245 = vld [vmem:[#allocation5 + $0x1dc] sm:$0xf]
    %v246 = vld [vmem:[#allocation5 + $0x1e0] sm:$0xff]
    %v247 = vld [vmem:[#allocation5 + $0x1e8] sm:$0xf]
    %v248 = vld [vmem:[#allocation5 + $0x1ec] sm:$0xff]
    %v249 = vld [vmem:[#allocation5 + $0x1f4] sm:$0xf]
    %v250 = vld [vmem:[#allocation5 + $0x1f8] sm:$0xff]
    %v251 = vld [vmem:[#allocation5 + $0x200] sm:$0xf]
    %v252 = vld [vmem:[#allocation5 + $0x204] sm:$0xff]
    %v253 = vld [vmem:[#allocation5 + $0x20c] sm:$0xf]
    %v254 = vld [vmem:[#allocation5 + $0x210] sm:$0xff]
    %v255 = vld [vmem:[#allocation5 + $0x218] sm:$0xf]
    %v256 = vld [vmem:[#allocation5 + $0x21c] sm:$0xff]
    %v257 = vld [vmem:[#allocation5 + $0x224] sm:$0xf]
    %v258 = vld [vmem:[#allocation5 + $0x228] sm:$0xff]
    %v259 = vld [vmem:[#allocation5 + $0x230] sm:$0xf]
    %v260 = vld [vmem:[#allocation5 + $0x234] sm:$0xff]
    %v261 = vld [vmem:[#allocation5 + $0x23c] sm:$0xf]
    %v262 = vld [vmem:[#allocation5 + $0x240] sm:$0xff]
    %v263 = vld [vmem:[#allocation5 + $0x248] sm:$0xf]
    %v264 = vld [vmem:[#allocation5 + $0x24c] sm:$0xff]
    %v265 = vld [vmem:[#allocation5 + $0x254] sm:$0xf]
    %v266 = vld [vmem:[#allocation5 + $0x258] sm:$0xff]
    %v267 = vld [vmem:[#allocation5 + $0x260] sm:$0xf]
    %v268 = vld [vmem:[#allocation5 + $0x264] sm:$0xff]
    %v269 = vld [vmem:[#allocation5 + $0x26c] sm:$0xf]
    %v270 = vld [vmem:[#allocation5 + $0x270] sm:$0xff]
    %v271 = vld [vmem:[#allocation5 + $0x278] sm:$0xf]
    %v272 = vld [vmem:[#allocation5 + $0x27c] sm:$0xff]
    %v273 = vld [vmem:[#allocation5 + $0x284] sm:$0xf]
    %v274 = vld [vmem:[#allocation5 + $0x288] sm:$0xff]
    %v275 = vld [vmem:[#allocation5 + $0x290] sm:$0xf]
    %v276 = vld [vmem:[#allocation5 + $0x294] sm:$0xff]
    %v277 = vld [vmem:[#allocation5 + $0x29c] sm:$0xf]
    %v278 = vld [vmem:[#allocation5 + $0x2a0] sm:$0xff]
    %v279 = vld [vmem:[#allocation5 + $0x2a8] sm:$0xf]
    %v280 = vld [vmem:[#allocation5 + $0x2ac] sm:$0xff]
    %v281 = vld [vmem:[#allocation5 + $0x2b4] sm:$0xf]
    %v282 = vld [vmem:[#allocation5 + $0x2b8] sm:$0xff]
    %v283 = vld [vmem:[#allocation5 + $0x2c0] sm:$0xf]
    %v284 = vld [vmem:[#allocation5 + $0x2c4] sm:$0xff]
    %v285 = vld [vmem:[#allocation5 + $0x2cc] sm:$0xf]
    %v286 = vld [vmem:[#allocation5 + $0x2d0] sm:$0xff]
    %v287 = vld [vmem:[#allocation5 + $0x2d8] sm:$0xf]
    %v288 = vld [vmem:[#allocation5 + $0x2dc] sm:$0xff]
    %v289 = vld [vmem:[#allocation5 + $0x2e4] sm:$0xf]
    %v290 = vld [vmem:[#allocation5 + $0x2e8] sm:$0xff]
    %v291 = vld [vmem:[#allocation5 + $0x2f0] sm:$0xf]
    %v292 = vld [vmem:[#allocation5 + $0x2f4] sm:$0xff]
    %v293 = vld [vmem:[#allocation5 + $0x2fc] sm:$0xf]
    %v294 = vld [vmem:[#allocation5 + $0x300] sm:$0xff]
    %v295 = vld [vmem:[#allocation5 + $0x308] sm:$0xf]
    %v296 = vld [vmem:[#allocation5 + $0x30c] sm:$0xff]
    %v297 = vld [vmem:[#allocation5 + $0x314] sm:$0xf]
    %v298 = vld [vmem:[#allocation5 + $0x318] sm:$0xff]
    %v299 = vld [vmem:[#allocation5 + $0x320] sm:$0xf]
    %v300 = vld [vmem:[#allocation5 + $0x324] sm:$0xff]
    %v301 = vld [vmem:[#allocation5 + $0x32c] sm:$0xf]
    %v302 = vld [vmem:[#allocation5 + $0x330] sm:$0xff]
    %v303 = vld [vmem:[#allocation5 + $0x338] sm:$0xf]
    %v304 = vld [vmem:[#allocation5 + $0x33c] sm:$0xff]
    %v305 = vld [vmem:[#allocation5 + $0x344] sm:$0xf]
    %v306 = vld [vmem:[#allocation5 + $0x348] sm:$0xff]
    %v307 = vld [vmem:[#allocation5 + $0x350] sm:$0xf]
    %v308 = vld [vmem:[#allocation5 + $0x354] sm:$0xff]
    %v309 = vld [vmem:[#allocation5 + $0x35c] sm:$0xf]
    %v310 = vld [vmem:[#allocation5 + $0x360] sm:$0xff]
    %v311 = vld [vmem:[#allocation5 + $0x368] sm:$0xf]
    %v312 = vld [vmem:[#allocation5 + $0x36c] sm:$0xff]
    %v313 = vld [vmem:[#allocation5 + $0x374] sm:$0xf]
    %v314 = vld [vmem:[#allocation5 + $0x378] sm:$0xff]
    %v315 = vld [vmem:[#allocation5 + $0x380] sm:$0xf]
    %v316 = vld [vmem:[#allocation5 + $0x384] sm:$0xff]
    %v317 = vld [vmem:[#allocation5 + $0x38c] sm:$0xf]
    %v318 = vld [vmem:[#allocation5 + $0x390] sm:$0xff]
    %v319 = vld [vmem:[#allocation5 + $0x398] sm:$0xf]
    %v320 = vld [vmem:[#allocation5 + $0x39c] sm:$0xff]
    %v321 = vld [vmem:[#allocation5 + $0x3a4] sm:$0xf]
    %v322 = vld [vmem:[#allocation5 + $0x3a8] sm:$0xff]
    %v323 = vld [vmem:[#allocation5 + $0x3b0] sm:$0xf]
    %v324 = vld [vmem:[#allocation5 + $0x3b4] sm:$0xff]
    %v325 = vld [vmem:[#allocation5 + $0x3bc] sm:$0xf]
    %v326 = vld [vmem:[#allocation5 + $0x3c0] sm:$0xff]
    %v327 = vld [vmem:[#allocation5 + $0x3c8] sm:$0xf]
    %v328 = vld [vmem:[#allocation5 + $0x3cc] sm:$0xff]
    %v329 = vld [vmem:[#allocation5 + $0x3d4] sm:$0xf]
    %v330 = vld [vmem:[#allocation5 + $0x3d8] sm:$0xff]
    %v331 = vld [vmem:[#allocation5 + $0x3e0] sm:$0xf]
    %v332 = vld [vmem:[#allocation5 + $0x3e4] sm:$0xff]
    %v333 = vld [vmem:[#allocation5 + $0x3ec] sm:$0xf]
    %v334 = vld [vmem:[#allocation5 + $0x3f0] sm:$0xff]
    %v335 = vld [vmem:[#allocation5 + $0x3f8] sm:$0xf]
    %v336 = vld [vmem:[#allocation5 + $0x3fc] sm:$0xff]
    %v337 = vld [vmem:[#allocation5 + $0x404] sm:$0xf]
    %v338 = vld [vmem:[#allocation5 + $0x408] sm:$0xff]
    %v339 = vld [vmem:[#allocation5 + $0x410] sm:$0xf]
    %v340 = vld [vmem:[#allocation5 + $0x414] sm:$0xff]
    %v341 = vld [vmem:[#allocation5 + $0x41c] sm:$0xf]
    %v342 = vld [vmem:[#allocation5 + $0x420] sm:$0xff]
    %v343 = vld [vmem:[#allocation5 + $0x428] sm:$0xf]
    %v344 = vld [vmem:[#allocation5 + $0x42c] sm:$0xff]
    %v345 = vld [vmem:[#allocation5 + $0x434] sm:$0xf]
    %v346 = vld [vmem:[#allocation5 + $0x438] sm:$0xff]
    %v347 = vld [vmem:[#allocation5 + $0x440] sm:$0xf]
    %v348 = vld [vmem:[#allocation5 + $0x444] sm:$0xff]
    %v349 = vld [vmem:[#allocation5 + $0x44c] sm:$0xf]
    %v350 = vld [vmem:[#allocation5 + $0x450] sm:$0xff]
    %v351 = vld [vmem:[#allocation5 + $0x458] sm:$0xf]
    %v352 = vld [vmem:[#allocation5 + $0x45c] sm:$0xff]
    %v353 = vld [vmem:[#allocation5 + $0x464] sm:$0xf]
    %v354 = vld [vmem:[#allocation5 + $0x468] sm:$0xff]
    %v355 = vld [vmem:[#allocation5 + $0x470] sm:$0xf]
    %v356 = vld [vmem:[#allocation5 + $0x474] sm:$0xff]
    %v357 = vld [vmem:[#allocation5 + $0x47c] sm:$0xf]
    %v358 = vld [vmem:[#allocation5 + $0x480] sm:$0xff]
    %v359 = vld [vmem:[#allocation5 + $0x488] sm:$0xf]
    %v360 = vld [vmem:[#allocation5 + $0x48c] sm:$0xff]
    %v361 = vld [vmem:[#allocation5 + $0x494] sm:$0xf]
    %v362 = vld [vmem:[#allocation5 + $0x498] sm:$0xff]
    %v363 = vld [vmem:[#allocation5 + $0x4a0] sm:$0xf]
    %v364 = vld [vmem:[#allocation5 + $0x4a4] sm:$0xff]
    %v365 = vld [vmem:[#allocation5 + $0x4ac] sm:$0xf]
    %v366 = vld [vmem:[#allocation5 + $0x4b0] sm:$0xff]
    %v367 = vld [vmem:[#allocation5 + $0x4b8] sm:$0xf]
    %v368 = vld [vmem:[#allocation5 + $0x4bc] sm:$0xff]
    %v369 = vld [vmem:[#allocation5 + $0x4c4] sm:$0xf]
    %v370 = vld [vmem:[#allocation5 + $0x4c8] sm:$0xff]
    %v371 = vld [vmem:[#allocation5 + $0x4d0] sm:$0xf]
    %v372 = vld [vmem:[#allocation5 + $0x4d4] sm:$0xff]
    %v373 = vld [vmem:[#allocation5 + $0x4dc] sm:$0xf]
    %v374 = vld [vmem:[#allocation5 + $0x4e0] sm:$0xff]
    %v375 = vld [vmem:[#allocation5 + $0x4e8] sm:$0xf]
    %v376 = vld [vmem:[#allocation5 + $0x4ec] sm:$0xff]
    %v377 = vld [vmem:[#allocation5 + $0x4f4] sm:$0xf]
    %v378 = vld [vmem:[#allocation5 + $0x4f8] sm:$0xff]
    %v379 = vld [vmem:[#allocation5 + $0x500] sm:$0xf]
    %v380 = vld [vmem:[#allocation5 + $0x504] sm:$0xff]
    %v381 = vld [vmem:[#allocation5 + $0x50c] sm:$0xf]
    %v382 = vld [vmem:[#allocation5 + $0x510] sm:$0xff]
    %v383 = vld [vmem:[#allocation5 + $0x518] sm:$0xf]
    %v384 = vld [vmem:[#allocation5 + $0x51c] sm:$0xff]
    %v385 = vld [vmem:[#allocation5 + $0x524] sm:$0xf]
    %v386 = vld [vmem:[#allocation5 + $0x528] sm:$0xff]
    %v387 = vld [vmem:[#allocation5 + $0x530] sm:$0xf]
    %v388 = vld [vmem:[#allocation5 + $0x534] sm:$0xff]
    %v389 = vld [vmem:[#allocation5 + $0x53c] sm:$0xf]
    %v390 = vld [vmem:[#allocation5 + $0x540] sm:$0xff]
    %v391 = vld [vmem:[#allocation5 + $0x548] sm:$0xf]
    %v392 = vld [vmem:[#allocation5 + $0x54c] sm:$0xff]
    %v393 = vld [vmem:[#allocation5 + $0x554] sm:$0xf]
    %v394 = vld [vmem:[#allocation5 + $0x558] sm:$0xff]
    %v395 = vld [vmem:[#allocation5 + $0x560] sm:$0xf]
    %v396 = vld [vmem:[#allocation5 + $0x564] sm:$0xff]
    %v397 = vld [vmem:[#allocation5 + $0x56c] sm:$0xf]
    %v398 = vld [vmem:[#allocation5 + $0x570] sm:$0xff]
    %v399 = vld [vmem:[#allocation5 + $0x578] sm:$0xf]
    %v400 = vld [vmem:[#allocation5 + $0x57c] sm:$0xff]
    %v401 = vld [vmem:[#allocation5 + $0x584] sm:$0xf]
    %v402 = vld [vmem:[#allocation5 + $0x588] sm:$0xff]
    %v403 = vld [vmem:[#allocation5 + $0x590] sm:$0xf]
    %v404 = vld [vmem:[#allocation5 + $0x594] sm:$0xff]
    %v405 = vld [vmem:[#allocation5 + $0x59c] sm:$0xf]
    %v406 = vld [vmem:[#allocation5 + $0x5a0] sm:$0xff]
    %v407 = vld [vmem:[#allocation5 + $0x5a8] sm:$0xf]
    %v408 = vld [vmem:[#allocation5 + $0x5ac] sm:$0xff]
    %v409 = vld [vmem:[#allocation5 + $0x5b4] sm:$0xf]
    %v410 = vld [vmem:[#allocation5 + $0x5b8] sm:$0xff]
    %v411 = vld [vmem:[#allocation5 + $0x5c0] sm:$0xf]
    %v412 = vld [vmem:[#allocation5 + $0x5c4] sm:$0xff]
    %v413 = vld [vmem:[#allocation5 + $0x5cc] sm:$0xf]
    %v414 = vld [vmem:[#allocation5 + $0x5d0] sm:$0xff]
    %v415 = vld [vmem:[#allocation5 + $0x5d8] sm:$0xf]
    %v416 = vld [vmem:[#allocation5 + $0x5dc] sm:$0xff]
    %v417 = vld [vmem:[#allocation5 + $0x5e4] sm:$0xf]
    %v418 = vld [vmem:[#allocation5 + $0x5e8] sm:$0xff]
    %v419 = vld [vmem:[#allocation5 + $0x5f0] sm:$0xf]
    %v420 = vld [vmem:[#allocation5 + $0x5f4] sm:$0xff]
    %v421 = vld [vmem:[#allocation5 + $0x5fc] sm:$0xf]
    %v422 = vld [vmem:[#allocation5 + $0x600] sm:$0xff]
    %v423 = vld [vmem:[#allocation5 + $0x608] sm:$0xf]
    %v424 = vld [vmem:[#allocation5 + $0x60c] sm:$0xff]
    %v425 = vld [vmem:[#allocation5 + $0x614] sm:$0xf]
    %v426 = vld [vmem:[#allocation5 + $0x618] sm:$0xff]
    %v427 = vld [vmem:[#allocation5 + $0x620] sm:$0xf]
    %v428 = vld [vmem:[#allocation5 + $0x624] sm:$0xff]
    %v429 = vld [vmem:[#allocation5 + $0x62c] sm:$0xf]
    %v430 = vld [vmem:[#allocation5 + $0x630] sm:$0xff]
    %v431 = vld [vmem:[#allocation5 + $0x638] sm:$0xf]
    %v432 = vld [vmem:[#allocation5 + $0x63c] sm:$0xff]
    %v433 = vld [vmem:[#allocation5 + $0x644] sm:$0xf]
    %v434 = vld [vmem:[#allocation5 + $0x648] sm:$0xff]
    %v435 = vld [vmem:[#allocation5 + $0x650] sm:$0xf]
    %v436 = vld [vmem:[#allocation5 + $0x654] sm:$0xff]
    %v437 = vld [vmem:[#allocation5 + $0x65c] sm:$0xf]
    %v438 = vld [vmem:[#allocation5 + $0x660] sm:$0xff]
    %v439 = vld [vmem:[#allocation5 + $0x668] sm:$0xf]
    %v440 = vld [vmem:[#allocation5 + $0x66c] sm:$0xff]
    %v441 = vld [vmem:[#allocation5 + $0x674] sm:$0xf]
    %v442 = vld [vmem:[#allocation5 + $0x678] sm:$0xff]
    %v443 = vld [vmem:[#allocation5 + $0x680] sm:$0xf]
    %v444 = vld [vmem:[#allocation5 + $0x684] sm:$0xff]
    %v445 = vld [vmem:[#allocation5 + $0x68c] sm:$0xf]
    %v446 = vld [vmem:[#allocation5 + $0x690] sm:$0xff]
    %v447 = vld [vmem:[#allocation5 + $0x698] sm:$0xf]
    %v448 = vld [vmem:[#allocation5 + $0x69c] sm:$0xff]
    %v449 = vld [vmem:[#allocation5 + $0x6a4] sm:$0xf]
    %v450 = vld [vmem:[#allocation5 + $0x6a8] sm:$0xff]
    %v451 = vld [vmem:[#allocation5 + $0x6b0] sm:$0xf]
    %v452 = vld [vmem:[#allocation5 + $0x6b4] sm:$0xff]
    %v453 = vld [vmem:[#allocation5 + $0x6bc] sm:$0xf]
    %v454 = vld [vmem:[#allocation5 + $0x6c0] sm:$0xff]
    %v455 = vld [vmem:[#allocation5 + $0x6c8] sm:$0xf]
    %v456 = vld [vmem:[#allocation5 + $0x6cc] sm:$0xff]
    %v457 = vld [vmem:[#allocation5 + $0x6d4] sm:$0xf]
    %v458 = vld [vmem:[#allocation5 + $0x6d8] sm:$0xff]
    %v459 = vld [vmem:[#allocation5 + $0x6e0] sm:$0xf]
    %v460 = vld [vmem:[#allocation5 + $0x6e4] sm:$0xff]
    %v461 = vld [vmem:[#allocation5 + $0x6ec] sm:$0xf]
    %v462 = vld [vmem:[#allocation5 + $0x6f0] sm:$0xff]
    %v463 = vld [vmem:[#allocation5 + $0x6f8] sm:$0xf]
    %v464 = vld [vmem:[#allocation5 + $0x6fc] sm:$0xff]
    %v465 = vld [vmem:[#allocation5 + $0x704] sm:$0xf]
    %v466 = vld [vmem:[#allocation5 + $0x708] sm:$0xff]
    %v467 = vld [vmem:[#allocation5 + $0x710] sm:$0xf]
    %v468 = vld [vmem:[#allocation5 + $0x714] sm:$0xff]
    %v469 = vld [vmem:[#allocation5 + $0x71c] sm:$0xf]
    %v470 = vld [vmem:[#allocation5 + $0x720] sm:$0xff]
    %v471 = vld [vmem:[#allocation5 + $0x728] sm:$0xf]
    %v472 = vld [vmem:[#allocation5 + $0x72c] sm:$0xff]
    %v473 = vld [vmem:[#allocation5 + $0x734] sm:$0xf]
    %v474 = vld [vmem:[#allocation5 + $0x738] sm:$0xff]
    %v475 = vld [vmem:[#allocation5 + $0x740] sm:$0xf]
    %v476 = vld [vmem:[#allocation5 + $0x744] sm:$0xff]
    %v477 = vld [vmem:[#allocation5 + $0x74c] sm:$0xf]
    %v478 = vld [vmem:[#allocation5 + $0x750] sm:$0xff]
    %v479 = vld [vmem:[#allocation5 + $0x758] sm:$0xf]
    %v480 = vld [vmem:[#allocation5 + $0x75c] sm:$0xff]
    %v481 = vld [vmem:[#allocation5 + $0x764] sm:$0xf]
    %v482 = vld [vmem:[#allocation5 + $0x768] sm:$0xff]
    %v483 = vld [vmem:[#allocation5 + $0x770] sm:$0xf]
    %v484 = vld [vmem:[#allocation5 + $0x774] sm:$0xff]
    %v485 = vld [vmem:[#allocation5 + $0x77c] sm:$0xf]
    %v486 = vld [vmem:[#allocation5 + $0x780] sm:$0xff]
    %v487 = vld [vmem:[#allocation5 + $0x788] sm:$0xf]
    %v488 = vld [vmem:[#allocation5 + $0x78c] sm:$0xff]
    %v489 = vld [vmem:[#allocation5 + $0x794] sm:$0xf]
    %v490 = vld [vmem:[#allocation5 + $0x798] sm:$0xff]
    %v491 = vld [vmem:[#allocation5 + $0x7a0] sm:$0xf]
    %v492 = vld [vmem:[#allocation5 + $0x7a4] sm:$0xff]
    %v493 = vld [vmem:[#allocation5 + $0x7ac] sm:$0xf]
    %v494 = vld [vmem:[#allocation5 + $0x7b0] sm:$0xff]
    %v495 = vld [vmem:[#allocation5 + $0x7b8] sm:$0xf]
    %v496 = vld [vmem:[#allocation5 + $0x7bc] sm:$0xff]
    %v497 = vld [vmem:[#allocation5 + $0x7c4] sm:$0xf]
    %v498 = vld [vmem:[#allocation5 + $0x7c8] sm:$0xff]
    %v499 = vld [vmem:[#allocation5 + $0x7d0] sm:$0xf]
    %v500 = vld [vmem:[#allocation5 + $0x7d4] sm:$0xff]
    %v501 = vld [vmem:[#allocation5 + $0x7dc] sm:$0xf]
    %v502 = vld [vmem:[#allocation5 + $0x7e0] sm:$0xff]
    %v503 = vld [vmem:[#allocation5 + $0x7e8] sm:$0xf]
    %v504 = vld [vmem:[#allocation5 + $0x7ec] sm:$0xff]
    %v505 = vld [vmem:[#allocation5 + $0x7f4] sm:$0xf]
    %v506 = vld [vmem:[#allocation5 + $0x7f8] sm:$0xff]
    %v507 = vld [vmem:[#allocation5 + $0x800] sm:$0xf]
    %v508 = vld [vmem:[#allocation5 + $0x804] sm:$0xff]
    %v509 = vld [vmem:[#allocation5 + $0x80c] sm:$0xf]
    %v510 = vld [vmem:[#allocation5 + $0x810] sm:$0xff]
    %v511 = vld [vmem:[#allocation5 + $0x818] sm:$0xf]
    %v512 = vld [vmem:[#allocation5 + $0x81c] sm:$0xff]
    %v513 = vld [vmem:[#allocation5 + $0x824] sm:$0xf]
    %v514 = vld [vmem:[#allocation5 + $0x828] sm:$0xff]
    %v515 = vld [vmem:[#allocation5 + $0x830] sm:$0xf]
    %v516 = vld [vmem:[#allocation5 + $0x834] sm:$0xff]
    %v517 = vld [vmem:[#allocation5 + $0x83c] sm:$0xf]
    %v518 = vld [vmem:[#allocation5 + $0x840] sm:$0xff]
    %v519 = vld [vmem:[#allocation5 + $0x848] sm:$0xf]
    %v520 = vld [vmem:[#allocation5 + $0x84c] sm:$0xff]
    %v521 = vld [vmem:[#allocation5 + $0x854] sm:$0xf]
    %v522 = vld [vmem:[#allocation5 + $0x858] sm:$0xff]
    %v523 = vld [vmem:[#allocation5 + $0x860] sm:$0xf]
    %v524 = vld [vmem:[#allocation5 + $0x864] sm:$0xff]
    %v525 = vld [vmem:[#allocation5 + $0x86c] sm:$0xf]
    %v526 = vld [vmem:[#allocation5 + $0x870] sm:$0xff]
    %v527 = vld [vmem:[#allocation5 + $0x878] sm:$0xf]
    %v528 = vld [vmem:[#allocation5 + $0x87c] sm:$0xff]
    %v529 = vld [vmem:[#allocation5 + $0x884] sm:$0xf]
    %v530 = vld [vmem:[#allocation5 + $0x888] sm:$0xff]
    %v531 = vld [vmem:[#allocation5 + $0x890] sm:$0xf]
    %v532 = vld [vmem:[#allocation5 + $0x894] sm:$0xff]
    %v533 = vld [vmem:[#allocation5 + $0x89c] sm:$0xf]
    %v534 = vld [vmem:[#allocation5 + $0x8a0] sm:$0xff]
    %v535 = vld [vmem:[#allocation5 + $0x8a8] sm:$0xf]
    %v536 = vld [vmem:[#allocation5 + $0x8ac] sm:$0xff]
    %v537 = vld [vmem:[#allocation5 + $0x8b4] sm:$0xf]
    %v538 = vld [vmem:[#allocation5 + $0x8b8] sm:$0xff]
    %v539 = vld [vmem:[#allocation5 + $0x8c0] sm:$0xf]
    %v540 = vld [vmem:[#allocation5 + $0x8c4] sm:$0xff]
    %v541 = vld [vmem:[#allocation5 + $0x8cc] sm:$0xf]
    %v542 = vld [vmem:[#allocation5 + $0x8d0] sm:$0xff]
    %v543 = vld [vmem:[#allocation5 + $0x8d8] sm:$0xf]
    %v544 = vld [vmem:[#allocation5 + $0x8dc] sm:$0xff]
    %v545 = vld [vmem:[#allocation5 + $0x8e4] sm:$0xf]
    %v546 = vld [vmem:[#allocation5 + $0x8e8] sm:$0xff]
    %v547 = vld [vmem:[#allocation5 + $0x8f0] sm:$0xf]
    %v548 = vld [vmem:[#allocation5 + $0x8f4] sm:$0xff]
    %v549 = vld [vmem:[#allocation5 + $0x8fc] sm:$0xf]
    %v550 = vld [vmem:[#allocation5 + $0x900] sm:$0xff]
    %v551 = vld [vmem:[#allocation5 + $0x908] sm:$0xf]
    %v552 = vld [vmem:[#allocation5 + $0x90c] sm:$0xff]
    %v553 = vld [vmem:[#allocation5 + $0x914] sm:$0xf]
    %v554 = vld [vmem:[#allocation5 + $0x918] sm:$0xff]
    %v555 = vld [vmem:[#allocation5 + $0x920] sm:$0xf]
    %v556 = vld [vmem:[#allocation5 + $0x924] sm:$0xff]
    %v557 = vld [vmem:[#allocation5 + $0x92c] sm:$0xf]
    %v558 = vld [vmem:[#allocation5 + $0x930] sm:$0xff]
    %v559 = vld [vmem:[#allocation5 + $0x938] sm:$0xf]
    %v560 = vld [vmem:[#allocation5 + $0x93c] sm:$0xff]
    %v561 = vld [vmem:[#allocation5 + $0x944] sm:$0xf]
    %v562 = vld [vmem:[#allocation5 + $0x948] sm:$0xff]
    %v563 = vld [vmem:[#allocation5 + $0x950] sm:$0xf]
    %v564 = vld [vmem:[#allocation5 + $0x954] sm:$0xff]
    %v565 = vld [vmem:[#allocation5 + $0x95c] sm:$0xf]
    %v566 = vld [vmem:[#allocation5 + $0x960] sm:$0xff]
    %v567 = vld [vmem:[#allocation5 + $0x968] sm:$0xf]
    %v568 = vld [vmem:[#allocation5 + $0x96c] sm:$0xff]
    %v569 = vld [vmem:[#allocation5 + $0x974] sm:$0xf]
    %v570 = vld [vmem:[#allocation5 + $0x978] sm:$0xff]
    %v571 = vld [vmem:[#allocation5 + $0x980] sm:$0xf]
    %v572 = vld [vmem:[#allocation5 + $0x984] sm:$0xff]
    %v573 = vld [vmem:[#allocation5 + $0x98c] sm:$0xf]
    %v574 = vld [vmem:[#allocation5 + $0x990] sm:$0xff]
    %v575 = vld [vmem:[#allocation5 + $0x998] sm:$0xf]
    %v576 = vld [vmem:[#allocation5 + $0x99c] sm:$0xff]
    %v577 = vld [vmem:[#allocation5 + $0x9a4] sm:$0xf]
    %v578 = vld [vmem:[#allocation5 + $0x9a8] sm:$0xff]
    %v579 = vld [vmem:[#allocation5 + $0x9b0] sm:$0xf]
    %v580 = vld [vmem:[#allocation5 + $0x9b4] sm:$0xff]
    %v581 = vld [vmem:[#allocation5 + $0x9bc] sm:$0xf]
    %v582 = vld [vmem:[#allocation5 + $0x9c0] sm:$0xff]
    %v583 = vld [vmem:[#allocation5 + $0x9c8] sm:$0xf]
    %v584 = vld [vmem:[#allocation5 + $0x9cc] sm:$0xff]
    %v585 = vld [vmem:[#allocation5 + $0x9d4] sm:$0xf]
    %v586 = vld [vmem:[#allocation5 + $0x9d8] sm:$0xff]
    %v587 = vld [vmem:[#allocation5 + $0x9e0] sm:$0xf]
    %v588 = vld [vmem:[#allocation5 + $0x9e4] sm:$0xff]
    %v589 = vld [vmem:[#allocation5 + $0x9ec] sm:$0xf]
    %v590 = vld [vmem:[#allocation5 + $0x9f0] sm:$0xff]
    %v591 = vld [vmem:[#allocation5 + $0x9f8] sm:$0xf]
    %v592 = vld [vmem:[#allocation5 + $0x9fc] sm:$0xff]
    %v593 = vld [vmem:[#allocation5 + $0xa04] sm:$0xf]
    %v594 = vld [vmem:[#allocation5 + $0xa08] sm:$0xff]
    %v595 = vld [vmem:[#allocation5 + $0xa10] sm:$0xf]
    %v596 = vld [vmem:[#allocation5 + $0xa14] sm:$0xff]
    %v597 = vld [vmem:[#allocation5 + $0xa1c] sm:$0xf]
    %v598 = vld [vmem:[#allocation5 + $0xa20] sm:$0xff]
    %v599 = vld [vmem:[#allocation5 + $0xa28] sm:$0xf]
    %v600 = vld [vmem:[#allocation5 + $0xa2c] sm:$0xff]
    %v601 = vld [vmem:[#allocation5 + $0xa34] sm:$0xf]
    %v602 = vld [vmem:[#allocation5 + $0xa38] sm:$0xff]
    %v603 = vld [vmem:[#allocation5 + $0xa40] sm:$0xf]
    %v604 = vld [vmem:[#allocation5 + $0xa44] sm:$0xff]
    %v605 = vld [vmem:[#allocation5 + $0xa4c] sm:$0xf]
    %v606 = vld [vmem:[#allocation5 + $0xa50] sm:$0xff]
    %v607 = vld [vmem:[#allocation5 + $0xa58] sm:$0xf]
    %v608 = vld [vmem:[#allocation5 + $0xa5c] sm:$0xff]
    %v609 = vld [vmem:[#allocation5 + $0xa64] sm:$0xf]
    %v610 = vld [vmem:[#allocation5 + $0xa68] sm:$0xff]
    %v611 = vld [vmem:[#allocation5 + $0xa70] sm:$0xf]
    %v612 = vld [vmem:[#allocation5 + $0xa74] sm:$0xff]
    %v613 = vld [vmem:[#allocation5 + $0xa7c] sm:$0xf]
    %v614 = vld [vmem:[#allocation5 + $0xa80] sm:$0xff]
    %v615 = vld [vmem:[#allocation5 + $0xa88] sm:$0xf]
    %v616 = vld [vmem:[#allocation5 + $0xa8c] sm:$0xff]
    %v617 = vld [vmem:[#allocation5 + $0xa94] sm:$0xf]
    %v618 = vld [vmem:[#allocation5 + $0xa98] sm:$0xff]
    %v619 = vld [vmem:[#allocation5 + $0xaa0] sm:$0xf]
    %v620 = vld [vmem:[#allocation5 + $0xaa4] sm:$0xff]
    %v621 = vld [vmem:[#allocation5 + $0xaac] sm:$0xf]
    %v622 = vld [vmem:[#allocation5 + $0xab0] sm:$0xff]
    %v623 = vld [vmem:[#allocation5 + $0xab8] sm:$0xf]
    %v624 = vld [vmem:[#allocation5 + $0xabc] sm:$0xff]
    %v625 = vld [vmem:[#allocation5 + $0xac4] sm:$0xf]
    %v626 = vld [vmem:[#allocation5 + $0xac8] sm:$0xff]
    %v627 = vld [vmem:[#allocation5 + $0xad0] sm:$0xf]
    %v628 = vld [vmem:[#allocation5 + $0xad4] sm:$0xff]
    %v629 = vld [vmem:[#allocation5 + $0xadc] sm:$0xf]
    %v630 = vld [vmem:[#allocation5 + $0xae0] sm:$0xff]
    %v631 = vld [vmem:[#allocation5 + $0xae8] sm:$0xf]
    %v632 = vld [vmem:[#allocation5 + $0xaec] sm:$0xff]
    %v633 = vld [vmem:[#allocation5 + $0xaf4] sm:$0xf]
    %v634 = vld [vmem:[#allocation5 + $0xaf8] sm:$0xff]
    %v635 = vld [vmem:[#allocation5 + $0xb00] sm:$0xf]
    %v636 = vld [vmem:[#allocation5 + $0xb04] sm:$0xff]
    %v637 = vld [vmem:[#allocation5 + $0xb0c] sm:$0xf]
    %v638 = vld [vmem:[#allocation5 + $0xb10] sm:$0xff]
    %v639 = vld [vmem:[#allocation5 + $0xb18] sm:$0xf]
    %v640 = vld [vmem:[#allocation5 + $0xb1c] sm:$0xff]
    %v641 = vld [vmem:[#allocation5 + $0xb24] sm:$0xf]
    %v642 = vld [vmem:[#allocation5 + $0xb28] sm:$0xff]
    %v643 = vld [vmem:[#allocation5 + $0xb30] sm:$0xf]
    %v644 = vld [vmem:[#allocation5 + $0xb34] sm:$0xff]
    %v645 = vld [vmem:[#allocation5 + $0xb3c] sm:$0xf]
    %v646 = vld [vmem:[#allocation5 + $0xb40] sm:$0xff]
    %v647 = vld [vmem:[#allocation5 + $0xb48] sm:$0xf]
    %v648 = vld [vmem:[#allocation5 + $0xb4c] sm:$0xff]
    %v649 = vld [vmem:[#allocation5 + $0xb54] sm:$0xf]
    %v650 = vld [vmem:[#allocation5 + $0xb58] sm:$0xff]
    %v651 = vld [vmem:[#allocation5 + $0xb60] sm:$0xf]
    %v652 = vld [vmem:[#allocation5 + $0xb64] sm:$0xff]
    %v653 = vld [vmem:[#allocation5 + $0xb6c] sm:$0xf]
    %v654 = vld [vmem:[#allocation5 + $0xb70] sm:$0xff]
    %v655 = vld [vmem:[#allocation5 + $0xb78] sm:$0xf]
    %v656 = vld [vmem:[#allocation5 + $0xb7c] sm:$0xff]
    %v657 = vld [vmem:[#allocation5 + $0xb84] sm:$0xf]
    %v658 = vld [vmem:[#allocation5 + $0xb88] sm:$0xff]
    %v659 = vld [vmem:[#allocation5 + $0xb90] sm:$0xf]
    %v660 = vld [vmem:[#allocation5 + $0xb94] sm:$0xff]
    %v661 = vld [vmem:[#allocation5 + $0xb9c] sm:$0xf]
    %v662 = vld [vmem:[#allocation5 + $0xba0] sm:$0xff]
    %v663 = vld [vmem:[#allocation5 + $0xba8] sm:$0xf]
    %v664 = vld [vmem:[#allocation5 + $0xbac] sm:$0xff]
    %v665 = vld [vmem:[#allocation5 + $0xbb4] sm:$0xf]
    %v666 = vld [vmem:[#allocation5 + $0xbb8] sm:$0xff]
    %v667 = vld [vmem:[#allocation5 + $0xbc0] sm:$0xf]
    %v668 = vld [vmem:[#allocation5 + $0xbc4] sm:$0xff]
    %v669 = vld [vmem:[#allocation5 + $0xbcc] sm:$0xf]
    %v670 = vld [vmem:[#allocation5 + $0xbd0] sm:$0xff]
    %v671 = vld [vmem:[#allocation5 + $0xbd8] sm:$0xf]
    %v672 = vld [vmem:[#allocation5 + $0xbdc] sm:$0xff]
    %v673 = vld [vmem:[#allocation5 + $0xbe4] sm:$0xf]
    %v674 = vld [vmem:[#allocation5 + $0xbe8] sm:$0xff]
    %v675 = vld [vmem:[#allocation5 + $0xbf0] sm:$0xf]
    %v676 = vld [vmem:[#allocation5 + $0xbf4] sm:$0xff]
    %v677 = vld [vmem:[#allocation5 + $0xbfc] sm:$0xf]
    %v678 = vld [vmem:[#allocation7] sm:$0x7]
    %v680 = vperm.slane %v678, 0
    %v681 = vperm.slane %v678, 1
    %v682 = vperm.slane %v678, 2
    %v702 = vunpack.c.l.b16 %v150
    %v703 = vunpack.c.h.b16 %v150
    %v704 = vunpack.c.l.b16 %v151
    %v705 = vunpack.c.h.b16 %v151
    %v706 = vunpack.c.l.b16 %v152
    %v707 = vunpack.c.h.b16 %v152
    %v708 = vunpack.c.l.b16 %v153
    %v709 = vunpack.c.h.b16 %v153
    %v710 = vunpack.c.l.b16 %v154
    %v711 = vunpack.c.h.b16 %v154
    %v712 = vunpack.c.l.b16 %v155
    %v713 = vunpack.c.h.b16 %v155
    %v714 = vunpack.c.l.b16 %v156
    %v715 = vunpack.c.h.b16 %v156
    %v716 = vunpack.c.l.b16 %v157
    %v717 = vunpack.c.h.b16 %v157
    %v718 = vunpack.c.l.b16 %v158
    %v719 = vunpack.c.h.b16 %v158
    %v720 = vunpack.c.l.b16 %v159
    %v721 = vunpack.c.h.b16 %v159
    %v722 = vunpack.c.l.b16 %v160
    %v723 = vunpack.c.h.b16 %v160
    %v724 = vunpack.c.l.b16 %v161
    %v725 = vunpack.c.h.b16 %v161
    %v726 = vunpack.c.l.b16 %v162
    %v727 = vunpack.c.h.b16 %v162
    %v728 = vunpack.c.l.b16 %v163
    %v729 = vunpack.c.h.b16 %v163
    %v730 = vunpack.c.l.b16 %v164
    %v731 = vunpack.c.h.b16 %v164
    %v732 = vunpack.c.l.b16 %v165
    %v733 = vunpack.c.h.b16 %v165
    %v734 = vpack.c.b16 %v718, %v702
    %v735 = vpack.c.b16 %v719, %v703
    %v736 = vpack.c.b16 %v720, %v704
    %v737 = vpack.c.b16 %v721, %v705
    %v738 = vpack.c.b16 %v722, %v706
    %v739 = vpack.c.b16 %v723, %v707
    %v740 = vpack.c.b16 %v724, %v708
    %v741 = vpack.c.b16 %v725, %v709
    %v742 = vpack.c.b16 %v726, %v710
    %v743 = vpack.c.b16 %v727, %v711
    %v744 = vpack.c.b16 %v728, %v712
    %v745 = vpack.c.b16 %v729, %v713
    %v746 = vpack.c.b16 %v730, %v714
    %v747 = vpack.c.b16 %v731, %v715
    %v748 = vpack.c.b16 %v732, %v716
    %v749 = vpack.c.b16 %v733, %v717
    %v1278 = vunpack.c.l.b16 %v166
    %v1279 = vunpack.c.h.b16 %v166
    %v1280 = vunpack.c.l.b16 %v167
    %v1281 = vunpack.c.l.b16 %v168
    %v1282 = vunpack.c.h.b16 %v168
    %v1283 = vunpack.c.l.b16 %v169
    %v1284 = vunpack.c.l.b16 %v170
    %v1285 = vunpack.c.h.b16 %v170
    %v1286 = vunpack.c.l.b16 %v171
    %v1287 = vunpack.c.l.b16 %v172
    %v1288 = vunpack.c.h.b16 %v172
    %v1289 = vunpack.c.l.b16 %v173
    %v1290 = vunpack.c.l.b16 %v174
    %v1291 = vunpack.c.h.b16 %v174
    %v1292 = vunpack.c.l.b16 %v175
    %v1293 = vunpack.c.l.b16 %v176
    %v1294 = vunpack.c.h.b16 %v176
    %v1295 = vunpack.c.l.b16 %v177
    %v1296 = vunpack.c.l.b16 %v178
    %v1297 = vunpack.c.h.b16 %v178
    %v1298 = vunpack.c.l.b16 %v179
    %v1299 = vunpack.c.l.b16 %v180
    %v1300 = vunpack.c.h.b16 %v180
    %v1301 = vunpack.c.l.b16 %v181
    %v1302 = vunpack.c.l.b16 %v182
    %v1303 = vunpack.c.h.b16 %v182
    %v1304 = vunpack.c.l.b16 %v183
    %v1305 = vunpack.c.l.b16 %v184
    %v1306 = vunpack.c.h.b16 %v184
    %v1307 = vunpack.c.l.b16 %v185
    %v1308 = vunpack.c.l.b16 %v186
    %v1309 = vunpack.c.h.b16 %v186
    %v1310 = vunpack.c.l.b16 %v187
    %v1311 = vunpack.c.l.b16 %v188
    %v1312 = vunpack.c.h.b16 %v188
    %v1313 = vunpack.c.l.b16 %v189
    %v1314 = vunpack.c.l.b16 %v190
    %v1315 = vunpack.c.h.b16 %v190
    %v1316 = vunpack.c.l.b16 %v191
    %v1317 = vunpack.c.l.b16 %v192
    %v1318 = vunpack.c.h.b16 %v192
    %v1319 = vunpack.c.l.b16 %v193
    %v1320 = vunpack.c.l.b16 %v194
    %v1321 = vunpack.c.h.b16 %v194
    %v1322 = vunpack.c.l.b16 %v195
    %v1323 = vunpack.c.l.b16 %v196
    %v1324 = vunpack.c.h.b16 %v196
    %v1325 = vunpack.c.l.b16 %v197
    %v1326 = vunpack.c.l.b16 %v198
    %v1327 = vunpack.c.h.b16 %v198
    %v1328 = vunpack.c.l.b16 %v199
    %v1329 = vunpack.c.l.b16 %v200
    %v1330 = vunpack.c.h.b16 %v200
    %v1331 = vunpack.c.l.b16 %v201
    %v1332 = vunpack.c.l.b16 %v202
    %v1333 = vunpack.c.h.b16 %v202
    %v1334 = vunpack.c.l.b16 %v203
    %v1335 = vunpack.c.l.b16 %v204
    %v1336 = vunpack.c.h.b16 %v204
    %v1337 = vunpack.c.l.b16 %v205
    %v1338 = vunpack.c.l.b16 %v206
    %v1339 = vunpack.c.h.b16 %v206
    %v1340 = vunpack.c.l.b16 %v207
    %v1341 = vunpack.c.l.b16 %v208
    %v1342 = vunpack.c.h.b16 %v208
    %v1343 = vunpack.c.l.b16 %v209
    %v1344 = vunpack.c.l.b16 %v210
    %v1345 = vunpack.c.h.b16 %v210
    %v1346 = vunpack.c.l.b16 %v211
    %v1347 = vunpack.c.l.b16 %v212
    %v1348 = vunpack.c.h.b16 %v212
    %v1349 = vunpack.c.l.b16 %v213
    %v1350 = vunpack.c.l.b16 %v214
    %v1351 = vunpack.c.h.b16 %v214
    %v1352 = vunpack.c.l.b16 %v215
    %v1353 = vunpack.c.l.b16 %v216
    %v1354 = vunpack.c.h.b16 %v216
    %v1355 = vunpack.c.l.b16 %v217
    %v1356 = vunpack.c.l.b16 %v218
    %v1357 = vunpack.c.h.b16 %v218
    %v1358 = vunpack.c.l.b16 %v219
    %v1359 = vunpack.c.l.b16 %v220
    %v1360 = vunpack.c.h.b16 %v220
    %v1361 = vunpack.c.l.b16 %v221
    %v1362 = vunpack.c.l.b16 %v222
    %v1363 = vunpack.c.h.b16 %v222
    %v1364 = vunpack.c.l.b16 %v223
    %v1365 = vunpack.c.l.b16 %v224
    %v1366 = vunpack.c.h.b16 %v224
    %v1367 = vunpack.c.l.b16 %v225
    %v1368 = vunpack.c.l.b16 %v226
    %v1369 = vunpack.c.h.b16 %v226
    %v1370 = vunpack.c.l.b16 %v227
    %v1371 = vunpack.c.l.b16 %v228
    %v1372 = vunpack.c.h.b16 %v228
    %v1373 = vunpack.c.l.b16 %v229
    %v1374 = vunpack.c.l.b16 %v230
    %v1375 = vunpack.c.h.b16 %v230
    %v1376 = vunpack.c.l.b16 %v231
    %v1377 = vunpack.c.l.b16 %v232
    %v1378 = vunpack.c.h.b16 %v232
    %v1379 = vunpack.c.l.b16 %v233
    %v1380 = vunpack.c.l.b16 %v234
    %v1381 = vunpack.c.h.b16 %v234
    %v1382 = vunpack.c.l.b16 %v235
    %v1383 = vunpack.c.l.b16 %v236
    %v1384 = vunpack.c.h.b16 %v236
    %v1385 = vunpack.c.l.b16 %v237
    %v1386 = vunpack.c.l.b16 %v238
    %v1387 = vunpack.c.h.b16 %v238
    %v1388 = vunpack.c.l.b16 %v239
    %v1389 = vunpack.c.l.b16 %v240
    %v1390 = vunpack.c.h.b16 %v240
    %v1391 = vunpack.c.l.b16 %v241
    %v1392 = vunpack.c.l.b16 %v242
    %v1393 = vunpack.c.h.b16 %v242
    %v1394 = vunpack.c.l.b16 %v243
    %v1395 = vunpack.c.l.b16 %v244
    %v1396 = vunpack.c.h.b16 %v244
    %v1397 = vunpack.c.l.b16 %v245
    %v1398 = vunpack.c.l.b16 %v246
    %v1399 = vunpack.c.h.b16 %v246
    %v1400 = vunpack.c.l.b16 %v247
    %v1401 = vunpack.c.l.b16 %v248
    %v1402 = vunpack.c.h.b16 %v248
    %v1403 = vunpack.c.l.b16 %v249
    %v1404 = vunpack.c.l.b16 %v250
    %v1405 = vunpack.c.h.b16 %v250
    %v1406 = vunpack.c.l.b16 %v251
    %v1407 = vunpack.c.l.b16 %v252
    %v1408 = vunpack.c.h.b16 %v252
    %v1409 = vunpack.c.l.b16 %v253
    %v1410 = vunpack.c.l.b16 %v254
    %v1411 = vunpack.c.h.b16 %v254
    %v1412 = vunpack.c.l.b16 %v255
    %v1413 = vunpack.c.l.b16 %v256
    %v1414 = vunpack.c.h.b16 %v256
    %v1415 = vunpack.c.l.b16 %v257
    %v1416 = vunpack.c.l.b16 %v258
    %v1417 = vunpack.c.h.b16 %v258
    %v1418 = vunpack.c.l.b16 %v259
    %v1419 = vunpack.c.l.b16 %v260
    %v1420 = vunpack.c.h.b16 %v260
    %v1421 = vunpack.c.l.b16 %v261
    %v1422 = vunpack.c.l.b16 %v262
    %v1423 = vunpack.c.h.b16 %v262
    %v1424 = vunpack.c.l.b16 %v263
    %v1425 = vunpack.c.l.b16 %v264
    %v1426 = vunpack.c.h.b16 %v264
    %v1427 = vunpack.c.l.b16 %v265
    %v1428 = vunpack.c.l.b16 %v266
    %v1429 = vunpack.c.h.b16 %v266
    %v1430 = vunpack.c.l.b16 %v267
    %v1431 = vunpack.c.l.b16 %v268
    %v1432 = vunpack.c.h.b16 %v268
    %v1433 = vunpack.c.l.b16 %v269
    %v1434 = vunpack.c.l.b16 %v270
    %v1435 = vunpack.c.h.b16 %v270
    %v1436 = vunpack.c.l.b16 %v271
    %v1437 = vunpack.c.l.b16 %v272
    %v1438 = vunpack.c.h.b16 %v272
    %v1439 = vunpack.c.l.b16 %v273
    %v1440 = vunpack.c.l.b16 %v274
    %v1441 = vunpack.c.h.b16 %v274
    %v1442 = vunpack.c.l.b16 %v275
    %v1443 = vunpack.c.l.b16 %v276
    %v1444 = vunpack.c.h.b16 %v276
    %v1445 = vunpack.c.l.b16 %v277
    %v1446 = vunpack.c.l.b16 %v278
    %v1447 = vunpack.c.h.b16 %v278
    %v1448 = vunpack.c.l.b16 %v279
    %v1449 = vunpack.c.l.b16 %v280
    %v1450 = vunpack.c.h.b16 %v280
    %v1451 = vunpack.c.l.b16 %v281
    %v1452 = vunpack.c.l.b16 %v282
    %v1453 = vunpack.c.h.b16 %v282
    %v1454 = vunpack.c.l.b16 %v283
    %v1455 = vunpack.c.l.b16 %v284
    %v1456 = vunpack.c.h.b16 %v284
    %v1457 = vunpack.c.l.b16 %v285
    %v1458 = vunpack.c.l.b16 %v286
    %v1459 = vunpack.c.h.b16 %v286
    %v1460 = vunpack.c.l.b16 %v287
    %v1461 = vunpack.c.l.b16 %v288
    %v1462 = vunpack.c.h.b16 %v288
    %v1463 = vunpack.c.l.b16 %v289
    %v1464 = vunpack.c.l.b16 %v290
    %v1465 = vunpack.c.h.b16 %v290
    %v1466 = vunpack.c.l.b16 %v291
    %v1467 = vunpack.c.l.b16 %v292
    %v1468 = vunpack.c.h.b16 %v292
    %v1469 = vunpack.c.l.b16 %v293
    %v1470 = vunpack.c.l.b16 %v294
    %v1471 = vunpack.c.h.b16 %v294
    %v1472 = vunpack.c.l.b16 %v295
    %v1473 = vunpack.c.l.b16 %v296
    %v1474 = vunpack.c.h.b16 %v296
    %v1475 = vunpack.c.l.b16 %v297
    %v1476 = vunpack.c.l.b16 %v298
    %v1477 = vunpack.c.h.b16 %v298
    %v1478 = vunpack.c.l.b16 %v299
    %v1479 = vunpack.c.l.b16 %v300
    %v1480 = vunpack.c.h.b16 %v300
    %v1481 = vunpack.c.l.b16 %v301
    %v1482 = vunpack.c.l.b16 %v302
    %v1483 = vunpack.c.h.b16 %v302
    %v1484 = vunpack.c.l.b16 %v303
    %v1485 = vunpack.c.l.b16 %v304
    %v1486 = vunpack.c.h.b16 %v304
    %v1487 = vunpack.c.l.b16 %v305
    %v1488 = vunpack.c.l.b16 %v306
    %v1489 = vunpack.c.h.b16 %v306
    %v1490 = vunpack.c.l.b16 %v307
    %v1491 = vunpack.c.l.b16 %v308
    %v1492 = vunpack.c.h.b16 %v308
    %v1493 = vunpack.c.l.b16 %v309
    %v1494 = vunpack.c.l.b16 %v310
    %v1495 = vunpack.c.h.b16 %v310
    %v1496 = vunpack.c.l.b16 %v311
    %v1497 = vunpack.c.l.b16 %v312
    %v1498 = vunpack.c.h.b16 %v312
    %v1499 = vunpack.c.l.b16 %v313
    %v1500 = vunpack.c.l.b16 %v314
    %v1501 = vunpack.c.h.b16 %v314
    %v1502 = vunpack.c.l.b16 %v315
    %v1503 = vunpack.c.l.b16 %v316
    %v1504 = vunpack.c.h.b16 %v316
    %v1505 = vunpack.c.l.b16 %v317
    %v1506 = vunpack.c.l.b16 %v318
    %v1507 = vunpack.c.h.b16 %v318
    %v1508 = vunpack.c.l.b16 %v319
    %v1509 = vunpack.c.l.b16 %v320
    %v1510 = vunpack.c.h.b16 %v320
    %v1511 = vunpack.c.l.b16 %v321
    %v1512 = vunpack.c.l.b16 %v322
    %v1513 = vunpack.c.h.b16 %v322
    %v1514 = vunpack.c.l.b16 %v323
    %v1515 = vunpack.c.l.b16 %v324
    %v1516 = vunpack.c.h.b16 %v324
    %v1517 = vunpack.c.l.b16 %v325
    %v1518 = vunpack.c.l.b16 %v326
    %v1519 = vunpack.c.h.b16 %v326
    %v1520 = vunpack.c.l.b16 %v327
    %v1521 = vunpack.c.l.b16 %v328
    %v1522 = vunpack.c.h.b16 %v328
    %v1523 = vunpack.c.l.b16 %v329
    %v1524 = vunpack.c.l.b16 %v330
    %v1525 = vunpack.c.h.b16 %v330
    %v1526 = vunpack.c.l.b16 %v331
    %v1527 = vunpack.c.l.b16 %v332
    %v1528 = vunpack.c.h.b16 %v332
    %v1529 = vunpack.c.l.b16 %v333
    %v1530 = vunpack.c.l.b16 %v334
    %v1531 = vunpack.c.h.b16 %v334
    %v1532 = vunpack.c.l.b16 %v335
    %v1533 = vunpack.c.l.b16 %v336
    %v1534 = vunpack.c.h.b16 %v336
    %v1535 = vunpack.c.l.b16 %v337
    %v1536 = vunpack.c.l.b16 %v338
    %v1537 = vunpack.c.h.b16 %v338
    %v1538 = vunpack.c.l.b16 %v339
    %v1539 = vunpack.c.l.b16 %v340
    %v1540 = vunpack.c.h.b16 %v340
    %v1541 = vunpack.c.l.b16 %v341
    %v1542 = vunpack.c.l.b16 %v342
    %v1543 = vunpack.c.h.b16 %v342
    %v1544 = vunpack.c.l.b16 %v343
    %v1545 = vunpack.c.l.b16 %v344
    %v1546 = vunpack.c.h.b16 %v344
    %v1547 = vunpack.c.l.b16 %v345
    %v1548 = vunpack.c.l.b16 %v346
    %v1549 = vunpack.c.h.b16 %v346
    %v1550 = vunpack.c.l.b16 %v347
    %v1551 = vunpack.c.l.b16 %v348
    %v1552 = vunpack.c.h.b16 %v348
    %v1553 = vunpack.c.l.b16 %v349
    %v1554 = vunpack.c.l.b16 %v350
    %v1555 = vunpack.c.h.b16 %v350
    %v1556 = vunpack.c.l.b16 %v351
    %v1557 = vunpack.c.l.b16 %v352
    %v1558 = vunpack.c.h.b16 %v352
    %v1559 = vunpack.c.l.b16 %v353
    %v1560 = vunpack.c.l.b16 %v354
    %v1561 = vunpack.c.h.b16 %v354
    %v1562 = vunpack.c.l.b16 %v355
    %v1563 = vunpack.c.l.b16 %v356
    %v1564 = vunpack.c.h.b16 %v356
    %v1565 = vunpack.c.l.b16 %v357
    %v1566 = vunpack.c.l.b16 %v358
    %v1567 = vunpack.c.h.b16 %v358
    %v1568 = vunpack.c.l.b16 %v359
    %v1569 = vunpack.c.l.b16 %v360
    %v1570 = vunpack.c.h.b16 %v360
    %v1571 = vunpack.c.l.b16 %v361
    %v1572 = vunpack.c.l.b16 %v362
    %v1573 = vunpack.c.h.b16 %v362
    %v1574 = vunpack.c.l.b16 %v363
    %v1575 = vunpack.c.l.b16 %v364
    %v1576 = vunpack.c.h.b16 %v364
    %v1577 = vunpack.c.l.b16 %v365
    %v1578 = vunpack.c.l.b16 %v366
    %v1579 = vunpack.c.h.b16 %v366
    %v1580 = vunpack.c.l.b16 %v367
    %v1581 = vunpack.c.l.b16 %v368
    %v1582 = vunpack.c.h.b16 %v368
    %v1583 = vunpack.c.l.b16 %v369
    %v1584 = vunpack.c.l.b16 %v370
    %v1585 = vunpack.c.h.b16 %v370
    %v1586 = vunpack.c.l.b16 %v371
    %v1587 = vunpack.c.l.b16 %v372
    %v1588 = vunpack.c.h.b16 %v372
    %v1589 = vunpack.c.l.b16 %v373
    %v1590 = vunpack.c.l.b16 %v374
    %v1591 = vunpack.c.h.b16 %v374
    %v1592 = vunpack.c.l.b16 %v375
    %v1593 = vunpack.c.l.b16 %v376
    %v1594 = vunpack.c.h.b16 %v376
    %v1595 = vunpack.c.l.b16 %v377
    %v1596 = vunpack.c.l.b16 %v378
    %v1597 = vunpack.c.h.b16 %v378
    %v1598 = vunpack.c.l.b16 %v379
    %v1599 = vunpack.c.l.b16 %v380
    %v1600 = vunpack.c.h.b16 %v380
    %v1601 = vunpack.c.l.b16 %v381
    %v1602 = vunpack.c.l.b16 %v382
    %v1603 = vunpack.c.h.b16 %v382
    %v1604 = vunpack.c.l.b16 %v383
    %v1605 = vunpack.c.l.b16 %v384
    %v1606 = vunpack.c.h.b16 %v384
    %v1607 = vunpack.c.l.b16 %v385
    %v1608 = vunpack.c.l.b16 %v386
    %v1609 = vunpack.c.h.b16 %v386
    %v1610 = vunpack.c.l.b16 %v387
    %v1611 = vunpack.c.l.b16 %v388
    %v1612 = vunpack.c.h.b16 %v388
    %v1613 = vunpack.c.l.b16 %v389
    %v1614 = vunpack.c.l.b16 %v390
    %v1615 = vunpack.c.h.b16 %v390
    %v1616 = vunpack.c.l.b16 %v391
    %v1617 = vunpack.c.l.b16 %v392
    %v1618 = vunpack.c.h.b16 %v392
    %v1619 = vunpack.c.l.b16 %v393
    %v1620 = vunpack.c.l.b16 %v394
    %v1621 = vunpack.c.h.b16 %v394
    %v1622 = vunpack.c.l.b16 %v395
    %v1623 = vunpack.c.l.b16 %v396
    %v1624 = vunpack.c.h.b16 %v396
    %v1625 = vunpack.c.l.b16 %v397
    %v1626 = vunpack.c.l.b16 %v398
    %v1627 = vunpack.c.h.b16 %v398
    %v1628 = vunpack.c.l.b16 %v399
    %v1629 = vunpack.c.l.b16 %v400
    %v1630 = vunpack.c.h.b16 %v400
    %v1631 = vunpack.c.l.b16 %v401
    %v1632 = vunpack.c.l.b16 %v402
    %v1633 = vunpack.c.h.b16 %v402
    %v1634 = vunpack.c.l.b16 %v403
    %v1635 = vunpack.c.l.b16 %v404
    %v1636 = vunpack.c.h.b16 %v404
    %v1637 = vunpack.c.l.b16 %v405
    %v1638 = vunpack.c.l.b16 %v406
    %v1639 = vunpack.c.h.b16 %v406
    %v1640 = vunpack.c.l.b16 %v407
    %v1641 = vunpack.c.l.b16 %v408
    %v1642 = vunpack.c.h.b16 %v408
    %v1643 = vunpack.c.l.b16 %v409
    %v1644 = vunpack.c.l.b16 %v410
    %v1645 = vunpack.c.h.b16 %v410
    %v1646 = vunpack.c.l.b16 %v411
    %v1647 = vunpack.c.l.b16 %v412
    %v1648 = vunpack.c.h.b16 %v412
    %v1649 = vunpack.c.l.b16 %v413
    %v1650 = vunpack.c.l.b16 %v414
    %v1651 = vunpack.c.h.b16 %v414
    %v1652 = vunpack.c.l.b16 %v415
    %v1653 = vunpack.c.l.b16 %v416
    %v1654 = vunpack.c.h.b16 %v416
    %v1655 = vunpack.c.l.b16 %v417
    %v1656 = vunpack.c.l.b16 %v418
    %v1657 = vunpack.c.h.b16 %v418
    %v1658 = vunpack.c.l.b16 %v419
    %v1659 = vunpack.c.l.b16 %v420
    %v1660 = vunpack.c.h.b16 %v420
    %v1661 = vunpack.c.l.b16 %v421
    %v1662 = vunpack.c.l.b16 %v422
    %v1663 = vunpack.c.h.b16 %v422
    %v1664 = vunpack.c.l.b16 %v423
    %v1665 = vunpack.c.l.b16 %v424
    %v1666 = vunpack.c.h.b16 %v424
    %v1667 = vunpack.c.l.b16 %v425
    %v1668 = vunpack.c.l.b16 %v426
    %v1669 = vunpack.c.h.b16 %v426
    %v1670 = vunpack.c.l.b16 %v427
    %v1671 = vunpack.c.l.b16 %v428
    %v1672 = vunpack.c.h.b16 %v428
    %v1673 = vunpack.c.l.b16 %v429
    %v1674 = vunpack.c.l.b16 %v430
    %v1675 = vunpack.c.h.b16 %v430
    %v1676 = vunpack.c.l.b16 %v431
    %v1677 = vunpack.c.l.b16 %v432
    %v1678 = vunpack.c.h.b16 %v432
    %v1679 = vunpack.c.l.b16 %v433
    %v1680 = vunpack.c.l.b16 %v434
    %v1681 = vunpack.c.h.b16 %v434
    %v1682 = vunpack.c.l.b16 %v435
    %v1683 = vunpack.c.l.b16 %v436
    %v1684 = vunpack.c.h.b16 %v436
    %v1685 = vunpack.c.l.b16 %v437
    %v1686 = vunpack.c.l.b16 %v438
    %v1687 = vunpack.c.h.b16 %v438
    %v1688 = vunpack.c.l.b16 %v439
    %v1689 = vunpack.c.l.b16 %v440
    %v1690 = vunpack.c.h.b16 %v440
    %v1691 = vunpack.c.l.b16 %v441
    %v1692 = vunpack.c.l.b16 %v442
    %v1693 = vunpack.c.h.b16 %v442
    %v1694 = vunpack.c.l.b16 %v443
    %v1695 = vunpack.c.l.b16 %v444
    %v1696 = vunpack.c.h.b16 %v444
    %v1697 = vunpack.c.l.b16 %v445
    %v1698 = vunpack.c.l.b16 %v446
    %v1699 = vunpack.c.h.b16 %v446
    %v1700 = vunpack.c.l.b16 %v447
    %v1701 = vunpack.c.l.b16 %v448
    %v1702 = vunpack.c.h.b16 %v448
    %v1703 = vunpack.c.l.b16 %v449
    %v1704 = vunpack.c.l.b16 %v450
    %v1705 = vunpack.c.h.b16 %v450
    %v1706 = vunpack.c.l.b16 %v451
    %v1707 = vunpack.c.l.b16 %v452
    %v1708 = vunpack.c.h.b16 %v452
    %v1709 = vunpack.c.l.b16 %v453
    %v1710 = vunpack.c.l.b16 %v454
    %v1711 = vunpack.c.h.b16 %v454
    %v1712 = vunpack.c.l.b16 %v455
    %v1713 = vunpack.c.l.b16 %v456
    %v1714 = vunpack.c.h.b16 %v456
    %v1715 = vunpack.c.l.b16 %v457
    %v1716 = vunpack.c.l.b16 %v458
    %v1717 = vunpack.c.h.b16 %v458
    %v1718 = vunpack.c.l.b16 %v459
    %v1719 = vunpack.c.l.b16 %v460
    %v1720 = vunpack.c.h.b16 %v460
    %v1721 = vunpack.c.l.b16 %v461
    %v1722 = vunpack.c.l.b16 %v462
    %v1723 = vunpack.c.h.b16 %v462
    %v1724 = vunpack.c.l.b16 %v463
    %v1725 = vunpack.c.l.b16 %v464
    %v1726 = vunpack.c.h.b16 %v464
    %v1727 = vunpack.c.l.b16 %v465
    %v1728 = vunpack.c.l.b16 %v466
    %v1729 = vunpack.c.h.b16 %v466
    %v1730 = vunpack.c.l.b16 %v467
    %v1731 = vunpack.c.l.b16 %v468
    %v1732 = vunpack.c.h.b16 %v468
    %v1733 = vunpack.c.l.b16 %v469
    %v1734 = vunpack.c.l.b16 %v470
    %v1735 = vunpack.c.h.b16 %v470
    %v1736 = vunpack.c.l.b16 %v471
    %v1737 = vunpack.c.l.b16 %v472
    %v1738 = vunpack.c.h.b16 %v472
    %v1739 = vunpack.c.l.b16 %v473
    %v1740 = vunpack.c.l.b16 %v474
    %v1741 = vunpack.c.h.b16 %v474
    %v1742 = vunpack.c.l.b16 %v475
    %v1743 = vunpack.c.l.b16 %v476
    %v1744 = vunpack.c.h.b16 %v476
    %v1745 = vunpack.c.l.b16 %v477
    %v1746 = vunpack.c.l.b16 %v478
    %v1747 = vunpack.c.h.b16 %v478
    %v1748 = vunpack.c.l.b16 %v479
    %v1749 = vunpack.c.l.b16 %v480
    %v1750 = vunpack.c.h.b16 %v480
    %v1751 = vunpack.c.l.b16 %v481
    %v1752 = vunpack.c.l.b16 %v482
    %v1753 = vunpack.c.h.b16 %v482
    %v1754 = vunpack.c.l.b16 %v483
    %v1755 = vunpack.c.l.b16 %v484
    %v1756 = vunpack.c.h.b16 %v484
    %v1757 = vunpack.c.l.b16 %v485
    %v1758 = vunpack.c.l.b16 %v486
    %v1759 = vunpack.c.h.b16 %v486
    %v1760 = vunpack.c.l.b16 %v487
    %v1761 = vunpack.c.l.b16 %v488
    %v1762 = vunpack.c.h.b16 %v488
    %v1763 = vunpack.c.l.b16 %v489
    %v1764 = vunpack.c.l.b16 %v490
    %v1765 = vunpack.c.h.b16 %v490
    %v1766 = vunpack.c.l.b16 %v491
    %v1767 = vunpack.c.l.b16 %v492
    %v1768 = vunpack.c.h.b16 %v492
    %v1769 = vunpack.c.l.b16 %v493
    %v1770 = vunpack.c.l.b16 %v494
    %v1771 = vunpack.c.h.b16 %v494
    %v1772 = vunpack.c.l.b16 %v495
    %v1773 = vunpack.c.l.b16 %v496
    %v1774 = vunpack.c.h.b16 %v496
    %v1775 = vunpack.c.l.b16 %v497
    %v1776 = vunpack.c.l.b16 %v498
    %v1777 = vunpack.c.h.b16 %v498
    %v1778 = vunpack.c.l.b16 %v499
    %v1779 = vunpack.c.l.b16 %v500
    %v1780 = vunpack.c.h.b16 %v500
    %v1781 = vunpack.c.l.b16 %v501
    %v1782 = vunpack.c.l.b16 %v502
    %v1783 = vunpack.c.h.b16 %v502
    %v1784 = vunpack.c.l.b16 %v503
    %v1785 = vunpack.c.l.b16 %v504
    %v1786 = vunpack.c.h.b16 %v504
    %v1787 = vunpack.c.l.b16 %v505
    %v1788 = vunpack.c.l.b16 %v506
    %v1789 = vunpack.c.h.b16 %v506
    %v1790 = vunpack.c.l.b16 %v507
    %v1791 = vunpack.c.l.b16 %v508
    %v1792 = vunpack.c.h.b16 %v508
    %v1793 = vunpack.c.l.b16 %v509
    %v1794 = vunpack.c.l.b16 %v510
    %v1795 = vunpack.c.h.b16 %v510
    %v1796 = vunpack.c.l.b16 %v511
    %v1797 = vunpack.c.l.b16 %v512
    %v1798 = vunpack.c.h.b16 %v512
    %v1799 = vunpack.c.l.b16 %v513
    %v1800 = vunpack.c.l.b16 %v514
    %v1801 = vunpack.c.h.b16 %v514
    %v1802 = vunpack.c.l.b16 %v515
    %v1803 = vunpack.c.l.b16 %v516
    %v1804 = vunpack.c.h.b16 %v516
    %v1805 = vunpack.c.l.b16 %v517
    %v1806 = vunpack.c.l.b16 %v518
    %v1807 = vunpack.c.h.b16 %v518
    %v1808 = vunpack.c.l.b16 %v519
    %v1809 = vunpack.c.l.b16 %v520
    %v1810 = vunpack.c.h.b16 %v520
    %v1811 = vunpack.c.l.b16 %v521
    %v1812 = vunpack.c.l.b16 %v522
    %v1813 = vunpack.c.h.b16 %v522
    %v1814 = vunpack.c.l.b16 %v523
    %v1815 = vunpack.c.l.b16 %v524
    %v1816 = vunpack.c.h.b16 %v524
    %v1817 = vunpack.c.l.b16 %v525
    %v1818 = vunpack.c.l.b16 %v526
    %v1819 = vunpack.c.h.b16 %v526
    %v1820 = vunpack.c.l.b16 %v527
    %v1821 = vunpack.c.l.b16 %v528
    %v1822 = vunpack.c.h.b16 %v528
    %v1823 = vunpack.c.l.b16 %v529
    %v1824 = vunpack.c.l.b16 %v530
    %v1825 = vunpack.c.h.b16 %v530
    %v1826 = vunpack.c.l.b16 %v531
    %v1827 = vunpack.c.l.b16 %v532
    %v1828 = vunpack.c.h.b16 %v532
    %v1829 = vunpack.c.l.b16 %v533
    %v1830 = vunpack.c.l.b16 %v534
    %v1831 = vunpack.c.h.b16 %v534
    %v1832 = vunpack.c.l.b16 %v535
    %v1833 = vunpack.c.l.b16 %v536
    %v1834 = vunpack.c.h.b16 %v536
    %v1835 = vunpack.c.l.b16 %v537
    %v1836 = vunpack.c.l.b16 %v538
    %v1837 = vunpack.c.h.b16 %v538
    %v1838 = vunpack.c.l.b16 %v539
    %v1839 = vunpack.c.l.b16 %v540
    %v1840 = vunpack.c.h.b16 %v540
    %v1841 = vunpack.c.l.b16 %v541
    %v1842 = vunpack.c.l.b16 %v542
    %v1843 = vunpack.c.h.b16 %v542
    %v1844 = vunpack.c.l.b16 %v543
    %v1845 = vunpack.c.l.b16 %v544
    %v1846 = vunpack.c.h.b16 %v544
    %v1847 = vunpack.c.l.b16 %v545
    %v1848 = vunpack.c.l.b16 %v546
    %v1849 = vunpack.c.h.b16 %v546
    %v1850 = vunpack.c.l.b16 %v547
    %v1851 = vunpack.c.l.b16 %v548
    %v1852 = vunpack.c.h.b16 %v548
    %v1853 = vunpack.c.l.b16 %v549
    %v1854 = vunpack.c.l.b16 %v550
    %v1855 = vunpack.c.h.b16 %v550
    %v1856 = vunpack.c.l.b16 %v551
    %v1857 = vunpack.c.l.b16 %v552
    %v1858 = vunpack.c.h.b16 %v552
    %v1859 = vunpack.c.l.b16 %v553
    %v1860 = vunpack.c.l.b16 %v554
    %v1861 = vunpack.c.h.b16 %v554
    %v1862 = vunpack.c.l.b16 %v555
    %v1863 = vunpack.c.l.b16 %v556
    %v1864 = vunpack.c.h.b16 %v556
    %v1865 = vunpack.c.l.b16 %v557
    %v1866 = vunpack.c.l.b16 %v558
    %v1867 = vunpack.c.h.b16 %v558
    %v1868 = vunpack.c.l.b16 %v559
    %v1869 = vunpack.c.l.b16 %v560
    %v1870 = vunpack.c.h.b16 %v560
    %v1871 = vunpack.c.l.b16 %v561
    %v1872 = vunpack.c.l.b16 %v562
    %v1873 = vunpack.c.h.b16 %v562
    %v1874 = vunpack.c.l.b16 %v563
    %v1875 = vunpack.c.l.b16 %v564
    %v1876 = vunpack.c.h.b16 %v564
    %v1877 = vunpack.c.l.b16 %v565
    %v1878 = vunpack.c.l.b16 %v566
    %v1879 = vunpack.c.h.b16 %v566
    %v1880 = vunpack.c.l.b16 %v567
    %v1881 = vunpack.c.l.b16 %v568
    %v1882 = vunpack.c.h.b16 %v568
    %v1883 = vunpack.c.l.b16 %v569
    %v1884 = vunpack.c.l.b16 %v570
    %v1885 = vunpack.c.h.b16 %v570
    %v1886 = vunpack.c.l.b16 %v571
    %v1887 = vunpack.c.l.b16 %v572
    %v1888 = vunpack.c.h.b16 %v572
    %v1889 = vunpack.c.l.b16 %v573
    %v1890 = vunpack.c.l.b16 %v574
    %v1891 = vunpack.c.h.b16 %v574
    %v1892 = vunpack.c.l.b16 %v575
    %v1893 = vunpack.c.l.b16 %v576
    %v1894 = vunpack.c.h.b16 %v576
    %v1895 = vunpack.c.l.b16 %v577
    %v1896 = vunpack.c.l.b16 %v578
    %v1897 = vunpack.c.h.b16 %v578
    %v1898 = vunpack.c.l.b16 %v579
    %v1899 = vunpack.c.l.b16 %v580
    %v1900 = vunpack.c.h.b16 %v580
    %v1901 = vunpack.c.l.b16 %v581
    %v1902 = vunpack.c.l.b16 %v582
    %v1903 = vunpack.c.h.b16 %v582
    %v1904 = vunpack.c.l.b16 %v583
    %v1905 = vunpack.c.l.b16 %v584
    %v1906 = vunpack.c.h.b16 %v584
    %v1907 = vunpack.c.l.b16 %v585
    %v1908 = vunpack.c.l.b16 %v586
    %v1909 = vunpack.c.h.b16 %v586
    %v1910 = vunpack.c.l.b16 %v587
    %v1911 = vunpack.c.l.b16 %v588
    %v1912 = vunpack.c.h.b16 %v588
    %v1913 = vunpack.c.l.b16 %v589
    %v1914 = vunpack.c.l.b16 %v590
    %v1915 = vunpack.c.h.b16 %v590
    %v1916 = vunpack.c.l.b16 %v591
    %v1917 = vunpack.c.l.b16 %v592
    %v1918 = vunpack.c.h.b16 %v592
    %v1919 = vunpack.c.l.b16 %v593
    %v1920 = vunpack.c.l.b16 %v594
    %v1921 = vunpack.c.h.b16 %v594
    %v1922 = vunpack.c.l.b16 %v595
    %v1923 = vunpack.c.l.b16 %v596
    %v1924 = vunpack.c.h.b16 %v596
    %v1925 = vunpack.c.l.b16 %v597
    %v1926 = vunpack.c.l.b16 %v598
    %v1927 = vunpack.c.h.b16 %v598
    %v1928 = vunpack.c.l.b16 %v599
    %v1929 = vunpack.c.l.b16 %v600
    %v1930 = vunpack.c.h.b16 %v600
    %v1931 = vunpack.c.l.b16 %v601
    %v1932 = vunpack.c.l.b16 %v602
    %v1933 = vunpack.c.h.b16 %v602
    %v1934 = vunpack.c.l.b16 %v603
    %v1935 = vunpack.c.l.b16 %v604
    %v1936 = vunpack.c.h.b16 %v604
    %v1937 = vunpack.c.l.b16 %v605
    %v1938 = vunpack.c.l.b16 %v606
    %v1939 = vunpack.c.h.b16 %v606
    %v1940 = vunpack.c.l.b16 %v607
    %v1941 = vunpack.c.l.b16 %v608
    %v1942 = vunpack.c.h.b16 %v608
    %v1943 = vunpack.c.l.b16 %v609
    %v1944 = vunpack.c.l.b16 %v610
    %v1945 = vunpack.c.h.b16 %v610
    %v1946 = vunpack.c.l.b16 %v611
    %v1947 = vunpack.c.l.b16 %v612
    %v1948 = vunpack.c.h.b16 %v612
    %v1949 = vunpack.c.l.b16 %v613
    %v1950 = vunpack.c.l.b16 %v614
    %v1951 = vunpack.c.h.b16 %v614
    %v1952 = vunpack.c.l.b16 %v615
    %v1953 = vunpack.c.l.b16 %v616
    %v1954 = vunpack.c.h.b16 %v616
    %v1955 = vunpack.c.l.b16 %v617
    %v1956 = vunpack.c.l.b16 %v618
    %v1957 = vunpack.c.h.b16 %v618
    %v1958 = vunpack.c.l.b16 %v619
    %v1959 = vunpack.c.l.b16 %v620
    %v1960 = vunpack.c.h.b16 %v620
    %v1961 = vunpack.c.l.b16 %v621
    %v1962 = vunpack.c.l.b16 %v622
    %v1963 = vunpack.c.h.b16 %v622
    %v1964 = vunpack.c.l.b16 %v623
    %v1965 = vunpack.c.l.b16 %v624
    %v1966 = vunpack.c.h.b16 %v624
    %v1967 = vunpack.c.l.b16 %v625
    %v1968 = vunpack.c.l.b16 %v626
    %v1969 = vunpack.c.h.b16 %v626
    %v1970 = vunpack.c.l.b16 %v627
    %v1971 = vunpack.c.l.b16 %v628
    %v1972 = vunpack.c.h.b16 %v628
    %v1973 = vunpack.c.l.b16 %v629
    %v1974 = vunpack.c.l.b16 %v630
    %v1975 = vunpack.c.h.b16 %v630
    %v1976 = vunpack.c.l.b16 %v631
    %v1977 = vunpack.c.l.b16 %v632
    %v1978 = vunpack.c.h.b16 %v632
    %v1979 = vunpack.c.l.b16 %v633
    %v1980 = vunpack.c.l.b16 %v634
    %v1981 = vunpack.c.h.b16 %v634
    %v1982 = vunpack.c.l.b16 %v635
    %v1983 = vunpack.c.l.b16 %v636
    %v1984 = vunpack.c.h.b16 %v636
    %v1985 = vunpack.c.l.b16 %v637
    %v1986 = vunpack.c.l.b16 %v638
    %v1987 = vunpack.c.h.b16 %v638
    %v1988 = vunpack.c.l.b16 %v639
    %v1989 = vunpack.c.l.b16 %v640
    %v1990 = vunpack.c.h.b16 %v640
    %v1991 = vunpack.c.l.b16 %v641
    %v1992 = vunpack.c.l.b16 %v642
    %v1993 = vunpack.c.h.b16 %v642
    %v1994 = vunpack.c.l.b16 %v643
    %v1995 = vunpack.c.l.b16 %v644
    %v1996 = vunpack.c.h.b16 %v644
    %v1997 = vunpack.c.l.b16 %v645
    %v1998 = vunpack.c.l.b16 %v646
    %v1999 = vunpack.c.h.b16 %v646
    %v2000 = vunpack.c.l.b16 %v647
    %v2001 = vunpack.c.l.b16 %v648
    %v2002 = vunpack.c.h.b16 %v648
    %v2003 = vunpack.c.l.b16 %v649
    %v2004 = vunpack.c.l.b16 %v650
    %v2005 = vunpack.c.h.b16 %v650
    %v2006 = vunpack.c.l.b16 %v651
    %v2007 = vunpack.c.l.b16 %v652
    %v2008 = vunpack.c.h.b16 %v652
    %v2009 = vunpack.c.l.b16 %v653
    %v2010 = vunpack.c.l.b16 %v654
    %v2011 = vunpack.c.h.b16 %v654
    %v2012 = vunpack.c.l.b16 %v655
    %v2013 = vunpack.c.l.b16 %v656
    %v2014 = vunpack.c.h.b16 %v656
    %v2015 = vunpack.c.l.b16 %v657
    %v2016 = vunpack.c.l.b16 %v658
    %v2017 = vunpack.c.h.b16 %v658
    %v2018 = vunpack.c.l.b16 %v659
    %v2019 = vunpack.c.l.b16 %v660
    %v2020 = vunpack.c.h.b16 %v660
    %v2021 = vunpack.c.l.b16 %v661
    %v2022 = vunpack.c.l.b16 %v662
    %v2023 = vunpack.c.h.b16 %v662
    %v2024 = vunpack.c.l.b16 %v663
    %v2025 = vunpack.c.l.b16 %v664
    %v2026 = vunpack.c.h.b16 %v664
    %v2027 = vunpack.c.l.b16 %v665
    %v2028 = vunpack.c.l.b16 %v666
    %v2029 = vunpack.c.h.b16 %v666
    %v2030 = vunpack.c.l.b16 %v667
    %v2031 = vunpack.c.l.b16 %v668
    %v2032 = vunpack.c.h.b16 %v668
    %v2033 = vunpack.c.l.b16 %v669
    %v2034 = vunpack.c.l.b16 %v670
    %v2035 = vunpack.c.h.b16 %v670
    %v2036 = vunpack.c.l.b16 %v671
    %v2037 = vunpack.c.l.b16 %v672
    %v2038 = vunpack.c.h.b16 %v672
    %v2039 = vunpack.c.l.b16 %v673
    %v2040 = vunpack.c.l.b16 %v674
    %v2041 = vunpack.c.h.b16 %v674
    %v2042 = vunpack.c.l.b16 %v675
    %v2043 = vunpack.c.l.b16 %v676
    %v2044 = vunpack.c.h.b16 %v676
    %v2045 = vunpack.c.l.b16 %v677
    %v2046 = vpack.c.b16 %v1281, %v1278
    %v2047 = vpack.c.b16 %v1282, %v1279
    %v2048 = vpack.c.b16 %v1283, %v1280
    %v2049 = vpack.c.b16 %v1287, %v1284
    %v2050 = vpack.c.b16 %v1288, %v1285
    %v2051 = vpack.c.b16 %v1289, %v1286
    %v2052 = vpack.c.b16 %v1293, %v1290
    %v2053 = vpack.c.b16 %v1294, %v1291
    %v2054 = vpack.c.b16 %v1295, %v1292
    %v2055 = vpack.c.b16 %v1299, %v1296
    %v2056 = vpack.c.b16 %v1300, %v1297
    %v2057 = vpack.c.b16 %v1301, %v1298
    %v2058 = vpack.c.b16 %v1305, %v1302
    %v2059 = vpack.c.b16 %v1306, %v1303
    %v2060 = vpack.c.b16 %v1307, %v1304
    %v2061 = vpack.c.b16 %v1311, %v1308
    %v2062 = vpack.c.b16 %v1312, %v1309
    %v2063 = vpack.c.b16 %v1313, %v1310
    %v2064 = vpack.c.b16 %v1317, %v1314
    %v2065 = vpack.c.b16 %v1318, %v1315
    %v2066 = vpack.c.b16 %v1319, %v1316
    %v2067 = vpack.c.b16 %v1323, %v1320
    %v2068 = vpack.c.b16 %v1324, %v1321
    %v2069 = vpack.c.b16 %v1325, %v1322
    %v2070 = vpack.c.b16 %v1329, %v1326
    %v2071 = vpack.c.b16 %v1330, %v1327
    %v2072 = vpack.c.b16 %v1331, %v1328
    %v2073 = vpack.c.b16 %v1335, %v1332
    %v2074 = vpack.c.b16 %v1336, %v1333
    %v2075 = vpack.c.b16 %v1337, %v1334
    %v2076 = vpack.c.b16 %v1341, %v1338
    %v2077 = vpack.c.b16 %v1342, %v1339
    %v2078 = vpack.c.b16 %v1343, %v1340
    %v2079 = vpack.c.b16 %v1347, %v1344
    %v2080 = vpack.c.b16 %v1348, %v1345
    %v2081 = vpack.c.b16 %v1349, %v1346
    %v2082 = vpack.c.b16 %v1353, %v1350
    %v2083 = vpack.c.b16 %v1354, %v1351
    %v2084 = vpack.c.b16 %v1355, %v1352
    %v2085 = vpack.c.b16 %v1359, %v1356
    %v2086 = vpack.c.b16 %v1360, %v1357
    %v2087 = vpack.c.b16 %v1361, %v1358
    %v2088 = vpack.c.b16 %v1365, %v1362
    %v2089 = vpack.c.b16 %v1366, %v1363
    %v2090 = vpack.c.b16 %v1367, %v1364
    %v2091 = vpack.c.b16 %v1371, %v1368
    %v2092 = vpack.c.b16 %v1372, %v1369
    %v2093 = vpack.c.b16 %v1373, %v1370
    %v2094 = vpack.c.b16 %v1377, %v1374
    %v2095 = vpack.c.b16 %v1378, %v1375
    %v2096 = vpack.c.b16 %v1379, %v1376
    %v2097 = vpack.c.b16 %v1383, %v1380
    %v2098 = vpack.c.b16 %v1384, %v1381
    %v2099 = vpack.c.b16 %v1385, %v1382
    %v2100 = vpack.c.b16 %v1389, %v1386
    %v2101 = vpack.c.b16 %v1390, %v1387
    %v2102 = vpack.c.b16 %v1391, %v1388
    %v2103 = vpack.c.b16 %v1395, %v1392
    %v2104 = vpack.c.b16 %v1396, %v1393
    %v2105 = vpack.c.b16 %v1397, %v1394
    %v2106 = vpack.c.b16 %v1401, %v1398
    %v2107 = vpack.c.b16 %v1402, %v1399
    %v2108 = vpack.c.b16 %v1403, %v1400
    %v2109 = vpack.c.b16 %v1407, %v1404
    %v2110 = vpack.c.b16 %v1408, %v1405
    %v2111 = vpack.c.b16 %v1409, %v1406
    %v2112 = vpack.c.b16 %v1413, %v1410
    %v2113 = vpack.c.b16 %v1414, %v1411
    %v2114 = vpack.c.b16 %v1415, %v1412
    %v2115 = vpack.c.b16 %v1419, %v1416
    %v2116 = vpack.c.b16 %v1420, %v1417
    %v2117 = vpack.c.b16 %v1421, %v1418
    %v2118 = vpack.c.b16 %v1425, %v1422
    %v2119 = vpack.c.b16 %v1426, %v1423
    %v2120 = vpack.c.b16 %v1427, %v1424
    %v2121 = vpack.c.b16 %v1431, %v1428
    %v2122 = vpack.c.b16 %v1432, %v1429
    %v2123 = vpack.c.b16 %v1433, %v1430
    %v2124 = vpack.c.b16 %v1437, %v1434
    %v2125 = vpack.c.b16 %v1438, %v1435
    %v2126 = vpack.c.b16 %v1439, %v1436
    %v2127 = vpack.c.b16 %v1443, %v1440
    %v2128 = vpack.c.b16 %v1444, %v1441
    %v2129 = vpack.c.b16 %v1445, %v1442
    %v2130 = vpack.c.b16 %v1449, %v1446
    %v2131 = vpack.c.b16 %v1450, %v1447
    %v2132 = vpack.c.b16 %v1451, %v1448
    %v2133 = vpack.c.b16 %v1455, %v1452
    %v2134 = vpack.c.b16 %v1456, %v1453
    %v2135 = vpack.c.b16 %v1457, %v1454
    %v2136 = vpack.c.b16 %v1461, %v1458
    %v2137 = vpack.c.b16 %v1462, %v1459
    %v2138 = vpack.c.b16 %v1463, %v1460
    %v2139 = vpack.c.b16 %v1467, %v1464
    %v2140 = vpack.c.b16 %v1468, %v1465
    %v2141 = vpack.c.b16 %v1469, %v1466
    %v2142 = vpack.c.b16 %v1473, %v1470
    %v2143 = vpack.c.b16 %v1474, %v1471
    %v2144 = vpack.c.b16 %v1475, %v1472
    %v2145 = vpack.c.b16 %v1479, %v1476
    %v2146 = vpack.c.b16 %v1480, %v1477
    %v2147 = vpack.c.b16 %v1481, %v1478
    %v2148 = vpack.c.b16 %v1485, %v1482
    %v2149 = vpack.c.b16 %v1486, %v1483
    %v2150 = vpack.c.b16 %v1487, %v1484
    %v2151 = vpack.c.b16 %v1491, %v1488
    %v2152 = vpack.c.b16 %v1492, %v1489
    %v2153 = vpack.c.b16 %v1493, %v1490
    %v2154 = vpack.c.b16 %v1497, %v1494
    %v2155 = vpack.c.b16 %v1498, %v1495
    %v2156 = vpack.c.b16 %v1499, %v1496
    %v2157 = vpack.c.b16 %v1503, %v1500
    %v2158 = vpack.c.b16 %v1504, %v1501
    %v2159 = vpack.c.b16 %v1505, %v1502
    %v2160 = vpack.c.b16 %v1509, %v1506
    %v2161 = vpack.c.b16 %v1510, %v1507
    %v2162 = vpack.c.b16 %v1511, %v1508
    %v2163 = vpack.c.b16 %v1515, %v1512
    %v2164 = vpack.c.b16 %v1516, %v1513
    %v2165 = vpack.c.b16 %v1517, %v1514
    %v2166 = vpack.c.b16 %v1521, %v1518
    %v2167 = vpack.c.b16 %v1522, %v1519
    %v2168 = vpack.c.b16 %v1523, %v1520
    %v2169 = vpack.c.b16 %v1527, %v1524
    %v2170 = vpack.c.b16 %v1528, %v1525
    %v2171 = vpack.c.b16 %v1529, %v1526
    %v2172 = vpack.c.b16 %v1533, %v1530
    %v2173 = vpack.c.b16 %v1534, %v1531
    %v2174 = vpack.c.b16 %v1535, %v1532
    %v2175 = vpack.c.b16 %v1539, %v1536
    %v2176 = vpack.c.b16 %v1540, %v1537
    %v2177 = vpack.c.b16 %v1541, %v1538
    %v2178 = vpack.c.b16 %v1545, %v1542
    %v2179 = vpack.c.b16 %v1546, %v1543
    %v2180 = vpack.c.b16 %v1547, %v1544
    %v2181 = vpack.c.b16 %v1551, %v1548
    %v2182 = vpack.c.b16 %v1552, %v1549
    %v2183 = vpack.c.b16 %v1553, %v1550
    %v2184 = vpack.c.b16 %v1557, %v1554
    %v2185 = vpack.c.b16 %v1558, %v1555
    %v2186 = vpack.c.b16 %v1559, %v1556
    %v2187 = vpack.c.b16 %v1563, %v1560
    %v2188 = vpack.c.b16 %v1564, %v1561
    %v2189 = vpack.c.b16 %v1565, %v1562
    %v2190 = vpack.c.b16 %v1569, %v1566
    %v2191 = vpack.c.b16 %v1570, %v1567
    %v2192 = vpack.c.b16 %v1571, %v1568
    %v2193 = vpack.c.b16 %v1575, %v1572
    %v2194 = vpack.c.b16 %v1576, %v1573
    %v2195 = vpack.c.b16 %v1577, %v1574
    %v2196 = vpack.c.b16 %v1581, %v1578
    %v2197 = vpack.c.b16 %v1582, %v1579
    %v2198 = vpack.c.b16 %v1583, %v1580
    %v2199 = vpack.c.b16 %v1587, %v1584
    %v2200 = vpack.c.b16 %v1588, %v1585
    %v2201 = vpack.c.b16 %v1589, %v1586
    %v2202 = vpack.c.b16 %v1593, %v1590
    %v2203 = vpack.c.b16 %v1594, %v1591
    %v2204 = vpack.c.b16 %v1595, %v1592
    %v2205 = vpack.c.b16 %v1599, %v1596
    %v2206 = vpack.c.b16 %v1600, %v1597
    %v2207 = vpack.c.b16 %v1601, %v1598
    %v2208 = vpack.c.b16 %v1605, %v1602
    %v2209 = vpack.c.b16 %v1606, %v1603
    %v2210 = vpack.c.b16 %v1607, %v1604
    %v2211 = vpack.c.b16 %v1611, %v1608
    %v2212 = vpack.c.b16 %v1612, %v1609
    %v2213 = vpack.c.b16 %v1613, %v1610
    %v2214 = vpack.c.b16 %v1617, %v1614
    %v2215 = vpack.c.b16 %v1618, %v1615
    %v2216 = vpack.c.b16 %v1619, %v1616
    %v2217 = vpack.c.b16 %v1623, %v1620
    %v2218 = vpack.c.b16 %v1624, %v1621
    %v2219 = vpack.c.b16 %v1625, %v1622
    %v2220 = vpack.c.b16 %v1629, %v1626
    %v2221 = vpack.c.b16 %v1630, %v1627
    %v2222 = vpack.c.b16 %v1631, %v1628
    %v2223 = vpack.c.b16 %v1635, %v1632
    %v2224 = vpack.c.b16 %v1636, %v1633
    %v2225 = vpack.c.b16 %v1637, %v1634
    %v2226 = vpack.c.b16 %v1641, %v1638
    %v2227 = vpack.c.b16 %v1642, %v1639
    %v2228 = vpack.c.b16 %v1643, %v1640
    %v2229 = vpack.c.b16 %v1647, %v1644
    %v2230 = vpack.c.b16 %v1648, %v1645
    %v2231 = vpack.c.b16 %v1649, %v1646
    %v2232 = vpack.c.b16 %v1653, %v1650
    %v2233 = vpack.c.b16 %v1654, %v1651
    %v2234 = vpack.c.b16 %v1655, %v1652
    %v2235 = vpack.c.b16 %v1659, %v1656
    %v2236 = vpack.c.b16 %v1660, %v1657
    %v2237 = vpack.c.b16 %v1661, %v1658
    %v2238 = vpack.c.b16 %v1665, %v1662
    %v2239 = vpack.c.b16 %v1666, %v1663
    %v2240 = vpack.c.b16 %v1667, %v1664
    %v2241 = vpack.c.b16 %v1671, %v1668
    %v2242 = vpack.c.b16 %v1672, %v1669
    %v2243 = vpack.c.b16 %v1673, %v1670
    %v2244 = vpack.c.b16 %v1677, %v1674
    %v2245 = vpack.c.b16 %v1678, %v1675
    %v2246 = vpack.c.b16 %v1679, %v1676
    %v2247 = vpack.c.b16 %v1683, %v1680
    %v2248 = vpack.c.b16 %v1684, %v1681
    %v2249 = vpack.c.b16 %v1685, %v1682
    %v2250 = vpack.c.b16 %v1689, %v1686
    %v2251 = vpack.c.b16 %v1690, %v1687
    %v2252 = vpack.c.b16 %v1691, %v1688
    %v2253 = vpack.c.b16 %v1695, %v1692
    %v2254 = vpack.c.b16 %v1696, %v1693
    %v2255 = vpack.c.b16 %v1697, %v1694
    %v2256 = vpack.c.b16 %v1701, %v1698
    %v2257 = vpack.c.b16 %v1702, %v1699
    %v2258 = vpack.c.b16 %v1703, %v1700
    %v2259 = vpack.c.b16 %v1707, %v1704
    %v2260 = vpack.c.b16 %v1708, %v1705
    %v2261 = vpack.c.b16 %v1709, %v1706
    %v2262 = vpack.c.b16 %v1713, %v1710
    %v2263 = vpack.c.b16 %v1714, %v1711
    %v2264 = vpack.c.b16 %v1715, %v1712
    %v2265 = vpack.c.b16 %v1719, %v1716
    %v2266 = vpack.c.b16 %v1720, %v1717
    %v2267 = vpack.c.b16 %v1721, %v1718
    %v2268 = vpack.c.b16 %v1725, %v1722
    %v2269 = vpack.c.b16 %v1726, %v1723
    %v2270 = vpack.c.b16 %v1727, %v1724
    %v2271 = vpack.c.b16 %v1731, %v1728
    %v2272 = vpack.c.b16 %v1732, %v1729
    %v2273 = vpack.c.b16 %v1733, %v1730
    %v2274 = vpack.c.b16 %v1737, %v1734
    %v2275 = vpack.c.b16 %v1738, %v1735
    %v2276 = vpack.c.b16 %v1739, %v1736
    %v2277 = vpack.c.b16 %v1743, %v1740
    %v2278 = vpack.c.b16 %v1744, %v1741
    %v2279 = vpack.c.b16 %v1745, %v1742
    %v2280 = vpack.c.b16 %v1749, %v1746
    %v2281 = vpack.c.b16 %v1750, %v1747
    %v2282 = vpack.c.b16 %v1751, %v1748
    %v2283 = vpack.c.b16 %v1755, %v1752
    %v2284 = vpack.c.b16 %v1756, %v1753
    %v2285 = vpack.c.b16 %v1757, %v1754
    %v2286 = vpack.c.b16 %v1761, %v1758
    %v2287 = vpack.c.b16 %v1762, %v1759
    %v2288 = vpack.c.b16 %v1763, %v1760
    %v2289 = vpack.c.b16 %v1767, %v1764
    %v2290 = vpack.c.b16 %v1768, %v1765
    %v2291 = vpack.c.b16 %v1769, %v1766
    %v2292 = vpack.c.b16 %v1773, %v1770
    %v2293 = vpack.c.b16 %v1774, %v1771
    %v2294 = vpack.c.b16 %v1775, %v1772
    %v2295 = vpack.c.b16 %v1779, %v1776
    %v2296 = vpack.c.b16 %v1780, %v1777
    %v2297 = vpack.c.b16 %v1781, %v1778
    %v2298 = vpack.c.b16 %v1785, %v1782
    %v2299 = vpack.c.b16 %v1786, %v1783
    %v2300 = vpack.c.b16 %v1787, %v1784
    %v2301 = vpack.c.b16 %v1791, %v1788
    %v2302 = vpack.c.b16 %v1792, %v1789
    %v2303 = vpack.c.b16 %v1793, %v1790
    %v2304 = vpack.c.b16 %v1797, %v1794
    %v2305 = vpack.c.b16 %v1798, %v1795
    %v2306 = vpack.c.b16 %v1799, %v1796
    %v2307 = vpack.c.b16 %v1803, %v1800
    %v2308 = vpack.c.b16 %v1804, %v1801
    %v2309 = vpack.c.b16 %v1805, %v1802
    %v2310 = vpack.c.b16 %v1809, %v1806
    %v2311 = vpack.c.b16 %v1810, %v1807
    %v2312 = vpack.c.b16 %v1811, %v1808
    %v2313 = vpack.c.b16 %v1815, %v1812
    %v2314 = vpack.c.b16 %v1816, %v1813
    %v2315 = vpack.c.b16 %v1817, %v1814
    %v2316 = vpack.c.b16 %v1821, %v1818
    %v2317 = vpack.c.b16 %v1822, %v1819
    %v2318 = vpack.c.b16 %v1823, %v1820
    %v2319 = vpack.c.b16 %v1827, %v1824
    %v2320 = vpack.c.b16 %v1828, %v1825
    %v2321 = vpack.c.b16 %v1829, %v1826
    %v2322 = vpack.c.b16 %v1833, %v1830
    %v2323 = vpack.c.b16 %v1834, %v1831
    %v2324 = vpack.c.b16 %v1835, %v1832
    %v2325 = vpack.c.b16 %v1839, %v1836
    %v2326 = vpack.c.b16 %v1840, %v1837
    %v2327 = vpack.c.b16 %v1841, %v1838
    %v2328 = vpack.c.b16 %v1845, %v1842
    %v2329 = vpack.c.b16 %v1846, %v1843
    %v2330 = vpack.c.b16 %v1847, %v1844
    %v2331 = vpack.c.b16 %v1851, %v1848
    %v2332 = vpack.c.b16 %v1852, %v1849
    %v2333 = vpack.c.b16 %v1853, %v1850
    %v2334 = vpack.c.b16 %v1857, %v1854
    %v2335 = vpack.c.b16 %v1858, %v1855
    %v2336 = vpack.c.b16 %v1859, %v1856
    %v2337 = vpack.c.b16 %v1863, %v1860
    %v2338 = vpack.c.b16 %v1864, %v1861
    %v2339 = vpack.c.b16 %v1865, %v1862
    %v2340 = vpack.c.b16 %v1869, %v1866
    %v2341 = vpack.c.b16 %v1870, %v1867
    %v2342 = vpack.c.b16 %v1871, %v1868
    %v2343 = vpack.c.b16 %v1875, %v1872
    %v2344 = vpack.c.b16 %v1876, %v1873
    %v2345 = vpack.c.b16 %v1877, %v1874
    %v2346 = vpack.c.b16 %v1881, %v1878
    %v2347 = vpack.c.b16 %v1882, %v1879
    %v2348 = vpack.c.b16 %v1883, %v1880
    %v2349 = vpack.c.b16 %v1887, %v1884
    %v2350 = vpack.c.b16 %v1888, %v1885
    %v2351 = vpack.c.b16 %v1889, %v1886
    %v2352 = vpack.c.b16 %v1893, %v1890
    %v2353 = vpack.c.b16 %v1894, %v1891
    %v2354 = vpack.c.b16 %v1895, %v1892
    %v2355 = vpack.c.b16 %v1899, %v1896
    %v2356 = vpack.c.b16 %v1900, %v1897
    %v2357 = vpack.c.b16 %v1901, %v1898
    %v2358 = vpack.c.b16 %v1905, %v1902
    %v2359 = vpack.c.b16 %v1906, %v1903
    %v2360 = vpack.c.b16 %v1907, %v1904
    %v2361 = vpack.c.b16 %v1911, %v1908
    %v2362 = vpack.c.b16 %v1912, %v1909
    %v2363 = vpack.c.b16 %v1913, %v1910
    %v2364 = vpack.c.b16 %v1917, %v1914
    %v2365 = vpack.c.b16 %v1918, %v1915
    %v2366 = vpack.c.b16 %v1919, %v1916
    %v2367 = vpack.c.b16 %v1923, %v1920
    %v2368 = vpack.c.b16 %v1924, %v1921
    %v2369 = vpack.c.b16 %v1925, %v1922
    %v2370 = vpack.c.b16 %v1929, %v1926
    %v2371 = vpack.c.b16 %v1930, %v1927
    %v2372 = vpack.c.b16 %v1931, %v1928
    %v2373 = vpack.c.b16 %v1935, %v1932
    %v2374 = vpack.c.b16 %v1936, %v1933
    %v2375 = vpack.c.b16 %v1937, %v1934
    %v2376 = vpack.c.b16 %v1941, %v1938
    %v2377 = vpack.c.b16 %v1942, %v1939
    %v2378 = vpack.c.b16 %v1943, %v1940
    %v2379 = vpack.c.b16 %v1947, %v1944
    %v2380 = vpack.c.b16 %v1948, %v1945
    %v2381 = vpack.c.b16 %v1949, %v1946
    %v2382 = vpack.c.b16 %v1953, %v1950
    %v2383 = vpack.c.b16 %v1954, %v1951
    %v2384 = vpack.c.b16 %v1955, %v1952
    %v2385 = vpack.c.b16 %v1959, %v1956
    %v2386 = vpack.c.b16 %v1960, %v1957
    %v2387 = vpack.c.b16 %v1961, %v1958
    %v2388 = vpack.c.b16 %v1965, %v1962
    %v2389 = vpack.c.b16 %v1966, %v1963
    %v2390 = vpack.c.b16 %v1967, %v1964
    %v2391 = vpack.c.b16 %v1971, %v1968
    %v2392 = vpack.c.b16 %v1972, %v1969
    %v2393 = vpack.c.b16 %v1973, %v1970
    %v2394 = vpack.c.b16 %v1977, %v1974
    %v2395 = vpack.c.b16 %v1978, %v1975
    %v2396 = vpack.c.b16 %v1979, %v1976
    %v2397 = vpack.c.b16 %v1983, %v1980
    %v2398 = vpack.c.b16 %v1984, %v1981
    %v2399 = vpack.c.b16 %v1985, %v1982
    %v2400 = vpack.c.b16 %v1989, %v1986
    %v2401 = vpack.c.b16 %v1990, %v1987
    %v2402 = vpack.c.b16 %v1991, %v1988
    %v2403 = vpack.c.b16 %v1995, %v1992
    %v2404 = vpack.c.b16 %v1996, %v1993
    %v2405 = vpack.c.b16 %v1997, %v1994
    %v2406 = vpack.c.b16 %v2001, %v1998
    %v2407 = vpack.c.b16 %v2002, %v1999
    %v2408 = vpack.c.b16 %v2003, %v2000
    %v2409 = vpack.c.b16 %v2007, %v2004
    %v2410 = vpack.c.b16 %v2008, %v2005
    %v2411 = vpack.c.b16 %v2009, %v2006
    %v2412 = vpack.c.b16 %v2013, %v2010
    %v2413 = vpack.c.b16 %v2014, %v2011
    %v2414 = vpack.c.b16 %v2015, %v2012
    %v2415 = vpack.c.b16 %v2019, %v2016
    %v2416 = vpack.c.b16 %v2020, %v2017
    %v2417 = vpack.c.b16 %v2021, %v2018
    %v2418 = vpack.c.b16 %v2025, %v2022
    %v2419 = vpack.c.b16 %v2026, %v2023
    %v2420 = vpack.c.b16 %v2027, %v2024
    %v2421 = vpack.c.b16 %v2031, %v2028
    %v2422 = vpack.c.b16 %v2032, %v2029
    %v2423 = vpack.c.b16 %v2033, %v2030
    %v2424 = vpack.c.b16 %v2037, %v2034
    %v2425 = vpack.c.b16 %v2038, %v2035
    %v2426 = vpack.c.b16 %v2039, %v2036
    %v2427 = vpack.c.b16 %v2043, %v2040
    %v2428 = vpack.c.b16 %v2044, %v2041
    %v2429 = vpack.c.b16 %v2045, %v2042
    %2814 = vmatpush.bf16.msra.mxu0 %v2067
    %2815 = vmatpush.bf16.msra.mxu0 %v2064
    %2816 = vmatpush.bf16.msra.mxu0 %v2061
    %2817 = vmatpush.bf16.msra.mxu0 %v2058
    %2818 = vmatpush.bf16.msra.mxu0 %v2055
    %2819 = vmatpush.bf16.msra.mxu0 %v2052
    %2820 = vmatpush.bf16.msra.mxu0 %v2049
    %2821 = vmatpush.bf16.msra.mxu0 %v2046
    %2822 = vmatmul.bf16.gmra.mxu0 %v734
    %v2823 = vpop.f32.mrf.mxu0
    %v2824 = vadd.f32 %v680, %v2823
    %v2825 = vpop.f32.mrf.mxu0
    %v2826 = vadd.f32 %v680, %v2825
    %2827 = vdwg.mxu0
    %2828 = vmatpush.bf16.msra.mxu0 %v2091
    %2829 = vmatpush.bf16.msra.mxu0 %v2088
    %2830 = vmatpush.bf16.msra.mxu0 %v2085
    %2831 = vmatpush.bf16.msra.mxu0 %v2082
    %2832 = vmatpush.bf16.msra.mxu0 %v2079
    %2833 = vmatpush.bf16.msra.mxu0 %v2076
    %2834 = vmatpush.bf16.msra.mxu0 %v2073
    %2835 = vmatpush.bf16.msra.mxu0 %v2070
    %2836 = vmatmul.bf16.gmra.mxu0 %v735
    %v2837 = vpop.f32.mrf.mxu0
    %v2838 = vadd.f32 %v2824, %v2837
    %v2839 = vpop.f32.mrf.mxu0
    %v2840 = vadd.f32 %v2826, %v2839
    %2841 = vdwg.mxu0
    %2842 = vmatpush.bf16.msra.mxu0 %v2115
    %2843 = vmatpush.bf16.msra.mxu0 %v2112
    %2844 = vmatpush.bf16.msra.mxu0 %v2109
    %2845 = vmatpush.bf16.msra.mxu0 %v2106
    %2846 = vmatpush.bf16.msra.mxu0 %v2103
    %2847 = vmatpush.bf16.msra.mxu0 %v2100
    %2848 = vmatpush.bf16.msra.mxu0 %v2097
    %2849 = vmatpush.bf16.msra.mxu0 %v2094
    %2850 = vmatmul.bf16.gmra.mxu0 %v736
    %v2851 = vpop.f32.mrf.mxu0
    %v2852 = vadd.f32 %v2838, %v2851
    %v2853 = vpop.f32.mrf.mxu0
    %v2854 = vadd.f32 %v2840, %v2853
    %2855 = vdwg.mxu0
    %2856 = vmatpush.bf16.msra.mxu0 %v2139
    %2857 = vmatpush.bf16.msra.mxu0 %v2136
    %2858 = vmatpush.bf16.msra.mxu0 %v2133
    %2859 = vmatpush.bf16.msra.mxu0 %v2130
    %2860 = vmatpush.bf16.msra.mxu0 %v2127
    %2861 = vmatpush.bf16.msra.mxu0 %v2124
    %2862 = vmatpush.bf16.msra.mxu0 %v2121
    %2863 = vmatpush.bf16.msra.mxu0 %v2118
    %2864 = vmatmul.bf16.gmra.mxu0 %v737
    %v2865 = vpop.f32.mrf.mxu0
    %v2866 = vadd.f32 %v2852, %v2865
    %v2867 = vpop.f32.mrf.mxu0
    %v2868 = vadd.f32 %v2854, %v2867
    %2869 = vdwg.mxu0
    %2870 = vmatpush.bf16.msra.mxu0 %v2163
    %2871 = vmatpush.bf16.msra.mxu0 %v2160
    %2872 = vmatpush.bf16.msra.mxu0 %v2157
    %2873 = vmatpush.bf16.msra.mxu0 %v2154
    %2874 = vmatpush.bf16.msra.mxu0 %v2151
    %2875 = vmatpush.bf16.msra.mxu0 %v2148
    %2876 = vmatpush.bf16.msra.mxu0 %v2145
    %2877 = vmatpush.bf16.msra.mxu0 %v2142
    %2878 = vmatmul.bf16.gmra.mxu0 %v738
    %v2879 = vpop.f32.mrf.mxu0
    %v2880 = vadd.f32 %v2866, %v2879
    %v2881 = vpop.f32.mrf.mxu0
    %v2882 = vadd.f32 %v2868, %v2881
    %2883 = vdwg.mxu0
    %2884 = vmatpush.bf16.msra.mxu0 %v2187
    %2885 = vmatpush.bf16.msra.mxu0 %v2184
    %2886 = vmatpush.bf16.msra.mxu0 %v2181
    %2887 = vmatpush.bf16.msra.mxu0 %v2178
    %2888 = vmatpush.bf16.msra.mxu0 %v2175
    %2889 = vmatpush.bf16.msra.mxu0 %v2172
    %2890 = vmatpush.bf16.msra.mxu0 %v2169
    %2891 = vmatpush.bf16.msra.mxu0 %v2166
    %2892 = vmatmul.bf16.gmra.mxu0 %v739
    %v2893 = vpop.f32.mrf.mxu0
    %v2894 = vadd.f32 %v2880, %v2893
    %v2895 = vpop.f32.mrf.mxu0
    %v2896 = vadd.f32 %v2882, %v2895
    %2897 = vdwg.mxu0
    %2898 = vmatpush.bf16.msra.mxu0 %v2211
    %2899 = vmatpush.bf16.msra.mxu0 %v2208
    %2900 = vmatpush.bf16.msra.mxu0 %v2205
    %2901 = vmatpush.bf16.msra.mxu0 %v2202
    %2902 = vmatpush.bf16.msra.mxu0 %v2199
    %2903 = vmatpush.bf16.msra.mxu0 %v2196
    %2904 = vmatpush.bf16.msra.mxu0 %v2193
    %2905 = vmatpush.bf16.msra.mxu0 %v2190
    %2906 = vmatmul.bf16.gmra.mxu0 %v740
    %v2907 = vpop.f32.mrf.mxu0
    %v2908 = vadd.f32 %v2894, %v2907
    %v2909 = vpop.f32.mrf.mxu0
    %v2910 = vadd.f32 %v2896, %v2909
    %2911 = vdwg.mxu0
    %2912 = vmatpush.bf16.msra.mxu0 %v2235
    %2913 = vmatpush.bf16.msra.mxu0 %v2232
    %2914 = vmatpush.bf16.msra.mxu0 %v2229
    %2915 = vmatpush.bf16.msra.mxu0 %v2226
    %2916 = vmatpush.bf16.msra.mxu0 %v2223
    %2917 = vmatpush.bf16.msra.mxu0 %v2220
    %2918 = vmatpush.bf16.msra.mxu0 %v2217
    %2919 = vmatpush.bf16.msra.mxu0 %v2214
    %2920 = vmatmul.bf16.gmra.mxu0 %v741
    %v2921 = vpop.f32.mrf.mxu0
    %v2922 = vadd.f32 %v2908, %v2921
    %v2923 = vpop.f32.mrf.mxu0
    %v2924 = vadd.f32 %v2910, %v2923
    %2925 = vdwg.mxu0
    %2926 = vmatpush.bf16.msra.mxu0 %v2259
    %2927 = vmatpush.bf16.msra.mxu0 %v2256
    %2928 = vmatpush.bf16.msra.mxu0 %v2253
    %2929 = vmatpush.bf16.msra.mxu0 %v2250
    %2930 = vmatpush.bf16.msra.mxu0 %v2247
    %2931 = vmatpush.bf16.msra.mxu0 %v2244
    %2932 = vmatpush.bf16.msra.mxu0 %v2241
    %2933 = vmatpush.bf16.msra.mxu0 %v2238
    %2934 = vmatmul.bf16.gmra.mxu0 %v742
    %v2935 = vpop.f32.mrf.mxu0
    %v2936 = vadd.f32 %v2922, %v2935
    %v2937 = vpop.f32.mrf.mxu0
    %v2938 = vadd.f32 %v2924, %v2937
    %2939 = vdwg.mxu0
    %2940 = vmatpush.bf16.msra.mxu0 %v2283
    %2941 = vmatpush.bf16.msra.mxu0 %v2280
    %2942 = vmatpush.bf16.msra.mxu0 %v2277
    %2943 = vmatpush.bf16.msra.mxu0 %v2274
    %2944 = vmatpush.bf16.msra.mxu0 %v2271
    %2945 = vmatpush.bf16.msra.mxu0 %v2268
    %2946 = vmatpush.bf16.msra.mxu0 %v2265
    %2947 = vmatpush.bf16.msra.mxu0 %v2262
    %2948 = vmatmul.bf16.gmra.mxu0 %v743
    %v2949 = vpop.f32.mrf.mxu0
    %v2950 = vadd.f32 %v2936, %v2949
    %v2951 = vpop.f32.mrf.mxu0
    %v2952 = vadd.f32 %v2938, %v2951
    %2953 = vdwg.mxu0
    %2954 = vmatpush.bf16.msra.mxu0 %v2307
    %2955 = vmatpush.bf16.msra.mxu0 %v2304
    %2956 = vmatpush.bf16.msra.mxu0 %v2301
    %2957 = vmatpush.bf16.msra.mxu0 %v2298
    %2958 = vmatpush.bf16.msra.mxu0 %v2295
    %2959 = vmatpush.bf16.msra.mxu0 %v2292
    %2960 = vmatpush.bf16.msra.mxu0 %v2289
    %2961 = vmatpush.bf16.msra.mxu0 %v2286
    %2962 = vmatmul.bf16.gmra.mxu0 %v744
    %v2963 = vpop.f32.mrf.mxu0
    %v2964 = vadd.f32 %v2950, %v2963
    %v2965 = vpop.f32.mrf.mxu0
    %v2966 = vadd.f32 %v2952, %v2965
    %2967 = vdwg.mxu0
    %2968 = vmatpush.bf16.msra.mxu0 %v2331
    %2969 = vmatpush.bf16.msra.mxu0 %v2328
    %2970 = vmatpush.bf16.msra.mxu0 %v2325
    %2971 = vmatpush.bf16.msra.mxu0 %v2322
    %2972 = vmatpush.bf16.msra.mxu0 %v2319
    %2973 = vmatpush.bf16.msra.mxu0 %v2316
    %2974 = vmatpush.bf16.msra.mxu0 %v2313
    %2975 = vmatpush.bf16.msra.mxu0 %v2310
    %2976 = vmatmul.bf16.gmra.mxu0 %v745
    %v2977 = vpop.f32.mrf.mxu0
    %v2978 = vadd.f32 %v2964, %v2977
    %v2979 = vpop.f32.mrf.mxu0
    %v2980 = vadd.f32 %v2966, %v2979
    %2981 = vdwg.mxu0
    %2982 = vmatpush.bf16.msra.mxu0 %v2355
    %2983 = vmatpush.bf16.msra.mxu0 %v2352
    %2984 = vmatpush.bf16.msra.mxu0 %v2349
    %2985 = vmatpush.bf16.msra.mxu0 %v2346
    %2986 = vmatpush.bf16.msra.mxu0 %v2343
    %2987 = vmatpush.bf16.msra.mxu0 %v2340
    %2988 = vmatpush.bf16.msra.mxu0 %v2337
    %2989 = vmatpush.bf16.msra.mxu0 %v2334
    %2990 = vmatmul.bf16.gmra.mxu0 %v746
    %v2991 = vpop.f32.mrf.mxu0
    %v2992 = vadd.f32 %v2978, %v2991
    %v2993 = vpop.f32.mrf.mxu0
    %v2994 = vadd.f32 %v2980, %v2993
    %2995 = vdwg.mxu0
    %2996 = vmatpush.bf16.msra.mxu0 %v2379
    %2997 = vmatpush.bf16.msra.mxu0 %v2376
    %2998 = vmatpush.bf16.msra.mxu0 %v2373
    %2999 = vmatpush.bf16.msra.mxu0 %v2370
    %3000 = vmatpush.bf16.msra.mxu0 %v2367
    %3001 = vmatpush.bf16.msra.mxu0 %v2364
    %3002 = vmatpush.bf16.msra.mxu0 %v2361
    %3003 = vmatpush.bf16.msra.mxu0 %v2358
    %3004 = vmatmul.bf16.gmra.mxu0 %v747
    %v3005 = vpop.f32.mrf.mxu0
    %v3006 = vadd.f32 %v2992, %v3005
    %v3007 = vpop.f32.mrf.mxu0
    %v3008 = vadd.f32 %v2994, %v3007
    %3009 = vdwg.mxu0
    %3010 = vmatpush.bf16.msra.mxu0 %v2403
    %3011 = vmatpush.bf16.msra.mxu0 %v2400
    %3012 = vmatpush.bf16.msra.mxu0 %v2397
    %3013 = vmatpush.bf16.msra.mxu0 %v2394
    %3014 = vmatpush.bf16.msra.mxu0 %v2391
    %3015 = vmatpush.bf16.msra.mxu0 %v2388
    %3016 = vmatpush.bf16.msra.mxu0 %v2385
    %3017 = vmatpush.bf16.msra.mxu0 %v2382
    %3018 = vmatmul.bf16.gmra.mxu0 %v748
    %v3019 = vpop.f32.mrf.mxu0
    %v3020 = vadd.f32 %v3006, %v3019
    %v3021 = vpop.f32.mrf.mxu0
    %v3022 = vadd.f32 %v3008, %v3021
    %3023 = vdwg.mxu0
    %3024 = vmatpush.bf16.msra.mxu0 %v2427
    %3025 = vmatpush.bf16.msra.mxu0 %v2424
    %3026 = vmatpush.bf16.msra.mxu0 %v2421
    %3027 = vmatpush.bf16.msra.mxu0 %v2418
    %3028 = vmatpush.bf16.msra.mxu0 %v2415
    %3029 = vmatpush.bf16.msra.mxu0 %v2412
    %3030 = vmatpush.bf16.msra.mxu0 %v2409
    %3031 = vmatpush.bf16.msra.mxu0 %v2406
    %3032 = vmatmul.bf16.gmra.mxu0 %v749
    %v3033 = vpop.f32.mrf.mxu0
    %v3034 = vadd.f32 %v3020, %v3033
    %v3035 = vpop.f32.mrf.mxu0
    %v3036 = vadd.f32 %v3022, %v3035
    %3037 = vdwg.mxu0
    %3038 = vmatpush.bf16.msra.mxu0 %v2068
    %3039 = vmatpush.bf16.msra.mxu0 %v2065
    %3040 = vmatpush.bf16.msra.mxu0 %v2062
    %3041 = vmatpush.bf16.msra.mxu0 %v2059
    %3042 = vmatpush.bf16.msra.mxu0 %v2056
    %3043 = vmatpush.bf16.msra.mxu0 %v2053
    %3044 = vmatpush.bf16.msra.mxu0 %v2050
    %3045 = vmatpush.bf16.msra.mxu0 %v2047
    %3046 = vmatmul.bf16.gmra.mxu0 %v734
    %v3047 = vpop.f32.mrf.mxu0
    %v3048 = vadd.f32 %v681, %v3047
    %v3049 = vpop.f32.mrf.mxu0
    %v3050 = vadd.f32 %v681, %v3049
    %3051 = vdwg.mxu0
    %3052 = vmatpush.bf16.msra.mxu0 %v2092
    %3053 = vmatpush.bf16.msra.mxu0 %v2089
    %3054 = vmatpush.bf16.msra.mxu0 %v2086
    %3055 = vmatpush.bf16.msra.mxu0 %v2083
    %3056 = vmatpush.bf16.msra.mxu0 %v2080
    %3057 = vmatpush.bf16.msra.mxu0 %v2077
    %3058 = vmatpush.bf16.msra.mxu0 %v2074
    %3059 = vmatpush.bf16.msra.mxu0 %v2071
    %3060 = vmatmul.bf16.gmra.mxu0 %v735
    %v3061 = vpop.f32.mrf.mxu0
    %v3062 = vadd.f32 %v3048, %v3061
    %v3063 = vpop.f32.mrf.mxu0
    %v3064 = vadd.f32 %v3050, %v3063
    %3065 = vdwg.mxu0
    %3066 = vmatpush.bf16.msra.mxu0 %v2116
    %3067 = vmatpush.bf16.msra.mxu0 %v2113
    %3068 = vmatpush.bf16.msra.mxu0 %v2110
    %3069 = vmatpush.bf16.msra.mxu0 %v2107
    %3070 = vmatpush.bf16.msra.mxu0 %v2104
    %3071 = vmatpush.bf16.msra.mxu0 %v2101
    %3072 = vmatpush.bf16.msra.mxu0 %v2098
    %3073 = vmatpush.bf16.msra.mxu0 %v2095
    %3074 = vmatmul.bf16.gmra.mxu0 %v736
    %v3075 = vpop.f32.mrf.mxu0
    %v3076 = vadd.f32 %v3062, %v3075
    %v3077 = vpop.f32.mrf.mxu0
    %v3078 = vadd.f32 %v3064, %v3077
    %3079 = vdwg.mxu0
    %3080 = vmatpush.bf16.msra.mxu0 %v2140
    %3081 = vmatpush.bf16.msra.mxu0 %v2137
    %3082 = vmatpush.bf16.msra.mxu0 %v2134
    %3083 = vmatpush.bf16.msra.mxu0 %v2131
    %3084 = vmatpush.bf16.msra.mxu0 %v2128
    %3085 = vmatpush.bf16.msra.mxu0 %v2125
    %3086 = vmatpush.bf16.msra.mxu0 %v2122
    %3087 = vmatpush.bf16.msra.mxu0 %v2119
    %3088 = vmatmul.bf16.gmra.mxu0 %v737
    %v3089 = vpop.f32.mrf.mxu0
    %v3090 = vadd.f32 %v3076, %v3089
    %v3091 = vpop.f32.mrf.mxu0
    %v3092 = vadd.f32 %v3078, %v3091
    %3093 = vdwg.mxu0
    %3094 = vmatpush.bf16.msra.mxu0 %v2164
    %3095 = vmatpush.bf16.msra.mxu0 %v2161
    %3096 = vmatpush.bf16.msra.mxu0 %v2158
    %3097 = vmatpush.bf16.msra.mxu0 %v2155
    %3098 = vmatpush.bf16.msra.mxu0 %v2152
    %3099 = vmatpush.bf16.msra.mxu0 %v2149
    %3100 = vmatpush.bf16.msra.mxu0 %v2146
    %3101 = vmatpush.bf16.msra.mxu0 %v2143
    %3102 = vmatmul.bf16.gmra.mxu0 %v738
    %v3103 = vpop.f32.mrf.mxu0
    %v3104 = vadd.f32 %v3090, %v3103
    %v3105 = vpop.f32.mrf.mxu0
    %v3106 = vadd.f32 %v3092, %v3105
    %3107 = vdwg.mxu0
    %3108 = vmatpush.bf16.msra.mxu0 %v2188
    %3109 = vmatpush.bf16.msra.mxu0 %v2185
    %3110 = vmatpush.bf16.msra.mxu0 %v2182
    %3111 = vmatpush.bf16.msra.mxu0 %v2179
    %3112 = vmatpush.bf16.msra.mxu0 %v2176
    %3113 = vmatpush.bf16.msra.mxu0 %v2173
    %3114 = vmatpush.bf16.msra.mxu0 %v2170
    %3115 = vmatpush.bf16.msra.mxu0 %v2167
    %3116 = vmatmul.bf16.gmra.mxu0 %v739
    %v3117 = vpop.f32.mrf.mxu0
    %v3118 = vadd.f32 %v3104, %v3117
    %v3119 = vpop.f32.mrf.mxu0
    %v3120 = vadd.f32 %v3106, %v3119
    %3121 = vdwg.mxu0
    %3122 = vmatpush.bf16.msra.mxu0 %v2212
    %3123 = vmatpush.bf16.msra.mxu0 %v2209
    %3124 = vmatpush.bf16.msra.mxu0 %v2206
    %3125 = vmatpush.bf16.msra.mxu0 %v2203
    %3126 = vmatpush.bf16.msra.mxu0 %v2200
    %3127 = vmatpush.bf16.msra.mxu0 %v2197
    %3128 = vmatpush.bf16.msra.mxu0 %v2194
    %3129 = vmatpush.bf16.msra.mxu0 %v2191
    %3130 = vmatmul.bf16.gmra.mxu0 %v740
    %v3131 = vpop.f32.mrf.mxu0
    %v3132 = vadd.f32 %v3118, %v3131
    %v3133 = vpop.f32.mrf.mxu0
    %v3134 = vadd.f32 %v3120, %v3133
    %3135 = vdwg.mxu0
    %3136 = vmatpush.bf16.msra.mxu0 %v2236
    %3137 = vmatpush.bf16.msra.mxu0 %v2233
    %3138 = vmatpush.bf16.msra.mxu0 %v2230
    %3139 = vmatpush.bf16.msra.mxu0 %v2227
    %3140 = vmatpush.bf16.msra.mxu0 %v2224
    %3141 = vmatpush.bf16.msra.mxu0 %v2221
    %3142 = vmatpush.bf16.msra.mxu0 %v2218
    %3143 = vmatpush.bf16.msra.mxu0 %v2215
    %3144 = vmatmul.bf16.gmra.mxu0 %v741
    %v3145 = vpop.f32.mrf.mxu0
    %v3146 = vadd.f32 %v3132, %v3145
    %v3147 = vpop.f32.mrf.mxu0
    %v3148 = vadd.f32 %v3134, %v3147
    %3149 = vdwg.mxu0
    %3150 = vmatpush.bf16.msra.mxu0 %v2260
    %3151 = vmatpush.bf16.msra.mxu0 %v2257
    %3152 = vmatpush.bf16.msra.mxu0 %v2254
    %3153 = vmatpush.bf16.msra.mxu0 %v2251
    %3154 = vmatpush.bf16.msra.mxu0 %v2248
    %3155 = vmatpush.bf16.msra.mxu0 %v2245
    %3156 = vmatpush.bf16.msra.mxu0 %v2242
    %3157 = vmatpush.bf16.msra.mxu0 %v2239
    %3158 = vmatmul.bf16.gmra.mxu0 %v742
    %v3159 = vpop.f32.mrf.mxu0
    %v3160 = vadd.f32 %v3146, %v3159
    %v3161 = vpop.f32.mrf.mxu0
    %v3162 = vadd.f32 %v3148, %v3161
    %3163 = vdwg.mxu0
    %3164 = vmatpush.bf16.msra.mxu0 %v2284
    %3165 = vmatpush.bf16.msra.mxu0 %v2281
    %3166 = vmatpush.bf16.msra.mxu0 %v2278
    %3167 = vmatpush.bf16.msra.mxu0 %v2275
    %3168 = vmatpush.bf16.msra.mxu0 %v2272
    %3169 = vmatpush.bf16.msra.mxu0 %v2269
    %3170 = vmatpush.bf16.msra.mxu0 %v2266
    %3171 = vmatpush.bf16.msra.mxu0 %v2263
    %3172 = vmatmul.bf16.gmra.mxu0 %v743
    %v3173 = vpop.f32.mrf.mxu0
    %v3174 = vadd.f32 %v3160, %v3173
    %v3175 = vpop.f32.mrf.mxu0
    %v3176 = vadd.f32 %v3162, %v3175
    %3177 = vdwg.mxu0
    %3178 = vmatpush.bf16.msra.mxu0 %v2308
    %3179 = vmatpush.bf16.msra.mxu0 %v2305
    %3180 = vmatpush.bf16.msra.mxu0 %v2302
    %3181 = vmatpush.bf16.msra.mxu0 %v2299
    %3182 = vmatpush.bf16.msra.mxu0 %v2296
    %3183 = vmatpush.bf16.msra.mxu0 %v2293
    %3184 = vmatpush.bf16.msra.mxu0 %v2290
    %3185 = vmatpush.bf16.msra.mxu0 %v2287
    %3186 = vmatmul.bf16.gmra.mxu0 %v744
    %v3187 = vpop.f32.mrf.mxu0
    %v3188 = vadd.f32 %v3174, %v3187
    %v3189 = vpop.f32.mrf.mxu0
    %v3190 = vadd.f32 %v3176, %v3189
    %3191 = vdwg.mxu0
    %3192 = vmatpush.bf16.msra.mxu0 %v2332
    %3193 = vmatpush.bf16.msra.mxu0 %v2329
    %3194 = vmatpush.bf16.msra.mxu0 %v2326
    %3195 = vmatpush.bf16.msra.mxu0 %v2323
    %3196 = vmatpush.bf16.msra.mxu0 %v2320
    %3197 = vmatpush.bf16.msra.mxu0 %v2317
    %3198 = vmatpush.bf16.msra.mxu0 %v2314
    %3199 = vmatpush.bf16.msra.mxu0 %v2311
    %3200 = vmatmul.bf16.gmra.mxu0 %v745
    %v3201 = vpop.f32.mrf.mxu0
    %v3202 = vadd.f32 %v3188, %v3201
    %v3203 = vpop.f32.mrf.mxu0
    %v3204 = vadd.f32 %v3190, %v3203
    %3205 = vdwg.mxu0
    %3206 = vmatpush.bf16.msra.mxu0 %v2356
    %3207 = vmatpush.bf16.msra.mxu0 %v2353
    %3208 = vmatpush.bf16.msra.mxu0 %v2350
    %3209 = vmatpush.bf16.msra.mxu0 %v2347
    %3210 = vmatpush.bf16.msra.mxu0 %v2344
    %3211 = vmatpush.bf16.msra.mxu0 %v2341
    %3212 = vmatpush.bf16.msra.mxu0 %v2338
    %3213 = vmatpush.bf16.msra.mxu0 %v2335
    %3214 = vmatmul.bf16.gmra.mxu0 %v746
    %v3215 = vpop.f32.mrf.mxu0
    %v3216 = vadd.f32 %v3202, %v3215
    %v3217 = vpop.f32.mrf.mxu0
    %v3218 = vadd.f32 %v3204, %v3217
    %3219 = vdwg.mxu0
    %3220 = vmatpush.bf16.msra.mxu0 %v2380
    %3221 = vmatpush.bf16.msra.mxu0 %v2377
    %3222 = vmatpush.bf16.msra.mxu0 %v2374
    %3223 = vmatpush.bf16.msra.mxu0 %v2371
    %3224 = vmatpush.bf16.msra.mxu0 %v2368
    %3225 = vmatpush.bf16.msra.mxu0 %v2365
    %3226 = vmatpush.bf16.msra.mxu0 %v2362
    %3227 = vmatpush.bf16.msra.mxu0 %v2359
    %3228 = vmatmul.bf16.gmra.mxu0 %v747
    %v3229 = vpop.f32.mrf.mxu0
    %v3230 = vadd.f32 %v3216, %v3229
    %v3231 = vpop.f32.mrf.mxu0
    %v3232 = vadd.f32 %v3218, %v3231
    %3233 = vdwg.mxu0
    %3234 = vmatpush.bf16.msra.mxu0 %v2404
    %3235 = vmatpush.bf16.msra.mxu0 %v2401
    %3236 = vmatpush.bf16.msra.mxu0 %v2398
    %3237 = vmatpush.bf16.msra.mxu0 %v2395
    %3238 = vmatpush.bf16.msra.mxu0 %v2392
    %3239 = vmatpush.bf16.msra.mxu0 %v2389
    %3240 = vmatpush.bf16.msra.mxu0 %v2386
    %3241 = vmatpush.bf16.msra.mxu0 %v2383
    %3242 = vmatmul.bf16.gmra.mxu0 %v748
    %v3243 = vpop.f32.mrf.mxu0
    %v3244 = vadd.f32 %v3230, %v3243
    %v3245 = vpop.f32.mrf.mxu0
    %v3246 = vadd.f32 %v3232, %v3245
    %3247 = vdwg.mxu0
    %3248 = vmatpush.bf16.msra.mxu0 %v2428
    %3249 = vmatpush.bf16.msra.mxu0 %v2425
    %3250 = vmatpush.bf16.msra.mxu0 %v2422
    %3251 = vmatpush.bf16.msra.mxu0 %v2419
    %3252 = vmatpush.bf16.msra.mxu0 %v2416
    %3253 = vmatpush.bf16.msra.mxu0 %v2413
    %3254 = vmatpush.bf16.msra.mxu0 %v2410
    %3255 = vmatpush.bf16.msra.mxu0 %v2407
    %3256 = vmatmul.bf16.gmra.mxu0 %v749
    %v3257 = vpop.f32.mrf.mxu0
    %v3258 = vadd.f32 %v3244, %v3257
    %v3259 = vpop.f32.mrf.mxu0
    %v3260 = vadd.f32 %v3246, %v3259
    %3261 = vdwg.mxu0
    %3262 = vmatpush.bf16.msra.mxu0 %v2069
    %3263 = vmatpush.bf16.msra.mxu0 %v2066
    %3264 = vmatpush.bf16.msra.mxu0 %v2063
    %3265 = vmatpush.bf16.msra.mxu0 %v2060
    %3266 = vmatpush.bf16.msra.mxu0 %v2057
    %3267 = vmatpush.bf16.msra.mxu0 %v2054
    %3268 = vmatpush.bf16.msra.mxu0 %v2051
    %3269 = vmatpush.bf16.msra.mxu0 %v2048
    %3270 = vmatmul.bf16.gmra.mxu0 %v734
    %v3271 = vpop.f32.mrf.mxu0
    %v3272 = vadd.f32 %v682, %v3271
    %v3273 = vpop.f32.mrf.mxu0
    %v3274 = vadd.f32 %v682, %v3273
    %3275 = vdwg.mxu0
    %3276 = vmatpush.bf16.msra.mxu0 %v2093
    %3277 = vmatpush.bf16.msra.mxu0 %v2090
    %3278 = vmatpush.bf16.msra.mxu0 %v2087
    %3279 = vmatpush.bf16.msra.mxu0 %v2084
    %3280 = vmatpush.bf16.msra.mxu0 %v2081
    %3281 = vmatpush.bf16.msra.mxu0 %v2078
    %3282 = vmatpush.bf16.msra.mxu0 %v2075
    %3283 = vmatpush.bf16.msra.mxu0 %v2072
    %3284 = vmatmul.bf16.gmra.mxu0 %v735
    %v3285 = vpop.f32.mrf.mxu0
    %v3286 = vadd.f32 %v3272, %v3285
    %v3287 = vpop.f32.mrf.mxu0
    %v3288 = vadd.f32 %v3274, %v3287
    %3289 = vdwg.mxu0
    %3290 = vmatpush.bf16.msra.mxu0 %v2117
    %3291 = vmatpush.bf16.msra.mxu0 %v2114
    %3292 = vmatpush.bf16.msra.mxu0 %v2111
    %3293 = vmatpush.bf16.msra.mxu0 %v2108
    %3294 = vmatpush.bf16.msra.mxu0 %v2105
    %3295 = vmatpush.bf16.msra.mxu0 %v2102
    %3296 = vmatpush.bf16.msra.mxu0 %v2099
    %3297 = vmatpush.bf16.msra.mxu0 %v2096
    %3298 = vmatmul.bf16.gmra.mxu0 %v736
    %v3299 = vpop.f32.mrf.mxu0
    %v3300 = vadd.f32 %v3286, %v3299
    %v3301 = vpop.f32.mrf.mxu0
    %v3302 = vadd.f32 %v3288, %v3301
    %3303 = vdwg.mxu0
    %3304 = vmatpush.bf16.msra.mxu0 %v2141
    %3305 = vmatpush.bf16.msra.mxu0 %v2138
    %3306 = vmatpush.bf16.msra.mxu0 %v2135
    %3307 = vmatpush.bf16.msra.mxu0 %v2132
    %3308 = vmatpush.bf16.msra.mxu0 %v2129
    %3309 = vmatpush.bf16.msra.mxu0 %v2126
    %3310 = vmatpush.bf16.msra.mxu0 %v2123
    %3311 = vmatpush.bf16.msra.mxu0 %v2120
    %3312 = vmatmul.bf16.gmra.mxu0 %v737
    %v3313 = vpop.f32.mrf.mxu0
    %v3314 = vadd.f32 %v3300, %v3313
    %v3315 = vpop.f32.mrf.mxu0
    %v3316 = vadd.f32 %v3302, %v3315
    %3317 = vdwg.mxu0
    %3318 = vmatpush.bf16.msra.mxu0 %v2165
    %3319 = vmatpush.bf16.msra.mxu0 %v2162
    %3320 = vmatpush.bf16.msra.mxu0 %v2159
    %3321 = vmatpush.bf16.msra.mxu0 %v2156
    %3322 = vmatpush.bf16.msra.mxu0 %v2153
    %3323 = vmatpush.bf16.msra.mxu0 %v2150
    %3324 = vmatpush.bf16.msra.mxu0 %v2147
    %3325 = vmatpush.bf16.msra.mxu0 %v2144
    %3326 = vmatmul.bf16.gmra.mxu0 %v738
    %v3327 = vpop.f32.mrf.mxu0
    %v3328 = vadd.f32 %v3314, %v3327
    %v3329 = vpop.f32.mrf.mxu0
    %v3330 = vadd.f32 %v3316, %v3329
    %3331 = vdwg.mxu0
    %3332 = vmatpush.bf16.msra.mxu0 %v2189
    %3333 = vmatpush.bf16.msra.mxu0 %v2186
    %3334 = vmatpush.bf16.msra.mxu0 %v2183
    %3335 = vmatpush.bf16.msra.mxu0 %v2180
    %3336 = vmatpush.bf16.msra.mxu0 %v2177
    %3337 = vmatpush.bf16.msra.mxu0 %v2174
    %3338 = vmatpush.bf16.msra.mxu0 %v2171
    %3339 = vmatpush.bf16.msra.mxu0 %v2168
    %3340 = vmatmul.bf16.gmra.mxu0 %v739
    %v3341 = vpop.f32.mrf.mxu0
    %v3342 = vadd.f32 %v3328, %v3341
    %v3343 = vpop.f32.mrf.mxu0
    %v3344 = vadd.f32 %v3330, %v3343
    %3345 = vdwg.mxu0
    %3346 = vmatpush.bf16.msra.mxu0 %v2213
    %3347 = vmatpush.bf16.msra.mxu0 %v2210
    %3348 = vmatpush.bf16.msra.mxu0 %v2207
    %3349 = vmatpush.bf16.msra.mxu0 %v2204
    %3350 = vmatpush.bf16.msra.mxu0 %v2201
    %3351 = vmatpush.bf16.msra.mxu0 %v2198
    %3352 = vmatpush.bf16.msra.mxu0 %v2195
    %3353 = vmatpush.bf16.msra.mxu0 %v2192
    %3354 = vmatmul.bf16.gmra.mxu0 %v740
    %v3355 = vpop.f32.mrf.mxu0
    %v3356 = vadd.f32 %v3342, %v3355
    %v3357 = vpop.f32.mrf.mxu0
    %v3358 = vadd.f32 %v3344, %v3357
    %3359 = vdwg.mxu0
    %3360 = vmatpush.bf16.msra.mxu0 %v2237
    %3361 = vmatpush.bf16.msra.mxu0 %v2234
    %3362 = vmatpush.bf16.msra.mxu0 %v2231
    %3363 = vmatpush.bf16.msra.mxu0 %v2228
    %3364 = vmatpush.bf16.msra.mxu0 %v2225
    %3365 = vmatpush.bf16.msra.mxu0 %v2222
    %3366 = vmatpush.bf16.msra.mxu0 %v2219
    %3367 = vmatpush.bf16.msra.mxu0 %v2216
    %3368 = vmatmul.bf16.gmra.mxu0 %v741
    %v3369 = vpop.f32.mrf.mxu0
    %v3370 = vadd.f32 %v3356, %v3369
    %v3371 = vpop.f32.mrf.mxu0
    %v3372 = vadd.f32 %v3358, %v3371
    %3373 = vdwg.mxu0
    %3374 = vmatpush.bf16.msra.mxu0 %v2261
    %3375 = vmatpush.bf16.msra.mxu0 %v2258
    %3376 = vmatpush.bf16.msra.mxu0 %v2255
    %3377 = vmatpush.bf16.msra.mxu0 %v2252
    %3378 = vmatpush.bf16.msra.mxu0 %v2249
    %3379 = vmatpush.bf16.msra.mxu0 %v2246
    %3380 = vmatpush.bf16.msra.mxu0 %v2243
    %3381 = vmatpush.bf16.msra.mxu0 %v2240
    %3382 = vmatmul.bf16.gmra.mxu0 %v742
    %v3383 = vpop.f32.mrf.mxu0
    %v3384 = vadd.f32 %v3370, %v3383
    %v3385 = vpop.f32.mrf.mxu0
    %v3386 = vadd.f32 %v3372, %v3385
    %3387 = vdwg.mxu0
    %3388 = vmatpush.bf16.msra.mxu0 %v2285
    %3389 = vmatpush.bf16.msra.mxu0 %v2282
    %3390 = vmatpush.bf16.msra.mxu0 %v2279
    %3391 = vmatpush.bf16.msra.mxu0 %v2276
    %3392 = vmatpush.bf16.msra.mxu0 %v2273
    %3393 = vmatpush.bf16.msra.mxu0 %v2270
    %3394 = vmatpush.bf16.msra.mxu0 %v2267
    %3395 = vmatpush.bf16.msra.mxu0 %v2264
    %3396 = vmatmul.bf16.gmra.mxu0 %v743
    %v3397 = vpop.f32.mrf.mxu0
    %v3398 = vadd.f32 %v3384, %v3397
    %v3399 = vpop.f32.mrf.mxu0
    %v3400 = vadd.f32 %v3386, %v3399
    %3401 = vdwg.mxu0
    %3402 = vmatpush.bf16.msra.mxu0 %v2309
    %3403 = vmatpush.bf16.msra.mxu0 %v2306
    %3404 = vmatpush.bf16.msra.mxu0 %v2303
    %3405 = vmatpush.bf16.msra.mxu0 %v2300
    %3406 = vmatpush.bf16.msra.mxu0 %v2297
    %3407 = vmatpush.bf16.msra.mxu0 %v2294
    %3408 = vmatpush.bf16.msra.mxu0 %v2291
    %3409 = vmatpush.bf16.msra.mxu0 %v2288
    %3410 = vmatmul.bf16.gmra.mxu0 %v744
    %v3411 = vpop.f32.mrf.mxu0
    %v3412 = vadd.f32 %v3398, %v3411
    %v3413 = vpop.f32.mrf.mxu0
    %v3414 = vadd.f32 %v3400, %v3413
    %3415 = vdwg.mxu0
    %3416 = vmatpush.bf16.msra.mxu0 %v2333
    %3417 = vmatpush.bf16.msra.mxu0 %v2330
    %3418 = vmatpush.bf16.msra.mxu0 %v2327
    %3419 = vmatpush.bf16.msra.mxu0 %v2324
    %3420 = vmatpush.bf16.msra.mxu0 %v2321
    %3421 = vmatpush.bf16.msra.mxu0 %v2318
    %3422 = vmatpush.bf16.msra.mxu0 %v2315
    %3423 = vmatpush.bf16.msra.mxu0 %v2312
    %3424 = vmatmul.bf16.gmra.mxu0 %v745
    %v3425 = vpop.f32.mrf.mxu0
    %v3426 = vadd.f32 %v3412, %v3425
    %v3427 = vpop.f32.mrf.mxu0
    %v3428 = vadd.f32 %v3414, %v3427
    %3429 = vdwg.mxu0
    %3430 = vmatpush.bf16.msra.mxu0 %v2357
    %3431 = vmatpush.bf16.msra.mxu0 %v2354
    %3432 = vmatpush.bf16.msra.mxu0 %v2351
    %3433 = vmatpush.bf16.msra.mxu0 %v2348
    %3434 = vmatpush.bf16.msra.mxu0 %v2345
    %3435 = vmatpush.bf16.msra.mxu0 %v2342
    %3436 = vmatpush.bf16.msra.mxu0 %v2339
    %3437 = vmatpush.bf16.msra.mxu0 %v2336
    %3438 = vmatmul.bf16.gmra.mxu0 %v746
    %v3439 = vpop.f32.mrf.mxu0
    %v3440 = vadd.f32 %v3426, %v3439
    %v3441 = vpop.f32.mrf.mxu0
    %v3442 = vadd.f32 %v3428, %v3441
    %3443 = vdwg.mxu0
    %3444 = vmatpush.bf16.msra.mxu0 %v2381
    %3445 = vmatpush.bf16.msra.mxu0 %v2378
    %3446 = vmatpush.bf16.msra.mxu0 %v2375
    %3447 = vmatpush.bf16.msra.mxu0 %v2372
    %3448 = vmatpush.bf16.msra.mxu0 %v2369
    %3449 = vmatpush.bf16.msra.mxu0 %v2366
    %3450 = vmatpush.bf16.msra.mxu0 %v2363
    %3451 = vmatpush.bf16.msra.mxu0 %v2360
    %3452 = vmatmul.bf16.gmra.mxu0 %v747
    %v3453 = vpop.f32.mrf.mxu0
    %v3454 = vadd.f32 %v3440, %v3453
    %v3455 = vpop.f32.mrf.mxu0
    %v3456 = vadd.f32 %v3442, %v3455
    %3457 = vdwg.mxu0
    %3458 = vmatpush.bf16.msra.mxu0 %v2405
    %3459 = vmatpush.bf16.msra.mxu0 %v2402
    %3460 = vmatpush.bf16.msra.mxu0 %v2399
    %3461 = vmatpush.bf16.msra.mxu0 %v2396
    %3462 = vmatpush.bf16.msra.mxu0 %v2393
    %3463 = vmatpush.bf16.msra.mxu0 %v2390
    %3464 = vmatpush.bf16.msra.mxu0 %v2387
    %3465 = vmatpush.bf16.msra.mxu0 %v2384
    %3466 = vmatmul.bf16.gmra.mxu0 %v748
    %v3467 = vpop.f32.mrf.mxu0
    %v3468 = vadd.f32 %v3454, %v3467
    %v3469 = vpop.f32.mrf.mxu0
    %v3470 = vadd.f32 %v3456, %v3469
    %3471 = vdwg.mxu0
    %3472 = vmatpush.bf16.msra.mxu0 %v2429
    %3473 = vmatpush.bf16.msra.mxu0 %v2426
    %3474 = vmatpush.bf16.msra.mxu0 %v2423
    %3475 = vmatpush.bf16.msra.mxu0 %v2420
    %3476 = vmatpush.bf16.msra.mxu0 %v2417
    %3477 = vmatpush.bf16.msra.mxu0 %v2414
    %3478 = vmatpush.bf16.msra.mxu0 %v2411
    %3479 = vmatpush.bf16.msra.mxu0 %v2408
    %3480 = vmatmul.bf16.gmra.mxu0 %v749
    %v3481 = vpop.f32.mrf.mxu0
    %v3482 = vadd.f32 %v3468, %v3481
    %v3483 = vpop.f32.mrf.mxu0
    %v3484 = vadd.f32 %v3470, %v3483
    %3485 = vdwg.mxu0
    %v3486 = vmax.f32 %v3034, 0.0
    %v3487 = vmax.f32 %v3258, 0.0
    %v3488 = vmax.f32 %v3482, 0.0
    %v3489 = vmax.f32 %v3036, 0.0
    %v3490 = vmax.f32 %v3260, 0.0
    %v3491 = vmax.f32 %v3484, 0.0
    %v3492 = vpack.c.bf16 %v3489, %v3486
    %v3493 = vpack.c.bf16 %v3490, %v3487
    %v3494 = vpack.c.bf16 %v3491, %v3488
    %v3495 = vld [vmem:[#allocation8] sm:$0xff]
    %v3496 = vld [vmem:[#allocation8 + $0x8] sm:$0xf]
    %v3497 = vld [vmem:[#allocation8 + $0xc] sm:$0xff]
    %v3498 = vld [vmem:[#allocation8 + $0x14] sm:$0xf]
    %v3499 = vld [vmem:[#allocation8 + $0x18] sm:$0xff]
    %v3500 = vld [vmem:[#allocation8 + $0x20] sm:$0xf]
    %v3501 = vld [vmem:[#allocation8 + $0x24] sm:$0xff]
    %v3502 = vld [vmem:[#allocation8 + $0x2c] sm:$0xf]
    %v3503 = vld [vmem:[#allocation8 + $0x30] sm:$0xff]
    %v3504 = vld [vmem:[#allocation8 + $0x38] sm:$0xf]
    %v3505 = vld [vmem:[#allocation8 + $0x3c] sm:$0xff]
    %v3506 = vld [vmem:[#allocation8 + $0x44] sm:$0xf]
    %v3507 = vld [vmem:[#allocation8 + $0x48] sm:$0xff]
    %v3508 = vld [vmem:[#allocation8 + $0x50] sm:$0xf]
    %v3509 = vld [vmem:[#allocation8 + $0x54] sm:$0xff]
    %v3510 = vld [vmem:[#allocation8 + $0x5c] sm:$0xf]
    %v3511 = vld [vmem:[#allocation8 + $0x60] sm:$0xff]
    %v3512 = vld [vmem:[#allocation8 + $0x68] sm:$0xf]
    %v3513 = vld [vmem:[#allocation8 + $0x6c] sm:$0xff]
    %v3514 = vld [vmem:[#allocation8 + $0x74] sm:$0xf]
    %v3515 = vld [vmem:[#allocation8 + $0x78] sm:$0xff]
    %v3516 = vld [vmem:[#allocation8 + $0x80] sm:$0xf]
    %v3517 = vld [vmem:[#allocation8 + $0x84] sm:$0xff]
    %v3518 = vld [vmem:[#allocation8 + $0x8c] sm:$0xf]
    %v3519 = vld [vmem:[#allocation8 + $0x90] sm:$0xff]
    %v3520 = vld [vmem:[#allocation8 + $0x98] sm:$0xf]
    %v3521 = vld [vmem:[#allocation8 + $0x9c] sm:$0xff]
    %v3522 = vld [vmem:[#allocation8 + $0xa4] sm:$0xf]
    %v3523 = vld [vmem:[#allocation8 + $0xa8] sm:$0xff]
    %v3524 = vld [vmem:[#allocation8 + $0xb0] sm:$0xf]
    %v3525 = vld [vmem:[#allocation8 + $0xb4] sm:$0xff]
    %v3526 = vld [vmem:[#allocation8 + $0xbc] sm:$0xf]
    %v3527 = vld [vmem:[#allocation8 + $0xc0] sm:$0xff]
    %v3528 = vld [vmem:[#allocation8 + $0xc8] sm:$0xf]
    %v3529 = vld [vmem:[#allocation8 + $0xcc] sm:$0xff]
    %v3530 = vld [vmem:[#allocation8 + $0xd4] sm:$0xf]
    %v3531 = vld [vmem:[#allocation8 + $0xd8] sm:$0xff]
    %v3532 = vld [vmem:[#allocation8 + $0xe0] sm:$0xf]
    %v3533 = vld [vmem:[#allocation8 + $0xe4] sm:$0xff]
    %v3534 = vld [vmem:[#allocation8 + $0xec] sm:$0xf]
    %v3535 = vld [vmem:[#allocation8 + $0xf0] sm:$0xff]
    %v3536 = vld [vmem:[#allocation8 + $0xf8] sm:$0xf]
    %v3537 = vld [vmem:[#allocation8 + $0xfc] sm:$0xff]
    %v3538 = vld [vmem:[#allocation8 + $0x104] sm:$0xf]
    %v3539 = vld [vmem:[#allocation8 + $0x108] sm:$0xff]
    %v3540 = vld [vmem:[#allocation8 + $0x110] sm:$0xf]
    %v3541 = vld [vmem:[#allocation8 + $0x114] sm:$0xff]
    %v3542 = vld [vmem:[#allocation8 + $0x11c] sm:$0xf]
    %v3543 = vld [vmem:[#allocation8 + $0x120] sm:$0xff]
    %v3544 = vld [vmem:[#allocation8 + $0x128] sm:$0xf]
    %v3545 = vld [vmem:[#allocation8 + $0x12c] sm:$0xff]
    %v3546 = vld [vmem:[#allocation8 + $0x134] sm:$0xf]
    %v3547 = vld [vmem:[#allocation8 + $0x138] sm:$0xff]
    %v3548 = vld [vmem:[#allocation8 + $0x140] sm:$0xf]
    %v3549 = vld [vmem:[#allocation8 + $0x144] sm:$0xff]
    %v3550 = vld [vmem:[#allocation8 + $0x14c] sm:$0xf]
    %v3551 = vld [vmem:[#allocation8 + $0x150] sm:$0xff]
    %v3552 = vld [vmem:[#allocation8 + $0x158] sm:$0xf]
    %v3553 = vld [vmem:[#allocation8 + $0x15c] sm:$0xff]
    %v3554 = vld [vmem:[#allocation8 + $0x164] sm:$0xf]
    %v3555 = vld [vmem:[#allocation8 + $0x168] sm:$0xff]
    %v3556 = vld [vmem:[#allocation8 + $0x170] sm:$0xf]
    %v3557 = vld [vmem:[#allocation8 + $0x174] sm:$0xff]
    %v3558 = vld [vmem:[#allocation8 + $0x17c] sm:$0xf]
    %v3559 = vld [vmem:[#allocation8 + $0x180] sm:$0xff]
    %v3560 = vld [vmem:[#allocation8 + $0x188] sm:$0xf]
    %v3561 = vld [vmem:[#allocation8 + $0x18c] sm:$0xff]
    %v3562 = vld [vmem:[#allocation8 + $0x194] sm:$0xf]
    %v3563 = vld [vmem:[#allocation8 + $0x198] sm:$0xff]
    %v3564 = vld [vmem:[#allocation8 + $0x1a0] sm:$0xf]
    %v3565 = vld [vmem:[#allocation8 + $0x1a4] sm:$0xff]
    %v3566 = vld [vmem:[#allocation8 + $0x1ac] sm:$0xf]
    %v3567 = vld [vmem:[#allocation8 + $0x1b0] sm:$0xff]
    %v3568 = vld [vmem:[#allocation8 + $0x1b8] sm:$0xf]
    %v3569 = vld [vmem:[#allocation8 + $0x1bc] sm:$0xff]
    %v3570 = vld [vmem:[#allocation8 + $0x1c4] sm:$0xf]
    %v3571 = vld [vmem:[#allocation8 + $0x1c8] sm:$0xff]
    %v3572 = vld [vmem:[#allocation8 + $0x1d0] sm:$0xf]
    %v3573 = vld [vmem:[#allocation8 + $0x1d4] sm:$0xff]
    %v3574 = vld [vmem:[#allocation8 + $0x1dc] sm:$0xf]
    %v3575 = vld [vmem:[#allocation8 + $0x1e0] sm:$0xff]
    %v3576 = vld [vmem:[#allocation8 + $0x1e8] sm:$0xf]
    %v3577 = vld [vmem:[#allocation8 + $0x1ec] sm:$0xff]
    %v3578 = vld [vmem:[#allocation8 + $0x1f4] sm:$0xf]
    %v3579 = vld [vmem:[#allocation8 + $0x1f8] sm:$0xff]
    %v3580 = vld [vmem:[#allocation8 + $0x200] sm:$0xf]
    %v3581 = vld [vmem:[#allocation8 + $0x204] sm:$0xff]
    %v3582 = vld [vmem:[#allocation8 + $0x20c] sm:$0xf]
    %v3583 = vld [vmem:[#allocation8 + $0x210] sm:$0xff]
    %v3584 = vld [vmem:[#allocation8 + $0x218] sm:$0xf]
    %v3585 = vld [vmem:[#allocation8 + $0x21c] sm:$0xff]
    %v3586 = vld [vmem:[#allocation8 + $0x224] sm:$0xf]
    %v3587 = vld [vmem:[#allocation8 + $0x228] sm:$0xff]
    %v3588 = vld [vmem:[#allocation8 + $0x230] sm:$0xf]
    %v3589 = vld [vmem:[#allocation8 + $0x234] sm:$0xff]
    %v3590 = vld [vmem:[#allocation8 + $0x23c] sm:$0xf]
    %v3591 = vld [vmem:[#allocation10] sm:$0x7]
    %v3593 = vperm.slane %v3591, 0
    %v3594 = vperm.slane %v3591, 1
    %v3595 = vperm.slane %v3591, 2
    %v3695 = vunpack.c.l.b16 %v3495
    %v3696 = vunpack.c.h.b16 %v3495
    %v3697 = vunpack.c.l.b16 %v3496
    %v3698 = vunpack.c.l.b16 %v3497
    %v3699 = vunpack.c.h.b16 %v3497
    %v3700 = vunpack.c.l.b16 %v3498
    %v3701 = vunpack.c.l.b16 %v3499
    %v3702 = vunpack.c.h.b16 %v3499
    %v3703 = vunpack.c.l.b16 %v3500
    %v3704 = vunpack.c.l.b16 %v3501
    %v3705 = vunpack.c.h.b16 %v3501
    %v3706 = vunpack.c.l.b16 %v3502
    %v3707 = vunpack.c.l.b16 %v3503
    %v3708 = vunpack.c.h.b16 %v3503
    %v3709 = vunpack.c.l.b16 %v3504
    %v3710 = vunpack.c.l.b16 %v3505
    %v3711 = vunpack.c.h.b16 %v3505
    %v3712 = vunpack.c.l.b16 %v3506
    %v3713 = vunpack.c.l.b16 %v3507
    %v3714 = vunpack.c.h.b16 %v3507
    %v3715 = vunpack.c.l.b16 %v3508
    %v3716 = vunpack.c.l.b16 %v3509
    %v3717 = vunpack.c.h.b16 %v3509
    %v3718 = vunpack.c.l.b16 %v3510
    %v3719 = vunpack.c.l.b16 %v3511
    %v3720 = vunpack.c.h.b16 %v3511
    %v3721 = vunpack.c.l.b16 %v3512
    %v3722 = vunpack.c.l.b16 %v3513
    %v3723 = vunpack.c.h.b16 %v3513
    %v3724 = vunpack.c.l.b16 %v3514
    %v3725 = vunpack.c.l.b16 %v3515
    %v3726 = vunpack.c.h.b16 %v3515
    %v3727 = vunpack.c.l.b16 %v3516
    %v3728 = vunpack.c.l.b16 %v3517
    %v3729 = vunpack.c.h.b16 %v3517
    %v3730 = vunpack.c.l.b16 %v3518
    %v3731 = vunpack.c.l.b16 %v3519
    %v3732 = vunpack.c.h.b16 %v3519
    %v3733 = vunpack.c.l.b16 %v3520
    %v3734 = vunpack.c.l.b16 %v3521
    %v3735 = vunpack.c.h.b16 %v3521
    %v3736 = vunpack.c.l.b16 %v3522
    %v3737 = vunpack.c.l.b16 %v3523
    %v3738 = vunpack.c.h.b16 %v3523
    %v3739 = vunpack.c.l.b16 %v3524
    %v3740 = vunpack.c.l.b16 %v3525
    %v3741 = vunpack.c.h.b16 %v3525
    %v3742 = vunpack.c.l.b16 %v3526
    %v3743 = vunpack.c.l.b16 %v3527
    %v3744 = vunpack.c.h.b16 %v3527
    %v3745 = vunpack.c.l.b16 %v3528
    %v3746 = vunpack.c.l.b16 %v3529
    %v3747 = vunpack.c.h.b16 %v3529
    %v3748 = vunpack.c.l.b16 %v3530
    %v3749 = vunpack.c.l.b16 %v3531
    %v3750 = vunpack.c.h.b16 %v3531
    %v3751 = vunpack.c.l.b16 %v3532
    %v3752 = vunpack.c.l.b16 %v3533
    %v3753 = vunpack.c.h.b16 %v3533
    %v3754 = vunpack.c.l.b16 %v3534
    %v3755 = vunpack.c.l.b16 %v3535
    %v3756 = vunpack.c.h.b16 %v3535
    %v3757 = vunpack.c.l.b16 %v3536
    %v3758 = vunpack.c.l.b16 %v3537
    %v3759 = vunpack.c.h.b16 %v3537
    %v3760 = vunpack.c.l.b16 %v3538
    %v3761 = vunpack.c.l.b16 %v3539
    %v3762 = vunpack.c.h.b16 %v3539
    %v3763 = vunpack.c.l.b16 %v3540
    %v3764 = vunpack.c.l.b16 %v3541
    %v3765 = vunpack.c.h.b16 %v3541
    %v3766 = vunpack.c.l.b16 %v3542
    %v3767 = vunpack.c.l.b16 %v3543
    %v3768 = vunpack.c.h.b16 %v3543
    %v3769 = vunpack.c.l.b16 %v3544
    %v3770 = vunpack.c.l.b16 %v3545
    %v3771 = vunpack.c.h.b16 %v3545
    %v3772 = vunpack.c.l.b16 %v3546
    %v3773 = vunpack.c.l.b16 %v3547
    %v3774 = vunpack.c.h.b16 %v3547
    %v3775 = vunpack.c.l.b16 %v3548
    %v3776 = vunpack.c.l.b16 %v3549
    %v3777 = vunpack.c.h.b16 %v3549
    %v3778 = vunpack.c.l.b16 %v3550
    %v3779 = vunpack.c.l.b16 %v3551
    %v3780 = vunpack.c.h.b16 %v3551
    %v3781 = vunpack.c.l.b16 %v3552
    %v3782 = vunpack.c.l.b16 %v3553
    %v3783 = vunpack.c.h.b16 %v3553
    %v3784 = vunpack.c.l.b16 %v3554
    %v3785 = vunpack.c.l.b16 %v3555
    %v3786 = vunpack.c.h.b16 %v3555
    %v3787 = vunpack.c.l.b16 %v3556
    %v3788 = vunpack.c.l.b16 %v3557
    %v3789 = vunpack.c.h.b16 %v3557
    %v3790 = vunpack.c.l.b16 %v3558
    %v3791 = vunpack.c.l.b16 %v3559
    %v3792 = vunpack.c.h.b16 %v3559
    %v3793 = vunpack.c.l.b16 %v3560
    %v3794 = vunpack.c.l.b16 %v3561
    %v3795 = vunpack.c.h.b16 %v3561
    %v3796 = vunpack.c.l.b16 %v3562
    %v3797 = vunpack.c.l.b16 %v3563
    %v3798 = vunpack.c.h.b16 %v3563
    %v3799 = vunpack.c.l.b16 %v3564
    %v3800 = vunpack.c.l.b16 %v3565
    %v3801 = vunpack.c.h.b16 %v3565
    %v3802 = vunpack.c.l.b16 %v3566
    %v3803 = vunpack.c.l.b16 %v3567
    %v3804 = vunpack.c.h.b16 %v3567
    %v3805 = vunpack.c.l.b16 %v3568
    %v3806 = vunpack.c.l.b16 %v3569
    %v3807 = vunpack.c.h.b16 %v3569
    %v3808 = vunpack.c.l.b16 %v3570
    %v3809 = vunpack.c.l.b16 %v3571
    %v3810 = vunpack.c.h.b16 %v3571
    %v3811 = vunpack.c.l.b16 %v3572
    %v3812 = vunpack.c.l.b16 %v3573
    %v3813 = vunpack.c.h.b16 %v3573
    %v3814 = vunpack.c.l.b16 %v3574
    %v3815 = vunpack.c.l.b16 %v3575
    %v3816 = vunpack.c.h.b16 %v3575
    %v3817 = vunpack.c.l.b16 %v3576
    %v3818 = vunpack.c.l.b16 %v3577
    %v3819 = vunpack.c.h.b16 %v3577
    %v3820 = vunpack.c.l.b16 %v3578
    %v3821 = vunpack.c.l.b16 %v3579
    %v3822 = vunpack.c.h.b16 %v3579
    %v3823 = vunpack.c.l.b16 %v3580
    %v3824 = vunpack.c.l.b16 %v3581
    %v3825 = vunpack.c.h.b16 %v3581
    %v3826 = vunpack.c.l.b16 %v3582
    %v3827 = vunpack.c.l.b16 %v3583
    %v3828 = vunpack.c.h.b16 %v3583
    %v3829 = vunpack.c.l.b16 %v3584
    %v3830 = vunpack.c.l.b16 %v3585
    %v3831 = vunpack.c.h.b16 %v3585
    %v3832 = vunpack.c.l.b16 %v3586
    %v3833 = vunpack.c.l.b16 %v3587
    %v3834 = vunpack.c.h.b16 %v3587
    %v3835 = vunpack.c.l.b16 %v3588
    %v3836 = vunpack.c.l.b16 %v3589
    %v3837 = vunpack.c.h.b16 %v3589
    %v3838 = vunpack.c.l.b16 %v3590
    %v3839 = vpack.c.b16 %v3698, %v3695
    %v3840 = vpack.c.b16 %v3699, %v3696
    %v3841 = vpack.c.b16 %v3700, %v3697
    %v3842 = vpack.c.b16 %v3704, %v3701
    %v3843 = vpack.c.b16 %v3705, %v3702
    %v3844 = vpack.c.b16 %v3706, %v3703
    %v3845 = vpack.c.b16 %v3710, %v3707
    %v3846 = vpack.c.b16 %v3711, %v3708
    %v3847 = vpack.c.b16 %v3712, %v3709
    %v3848 = vpack.c.b16 %v3716, %v3713
    %v3849 = vpack.c.b16 %v3717, %v3714
    %v3850 = vpack.c.b16 %v3718, %v3715
    %v3851 = vpack.c.b16 %v3722, %v3719
    %v3852 = vpack.c.b16 %v3723, %v3720
    %v3853 = vpack.c.b16 %v3724, %v3721
    %v3854 = vpack.c.b16 %v3728, %v3725
    %v3855 = vpack.c.b16 %v3729, %v3726
    %v3856 = vpack.c.b16 %v3730, %v3727
    %v3857 = vpack.c.b16 %v3734, %v3731
    %v3858 = vpack.c.b16 %v3735, %v3732
    %v3859 = vpack.c.b16 %v3736, %v3733
    %v3860 = vpack.c.b16 %v3740, %v3737
    %v3861 = vpack.c.b16 %v3741, %v3738
    %v3862 = vpack.c.b16 %v3742, %v3739
    %v3863 = vpack.c.b16 %v3746, %v3743
    %v3864 = vpack.c.b16 %v3747, %v3744
    %v3865 = vpack.c.b16 %v3748, %v3745
    %v3866 = vpack.c.b16 %v3752, %v3749
    %v3867 = vpack.c.b16 %v3753, %v3750
    %v3868 = vpack.c.b16 %v3754, %v3751
    %v3869 = vpack.c.b16 %v3758, %v3755
    %v3870 = vpack.c.b16 %v3759, %v3756
    %v3871 = vpack.c.b16 %v3760, %v3757
    %v3872 = vpack.c.b16 %v3764, %v3761
    %v3873 = vpack.c.b16 %v3765, %v3762
    %v3874 = vpack.c.b16 %v3766, %v3763
    %v3875 = vpack.c.b16 %v3770, %v3767
    %v3876 = vpack.c.b16 %v3771, %v3768
    %v3877 = vpack.c.b16 %v3772, %v3769
    %v3878 = vpack.c.b16 %v3776, %v3773
    %v3879 = vpack.c.b16 %v3777, %v3774
    %v3880 = vpack.c.b16 %v3778, %v3775
    %v3881 = vpack.c.b16 %v3782, %v3779
    %v3882 = vpack.c.b16 %v3783, %v3780
    %v3883 = vpack.c.b16 %v3784, %v3781
    %v3884 = vpack.c.b16 %v3788, %v3785
    %v3885 = vpack.c.b16 %v3789, %v3786
    %v3886 = vpack.c.b16 %v3790, %v3787
    %v3887 = vpack.c.b16 %v3794, %v3791
    %v3888 = vpack.c.b16 %v3795, %v3792
    %v3889 = vpack.c.b16 %v3796, %v3793
    %v3890 = vpack.c.b16 %v3800, %v3797
    %v3891 = vpack.c.b16 %v3801, %v3798
    %v3892 = vpack.c.b16 %v3802, %v3799
    %v3893 = vpack.c.b16 %v3806, %v3803
    %v3894 = vpack.c.b16 %v3807, %v3804
    %v3895 = vpack.c.b16 %v3808, %v3805
    %v3896 = vpack.c.b16 %v3812, %v3809
    %v3897 = vpack.c.b16 %v3813, %v3810
    %v3898 = vpack.c.b16 %v3814, %v3811
    %v3899 = vpack.c.b16 %v3818, %v3815
    %v3900 = vpack.c.b16 %v3819, %v3816
    %v3901 = vpack.c.b16 %v3820, %v3817
    %v3902 = vpack.c.b16 %v3824, %v3821
    %v3903 = vpack.c.b16 %v3825, %v3822
    %v3904 = vpack.c.b16 %v3826, %v3823
    %v3905 = vpack.c.b16 %v3830, %v3827
    %v3906 = vpack.c.b16 %v3831, %v3828
    %v3907 = vpack.c.b16 %v3832, %v3829
    %v3908 = vpack.c.b16 %v3836, %v3833
    %v3909 = vpack.c.b16 %v3837, %v3834
    %v3910 = vpack.c.b16 %v3838, %v3835
    %3983 = vmatpush.bf16.msra.mxu0 %v3860
    %3984 = vmatpush.bf16.msra.mxu0 %v3857
    %3985 = vmatpush.bf16.msra.mxu0 %v3854
    %3986 = vmatpush.bf16.msra.mxu0 %v3851
    %3987 = vmatpush.bf16.msra.mxu0 %v3848
    %3988 = vmatpush.bf16.msra.mxu0 %v3845
    %3989 = vmatpush.bf16.msra.mxu0 %v3842
    %3990 = vmatpush.bf16.msra.mxu0 %v3839
    %3991 = vmatmul.bf16.gmra.mxu0 %v3492
    %v3992 = vpop.f32.mrf.mxu0
    %v3993 = vadd.f32 %v3593, %v3992
    %v3994 = vpop.f32.mrf.mxu0
    %v3995 = vadd.f32 %v3593, %v3994
    %3996 = vdwg.mxu0
    %3997 = vmatpush.bf16.msra.mxu0 %v3884
    %3998 = vmatpush.bf16.msra.mxu0 %v3881
    %3999 = vmatpush.bf16.msra.mxu0 %v3878
    %4000 = vmatpush.bf16.msra.mxu0 %v3875
    %4001 = vmatpush.bf16.msra.mxu0 %v3872
    %4002 = vmatpush.bf16.msra.mxu0 %v3869
    %4003 = vmatpush.bf16.msra.mxu0 %v3866
    %4004 = vmatpush.bf16.msra.mxu0 %v3863
    %4005 = vmatmul.bf16.gmra.mxu0 %v3493
    %v4006 = vpop.f32.mrf.mxu0
    %v4007 = vadd.f32 %v3993, %v4006
    %v4008 = vpop.f32.mrf.mxu0
    %v4009 = vadd.f32 %v3995, %v4008
    %4010 = vdwg.mxu0
    %4011 = vmatpush.bf16.msra.mxu0 %v3908
    %4012 = vmatpush.bf16.msra.mxu0 %v3905
    %4013 = vmatpush.bf16.msra.mxu0 %v3902
    %4014 = vmatpush.bf16.msra.mxu0 %v3899
    %4015 = vmatpush.bf16.msra.mxu0 %v3896
    %4016 = vmatpush.bf16.msra.mxu0 %v3893
    %4017 = vmatpush.bf16.msra.mxu0 %v3890
    %4018 = vmatpush.bf16.msra.mxu0 %v3887
    %4019 = vmatmul.bf16.gmra.mxu0 %v3494
    %v4020 = vpop.f32.mrf.mxu0
    %v4021 = vadd.f32 %v4007, %v4020
    %v4022 = vpop.f32.mrf.mxu0
    %v4023 = vadd.f32 %v4009, %v4022
    %4024 = vdwg.mxu0
    %4025 = vmatpush.bf16.msra.mxu0 %v3861
    %4026 = vmatpush.bf16.msra.mxu0 %v3858
    %4027 = vmatpush.bf16.msra.mxu0 %v3855
    %4028 = vmatpush.bf16.msra.mxu0 %v3852
    %4029 = vmatpush.bf16.msra.mxu0 %v3849
    %4030 = vmatpush.bf16.msra.mxu0 %v3846
    %4031 = vmatpush.bf16.msra.mxu0 %v3843
    %4032 = vmatpush.bf16.msra.mxu0 %v3840
    %4033 = vmatmul.bf16.gmra.mxu0 %v3492
    %v4034 = vpop.f32.mrf.mxu0
    %v4035 = vadd.f32 %v3594, %v4034
    %v4036 = vpop.f32.mrf.mxu0
    %v4037 = vadd.f32 %v3594, %v4036
    %4038 = vdwg.mxu0
    %4039 = vmatpush.bf16.msra.mxu0 %v3885
    %4040 = vmatpush.bf16.msra.mxu0 %v3882
    %4041 = vmatpush.bf16.msra.mxu0 %v3879
    %4042 = vmatpush.bf16.msra.mxu0 %v3876
    %4043 = vmatpush.bf16.msra.mxu0 %v3873
    %4044 = vmatpush.bf16.msra.mxu0 %v3870
    %4045 = vmatpush.bf16.msra.mxu0 %v3867
    %4046 = vmatpush.bf16.msra.mxu0 %v3864
    %4047 = vmatmul.bf16.gmra.mxu0 %v3493
    %v4048 = vpop.f32.mrf.mxu0
    %v4049 = vadd.f32 %v4035, %v4048
    %v4050 = vpop.f32.mrf.mxu0
    %v4051 = vadd.f32 %v4037, %v4050
    %4052 = vdwg.mxu0
    %4053 = vmatpush.bf16.msra.mxu0 %v3909
    %4054 = vmatpush.bf16.msra.mxu0 %v3906
    %4055 = vmatpush.bf16.msra.mxu0 %v3903
    %4056 = vmatpush.bf16.msra.mxu0 %v3900
    %4057 = vmatpush.bf16.msra.mxu0 %v3897
    %4058 = vmatpush.bf16.msra.mxu0 %v3894
    %4059 = vmatpush.bf16.msra.mxu0 %v3891
    %4060 = vmatpush.bf16.msra.mxu0 %v3888
    %4061 = vmatmul.bf16.gmra.mxu0 %v3494
    %v4062 = vpop.f32.mrf.mxu0
    %v4063 = vadd.f32 %v4049, %v4062
    %v4064 = vpop.f32.mrf.mxu0
    %v4065 = vadd.f32 %v4051, %v4064
    %4066 = vdwg.mxu0
    %4067 = vmatpush.bf16.msra.mxu0 %v3862
    %4068 = vmatpush.bf16.msra.mxu0 %v3859
    %4069 = vmatpush.bf16.msra.mxu0 %v3856
    %4070 = vmatpush.bf16.msra.mxu0 %v3853
    %4071 = vmatpush.bf16.msra.mxu0 %v3850
    %4072 = vmatpush.bf16.msra.mxu0 %v3847
    %4073 = vmatpush.bf16.msra.mxu0 %v3844
    %4074 = vmatpush.bf16.msra.mxu0 %v3841
    %4075 = vmatmul.bf16.gmra.mxu0 %v3492
    %v4076 = vpop.f32.mrf.mxu0
    %v4077 = vadd.f32 %v3595, %v4076
    %v4078 = vpop.f32.mrf.mxu0
    %v4079 = vadd.f32 %v3595, %v4078
    %4080 = vdwg.mxu0
    %4081 = vmatpush.bf16.msra.mxu0 %v3886
    %4082 = vmatpush.bf16.msra.mxu0 %v3883
    %4083 = vmatpush.bf16.msra.mxu0 %v3880
    %4084 = vmatpush.bf16.msra.mxu0 %v3877
    %4085 = vmatpush.bf16.msra.mxu0 %v3874
    %4086 = vmatpush.bf16.msra.mxu0 %v3871
    %4087 = vmatpush.bf16.msra.mxu0 %v3868
    %4088 = vmatpush.bf16.msra.mxu0 %v3865
    %4089 = vmatmul.bf16.gmra.mxu0 %v3493
    %v4090 = vpop.f32.mrf.mxu0
    %v4091 = vadd.f32 %v4077, %v4090
    %v4092 = vpop.f32.mrf.mxu0
    %v4093 = vadd.f32 %v4079, %v4092
    %4094 = vdwg.mxu0
    %4095 = vmatpush.bf16.msra.mxu0 %v3910
    %4096 = vmatpush.bf16.msra.mxu0 %v3907
    %4097 = vmatpush.bf16.msra.mxu0 %v3904
    %4098 = vmatpush.bf16.msra.mxu0 %v3901
    %4099 = vmatpush.bf16.msra.mxu0 %v3898
    %4100 = vmatpush.bf16.msra.mxu0 %v3895
    %4101 = vmatpush.bf16.msra.mxu0 %v3892
    %4102 = vmatpush.bf16.msra.mxu0 %v3889
    %4103 = vmatmul.bf16.gmra.mxu0 %v3494
    %v4104 = vpop.f32.mrf.mxu0
    %v4105 = vadd.f32 %v4091, %v4104
    %v4106 = vpop.f32.mrf.mxu0
    %v4107 = vadd.f32 %v4093, %v4106
    %4108 = vdwg.mxu0
    %v4109 = vmax.f32 %v4021, 0.0
    %v4110 = vmax.f32 %v4063, 0.0
    %v4111 = vmax.f32 %v4105, 0.0
    %v4112 = vmax.f32 %v4023, 0.0
    %v4113 = vmax.f32 %v4065, 0.0
    %v4114 = vmax.f32 %v4107, 0.0
    %v4115 = vld [vmem:[#allocation11] sm:$0xff]
    %v4116 = vld [vmem:[#allocation11 + $0x8] sm:$0xf]
    %v4117 = vld [vmem:[#allocation11 + $0xc] sm:$0xff]
    %v4118 = vld [vmem:[#allocation11 + $0x14] sm:$0xf]
    %v4119 = vld [vmem:[#allocation11 + $0x18] sm:$0xff]
    %v4120 = vld [vmem:[#allocation11 + $0x20] sm:$0xf]
    %v4121 = vld [vmem:[#allocation11 + $0x24] sm:$0xff]
    %v4122 = vld [vmem:[#allocation11 + $0x2c] sm:$0xf]
    %v4123 = vld [vmem:[#allocation11 + $0x30] sm:$0xff]
    %v4124 = vld [vmem:[#allocation11 + $0x38] sm:$0xf]
    %v4125 = vld [vmem:[#allocation11 + $0x3c] sm:$0xff]
    %v4126 = vld [vmem:[#allocation11 + $0x44] sm:$0xf]
    %v4127 = vld [vmem:[#allocation11 + $0x48] sm:$0xff]
    %v4128 = vld [vmem:[#allocation11 + $0x50] sm:$0xf]
    %v4129 = vld [vmem:[#allocation11 + $0x54] sm:$0xff]
    %v4130 = vld [vmem:[#allocation11 + $0x5c] sm:$0xf]
    %v4131 = vld [vmem:[#allocation11 + $0x60] sm:$0xff]
    %v4132 = vld [vmem:[#allocation11 + $0x68] sm:$0xf]
    %v4133 = vld [vmem:[#allocation11 + $0x6c] sm:$0xff]
    %v4134 = vld [vmem:[#allocation11 + $0x74] sm:$0xf]
    %v4135 = vld [vmem:[#allocation11 + $0x78] sm:$0xff]
    %v4136 = vld [vmem:[#allocation11 + $0x80] sm:$0xf]
    %v4137 = vld [vmem:[#allocation11 + $0x84] sm:$0xff]
    %v4138 = vld [vmem:[#allocation11 + $0x8c] sm:$0xf]
    %v4139 = vld [vmem:[#allocation11 + $0x90] sm:$0xff]
    %v4140 = vld [vmem:[#allocation11 + $0x98] sm:$0xf]
    %v4141 = vld [vmem:[#allocation11 + $0x9c] sm:$0xff]
    %v4142 = vld [vmem:[#allocation11 + $0xa4] sm:$0xf]
    %v4143 = vld [vmem:[#allocation11 + $0xa8] sm:$0xff]
    %v4144 = vld [vmem:[#allocation11 + $0xb0] sm:$0xf]
    %v4145 = vld [vmem:[#allocation11 + $0xb4] sm:$0xff]
    %v4146 = vld [vmem:[#allocation11 + $0xbc] sm:$0xf]
    %v4147 = vld [vmem:[#allocation11 + $0xc0] sm:$0xff]
    %v4148 = vld [vmem:[#allocation11 + $0xc8] sm:$0xf]
    %v4149 = vld [vmem:[#allocation11 + $0xcc] sm:$0xff]
    %v4150 = vld [vmem:[#allocation11 + $0xd4] sm:$0xf]
    %v4151 = vld [vmem:[#allocation11 + $0xd8] sm:$0xff]
    %v4152 = vld [vmem:[#allocation11 + $0xe0] sm:$0xf]
    %v4153 = vld [vmem:[#allocation11 + $0xe4] sm:$0xff]
    %v4154 = vld [vmem:[#allocation11 + $0xec] sm:$0xf]
    %v4155 = vld [vmem:[#allocation11 + $0xf0] sm:$0xff]
    %v4156 = vld [vmem:[#allocation11 + $0xf8] sm:$0xf]
    %v4157 = vld [vmem:[#allocation11 + $0xfc] sm:$0xff]
    %v4158 = vld [vmem:[#allocation11 + $0x104] sm:$0xf]
    %v4159 = vld [vmem:[#allocation11 + $0x108] sm:$0xff]
    %v4160 = vld [vmem:[#allocation11 + $0x110] sm:$0xf]
    %v4161 = vld [vmem:[#allocation11 + $0x114] sm:$0xff]
    %v4162 = vld [vmem:[#allocation11 + $0x11c] sm:$0xf]
    %v4163 = vld [vmem:[#allocation11 + $0x120] sm:$0xff]
    %v4164 = vld [vmem:[#allocation11 + $0x128] sm:$0xf]
    %v4165 = vld [vmem:[#allocation11 + $0x12c] sm:$0xff]
    %v4166 = vld [vmem:[#allocation11 + $0x134] sm:$0xf]
    %v4167 = vld [vmem:[#allocation11 + $0x138] sm:$0xff]
    %v4168 = vld [vmem:[#allocation11 + $0x140] sm:$0xf]
    %v4169 = vld [vmem:[#allocation11 + $0x144] sm:$0xff]
    %v4170 = vld [vmem:[#allocation11 + $0x14c] sm:$0xf]
    %v4171 = vld [vmem:[#allocation11 + $0x150] sm:$0xff]
    %v4172 = vld [vmem:[#allocation11 + $0x158] sm:$0xf]
    %v4173 = vld [vmem:[#allocation11 + $0x15c] sm:$0xff]
    %v4174 = vld [vmem:[#allocation11 + $0x164] sm:$0xf]
    %v4175 = vld [vmem:[#allocation11 + $0x168] sm:$0xff]
    %v4176 = vld [vmem:[#allocation11 + $0x170] sm:$0xf]
    %v4177 = vld [vmem:[#allocation11 + $0x174] sm:$0xff]
    %v4178 = vld [vmem:[#allocation11 + $0x17c] sm:$0xf]
    %v4179 = vld [vmem:[#allocation11 + $0x180] sm:$0xff]
    %v4180 = vld [vmem:[#allocation11 + $0x188] sm:$0xf]
    %v4181 = vld [vmem:[#allocation11 + $0x18c] sm:$0xff]
    %v4182 = vld [vmem:[#allocation11 + $0x194] sm:$0xf]
    %v4183 = vld [vmem:[#allocation11 + $0x198] sm:$0xff]
    %v4184 = vld [vmem:[#allocation11 + $0x1a0] sm:$0xf]
    %v4185 = vld [vmem:[#allocation11 + $0x1a4] sm:$0xff]
    %v4186 = vld [vmem:[#allocation11 + $0x1ac] sm:$0xf]
    %v4187 = vld [vmem:[#allocation11 + $0x1b0] sm:$0xff]
    %v4188 = vld [vmem:[#allocation11 + $0x1b8] sm:$0xf]
    %v4189 = vld [vmem:[#allocation11 + $0x1bc] sm:$0xff]
    %v4190 = vld [vmem:[#allocation11 + $0x1c4] sm:$0xf]
    %v4191 = vld [vmem:[#allocation11 + $0x1c8] sm:$0xff]
    %v4192 = vld [vmem:[#allocation11 + $0x1d0] sm:$0xf]
    %v4193 = vld [vmem:[#allocation11 + $0x1d4] sm:$0xff]
    %v4194 = vld [vmem:[#allocation11 + $0x1dc] sm:$0xf]
    %v4195 = vld [vmem:[#allocation11 + $0x1e0] sm:$0xff]
    %v4196 = vld [vmem:[#allocation11 + $0x1e8] sm:$0xf]
    %v4197 = vld [vmem:[#allocation11 + $0x1ec] sm:$0xff]
    %v4198 = vld [vmem:[#allocation11 + $0x1f4] sm:$0xf]
    %v4199 = vld [vmem:[#allocation11 + $0x1f8] sm:$0xff]
    %v4200 = vld [vmem:[#allocation11 + $0x200] sm:$0xf]
    %v4201 = vld [vmem:[#allocation11 + $0x204] sm:$0xff]
    %v4202 = vld [vmem:[#allocation11 + $0x20c] sm:$0xf]
    %v4203 = vld [vmem:[#allocation11 + $0x210] sm:$0xff]
    %v4204 = vld [vmem:[#allocation11 + $0x218] sm:$0xf]
    %v4205 = vld [vmem:[#allocation11 + $0x21c] sm:$0xff]
    %v4206 = vld [vmem:[#allocation11 + $0x224] sm:$0xf]
    %v4207 = vld [vmem:[#allocation11 + $0x228] sm:$0xff]
    %v4208 = vld [vmem:[#allocation11 + $0x230] sm:$0xf]
    %v4209 = vld [vmem:[#allocation11 + $0x234] sm:$0xff]
    %v4210 = vld [vmem:[#allocation11 + $0x23c] sm:$0xf]
    %v4211 = vld [vmem:[#allocation13] sm:$0x7]
    %v4213 = vperm.slane %v4211, 0
    %v4214 = vperm.slane %v4211, 1
    %v4215 = vperm.slane %v4211, 2
    %v4315 = vunpack.c.l.b16 %v4115
    %v4316 = vunpack.c.h.b16 %v4115
    %v4317 = vunpack.c.l.b16 %v4116
    %v4318 = vunpack.c.l.b16 %v4117
    %v4319 = vunpack.c.h.b16 %v4117
    %v4320 = vunpack.c.l.b16 %v4118
    %v4321 = vunpack.c.l.b16 %v4119
    %v4322 = vunpack.c.h.b16 %v4119
    %v4323 = vunpack.c.l.b16 %v4120
    %v4324 = vunpack.c.l.b16 %v4121
    %v4325 = vunpack.c.h.b16 %v4121
    %v4326 = vunpack.c.l.b16 %v4122
    %v4327 = vunpack.c.l.b16 %v4123
    %v4328 = vunpack.c.h.b16 %v4123
    %v4329 = vunpack.c.l.b16 %v4124
    %v4330 = vunpack.c.l.b16 %v4125
    %v4331 = vunpack.c.h.b16 %v4125
    %v4332 = vunpack.c.l.b16 %v4126
    %v4333 = vunpack.c.l.b16 %v4127
    %v4334 = vunpack.c.h.b16 %v4127
    %v4335 = vunpack.c.l.b16 %v4128
    %v4336 = vunpack.c.l.b16 %v4129
    %v4337 = vunpack.c.h.b16 %v4129
    %v4338 = vunpack.c.l.b16 %v4130
    %v4339 = vunpack.c.l.b16 %v4131
    %v4340 = vunpack.c.h.b16 %v4131
    %v4341 = vunpack.c.l.b16 %v4132
    %v4342 = vunpack.c.l.b16 %v4133
    %v4343 = vunpack.c.h.b16 %v4133
    %v4344 = vunpack.c.l.b16 %v4134
    %v4345 = vunpack.c.l.b16 %v4135
    %v4346 = vunpack.c.h.b16 %v4135
    %v4347 = vunpack.c.l.b16 %v4136
    %v4348 = vunpack.c.l.b16 %v4137
    %v4349 = vunpack.c.h.b16 %v4137
    %v4350 = vunpack.c.l.b16 %v4138
    %v4351 = vunpack.c.l.b16 %v4139
    %v4352 = vunpack.c.h.b16 %v4139
    %v4353 = vunpack.c.l.b16 %v4140
    %v4354 = vunpack.c.l.b16 %v4141
    %v4355 = vunpack.c.h.b16 %v4141
    %v4356 = vunpack.c.l.b16 %v4142
    %v4357 = vunpack.c.l.b16 %v4143
    %v4358 = vunpack.c.h.b16 %v4143
    %v4359 = vunpack.c.l.b16 %v4144
    %v4360 = vunpack.c.l.b16 %v4145
    %v4361 = vunpack.c.h.b16 %v4145
    %v4362 = vunpack.c.l.b16 %v4146
    %v4363 = vunpack.c.l.b16 %v4147
    %v4364 = vunpack.c.h.b16 %v4147
    %v4365 = vunpack.c.l.b16 %v4148
    %v4366 = vunpack.c.l.b16 %v4149
    %v4367 = vunpack.c.h.b16 %v4149
    %v4368 = vunpack.c.l.b16 %v4150
    %v4369 = vunpack.c.l.b16 %v4151
    %v4370 = vunpack.c.h.b16 %v4151
    %v4371 = vunpack.c.l.b16 %v4152
    %v4372 = vunpack.c.l.b16 %v4153
    %v4373 = vunpack.c.h.b16 %v4153
    %v4374 = vunpack.c.l.b16 %v4154
    %v4375 = vunpack.c.l.b16 %v4155
    %v4376 = vunpack.c.h.b16 %v4155
    %v4377 = vunpack.c.l.b16 %v4156
    %v4378 = vunpack.c.l.b16 %v4157
    %v4379 = vunpack.c.h.b16 %v4157
    %v4380 = vunpack.c.l.b16 %v4158
    %v4381 = vunpack.c.l.b16 %v4159
    %v4382 = vunpack.c.h.b16 %v4159
    %v4383 = vunpack.c.l.b16 %v4160
    %v4384 = vunpack.c.l.b16 %v4161
    %v4385 = vunpack.c.h.b16 %v4161
    %v4386 = vunpack.c.l.b16 %v4162
    %v4387 = vunpack.c.l.b16 %v4163
    %v4388 = vunpack.c.h.b16 %v4163
    %v4389 = vunpack.c.l.b16 %v4164
    %v4390 = vunpack.c.l.b16 %v4165
    %v4391 = vunpack.c.h.b16 %v4165
    %v4392 = vunpack.c.l.b16 %v4166
    %v4393 = vunpack.c.l.b16 %v4167
    %v4394 = vunpack.c.h.b16 %v4167
    %v4395 = vunpack.c.l.b16 %v4168
    %v4396 = vunpack.c.l.b16 %v4169
    %v4397 = vunpack.c.h.b16 %v4169
    %v4398 = vunpack.c.l.b16 %v4170
    %v4399 = vunpack.c.l.b16 %v4171
    %v4400 = vunpack.c.h.b16 %v4171
    %v4401 = vunpack.c.l.b16 %v4172
    %v4402 = vunpack.c.l.b16 %v4173
    %v4403 = vunpack.c.h.b16 %v4173
    %v4404 = vunpack.c.l.b16 %v4174
    %v4405 = vunpack.c.l.b16 %v4175
    %v4406 = vunpack.c.h.b16 %v4175
    %v4407 = vunpack.c.l.b16 %v4176
    %v4408 = vunpack.c.l.b16 %v4177
    %v4409 = vunpack.c.h.b16 %v4177
    %v4410 = vunpack.c.l.b16 %v4178
    %v4411 = vunpack.c.l.b16 %v4179
    %v4412 = vunpack.c.h.b16 %v4179
    %v4413 = vunpack.c.l.b16 %v4180
    %v4414 = vunpack.c.l.b16 %v4181
    %v4415 = vunpack.c.h.b16 %v4181
    %v4416 = vunpack.c.l.b16 %v4182
    %v4417 = vunpack.c.l.b16 %v4183
    %v4418 = vunpack.c.h.b16 %v4183
    %v4419 = vunpack.c.l.b16 %v4184
    %v4420 = vunpack.c.l.b16 %v4185
    %v4421 = vunpack.c.h.b16 %v4185
    %v4422 = vunpack.c.l.b16 %v4186
    %v4423 = vunpack.c.l.b16 %v4187
    %v4424 = vunpack.c.h.b16 %v4187
    %v4425 = vunpack.c.l.b16 %v4188
    %v4426 = vunpack.c.l.b16 %v4189
    %v4427 = vunpack.c.h.b16 %v4189
    %v4428 = vunpack.c.l.b16 %v4190
    %v4429 = vunpack.c.l.b16 %v4191
    %v4430 = vunpack.c.h.b16 %v4191
    %v4431 = vunpack.c.l.b16 %v4192
    %v4432 = vunpack.c.l.b16 %v4193
    %v4433 = vunpack.c.h.b16 %v4193
    %v4434 = vunpack.c.l.b16 %v4194
    %v4435 = vunpack.c.l.b16 %v4195
    %v4436 = vunpack.c.h.b16 %v4195
    %v4437 = vunpack.c.l.b16 %v4196
    %v4438 = vunpack.c.l.b16 %v4197
    %v4439 = vunpack.c.h.b16 %v4197
    %v4440 = vunpack.c.l.b16 %v4198
    %v4441 = vunpack.c.l.b16 %v4199
    %v4442 = vunpack.c.h.b16 %v4199
    %v4443 = vunpack.c.l.b16 %v4200
    %v4444 = vunpack.c.l.b16 %v4201
    %v4445 = vunpack.c.h.b16 %v4201
    %v4446 = vunpack.c.l.b16 %v4202
    %v4447 = vunpack.c.l.b16 %v4203
    %v4448 = vunpack.c.h.b16 %v4203
    %v4449 = vunpack.c.l.b16 %v4204
    %v4450 = vunpack.c.l.b16 %v4205
    %v4451 = vunpack.c.h.b16 %v4205
    %v4452 = vunpack.c.l.b16 %v4206
    %v4453 = vunpack.c.l.b16 %v4207
    %v4454 = vunpack.c.h.b16 %v4207
    %v4455 = vunpack.c.l.b16 %v4208
    %v4456 = vunpack.c.l.b16 %v4209
    %v4457 = vunpack.c.h.b16 %v4209
    %v4458 = vunpack.c.l.b16 %v4210
    %v4459 = vpack.c.b16 %v4318, %v4315
    %v4460 = vpack.c.b16 %v4319, %v4316
    %v4461 = vpack.c.b16 %v4320, %v4317
    %v4462 = vpack.c.b16 %v4324, %v4321
    %v4463 = vpack.c.b16 %v4325, %v4322
    %v4464 = vpack.c.b16 %v4326, %v4323
    %v4465 = vpack.c.b16 %v4330, %v4327
    %v4466 = vpack.c.b16 %v4331, %v4328
    %v4467 = vpack.c.b16 %v4332, %v4329
    %v4468 = vpack.c.b16 %v4336, %v4333
    %v4469 = vpack.c.b16 %v4337, %v4334
    %v4470 = vpack.c.b16 %v4338, %v4335
    %v4471 = vpack.c.b16 %v4342, %v4339
    %v4472 = vpack.c.b16 %v4343, %v4340
    %v4473 = vpack.c.b16 %v4344, %v4341
    %v4474 = vpack.c.b16 %v4348, %v4345
    %v4475 = vpack.c.b16 %v4349, %v4346
    %v4476 = vpack.c.b16 %v4350, %v4347
    %v4477 = vpack.c.b16 %v4354, %v4351
    %v4478 = vpack.c.b16 %v4355, %v4352
    %v4479 = vpack.c.b16 %v4356, %v4353
    %v4480 = vpack.c.b16 %v4360, %v4357
    %v4481 = vpack.c.b16 %v4361, %v4358
    %v4482 = vpack.c.b16 %v4362, %v4359
    %v4483 = vpack.c.b16 %v4366, %v4363
    %v4484 = vpack.c.b16 %v4367, %v4364
    %v4485 = vpack.c.b16 %v4368, %v4365
    %v4486 = vpack.c.b16 %v4372, %v4369
    %v4487 = vpack.c.b16 %v4373, %v4370
    %v4488 = vpack.c.b16 %v4374, %v4371
    %v4489 = vpack.c.b16 %v4378, %v4375
    %v4490 = vpack.c.b16 %v4379, %v4376
    %v4491 = vpack.c.b16 %v4380, %v4377
    %v4492 = vpack.c.b16 %v4384, %v4381
    %v4493 = vpack.c.b16 %v4385, %v4382
    %v4494 = vpack.c.b16 %v4386, %v4383
    %v4495 = vpack.c.b16 %v4390, %v4387
    %v4496 = vpack.c.b16 %v4391, %v4388
    %v4497 = vpack.c.b16 %v4392, %v4389
    %v4498 = vpack.c.b16 %v4396, %v4393
    %v4499 = vpack.c.b16 %v4397, %v4394
    %v4500 = vpack.c.b16 %v4398, %v4395
    %v4501 = vpack.c.b16 %v4402, %v4399
    %v4502 = vpack.c.b16 %v4403, %v4400
    %v4503 = vpack.c.b16 %v4404, %v4401
    %v4504 = vpack.c.b16 %v4408, %v4405
    %v4505 = vpack.c.b16 %v4409, %v4406
    %v4506 = vpack.c.b16 %v4410, %v4407
    %v4507 = vpack.c.b16 %v4414, %v4411
    %v4508 = vpack.c.b16 %v4415, %v4412
    %v4509 = vpack.c.b16 %v4416, %v4413
    %v4510 = vpack.c.b16 %v4420, %v4417
    %v4511 = vpack.c.b16 %v4421, %v4418
    %v4512 = vpack.c.b16 %v4422, %v4419
    %v4513 = vpack.c.b16 %v4426, %v4423
    %v4514 = vpack.c.b16 %v4427, %v4424
    %v4515 = vpack.c.b16 %v4428, %v4425
    %v4516 = vpack.c.b16 %v4432, %v4429
    %v4517 = vpack.c.b16 %v4433, %v4430
    %v4518 = vpack.c.b16 %v4434, %v4431
    %v4519 = vpack.c.b16 %v4438, %v4435
    %v4520 = vpack.c.b16 %v4439, %v4436
    %v4521 = vpack.c.b16 %v4440, %v4437
    %v4522 = vpack.c.b16 %v4444, %v4441
    %v4523 = vpack.c.b16 %v4445, %v4442
    %v4524 = vpack.c.b16 %v4446, %v4443
    %v4525 = vpack.c.b16 %v4450, %v4447
    %v4526 = vpack.c.b16 %v4451, %v4448
    %v4527 = vpack.c.b16 %v4452, %v4449
    %v4528 = vpack.c.b16 %v4456, %v4453
    %v4529 = vpack.c.b16 %v4457, %v4454
    %v4530 = vpack.c.b16 %v4458, %v4455
    %4603 = vmatpush.bf16.msra.mxu0 %v4480
    %4604 = vmatpush.bf16.msra.mxu0 %v4477
    %4605 = vmatpush.bf16.msra.mxu0 %v4474
    %4606 = vmatpush.bf16.msra.mxu0 %v4471
    %4607 = vmatpush.bf16.msra.mxu0 %v4468
    %4608 = vmatpush.bf16.msra.mxu0 %v4465
    %4609 = vmatpush.bf16.msra.mxu0 %v4462
    %4610 = vmatpush.bf16.msra.mxu0 %v4459
    %4611 = vmatmul.bf16.gmra.mxu0 %v3492
    %v4612 = vpop.f32.mrf.mxu0
    %v4613 = vadd.f32 %v4213, %v4612
    %v4614 = vpop.f32.mrf.mxu0
    %v4615 = vadd.f32 %v4213, %v4614
    %4616 = vdwg.mxu0
    %4617 = vmatpush.bf16.msra.mxu0 %v4504
    %4618 = vmatpush.bf16.msra.mxu0 %v4501
    %4619 = vmatpush.bf16.msra.mxu0 %v4498
    %4620 = vmatpush.bf16.msra.mxu0 %v4495
    %4621 = vmatpush.bf16.msra.mxu0 %v4492
    %4622 = vmatpush.bf16.msra.mxu0 %v4489
    %4623 = vmatpush.bf16.msra.mxu0 %v4486
    %4624 = vmatpush.bf16.msra.mxu0 %v4483
    %4625 = vmatmul.bf16.gmra.mxu0 %v3493
    %v4626 = vpop.f32.mrf.mxu0
    %v4627 = vadd.f32 %v4613, %v4626
    %v4628 = vpop.f32.mrf.mxu0
    %v4629 = vadd.f32 %v4615, %v4628
    %4630 = vdwg.mxu0
    %4631 = vmatpush.bf16.msra.mxu0 %v4528
    %4632 = vmatpush.bf16.msra.mxu0 %v4525
    %4633 = vmatpush.bf16.msra.mxu0 %v4522
    %4634 = vmatpush.bf16.msra.mxu0 %v4519
    %4635 = vmatpush.bf16.msra.mxu0 %v4516
    %4636 = vmatpush.bf16.msra.mxu0 %v4513
    %4637 = vmatpush.bf16.msra.mxu0 %v4510
    %4638 = vmatpush.bf16.msra.mxu0 %v4507
    %4639 = vmatmul.bf16.gmra.mxu0 %v3494
    %v4640 = vpop.f32.mrf.mxu0
    %v4641 = vadd.f32 %v4627, %v4640
    %v4642 = vpop.f32.mrf.mxu0
    %v4643 = vadd.f32 %v4629, %v4642
    %4644 = vdwg.mxu0
    %4645 = vmatpush.bf16.msra.mxu0 %v4481
    %4646 = vmatpush.bf16.msra.mxu0 %v4478
    %4647 = vmatpush.bf16.msra.mxu0 %v4475
    %4648 = vmatpush.bf16.msra.mxu0 %v4472
    %4649 = vmatpush.bf16.msra.mxu0 %v4469
    %4650 = vmatpush.bf16.msra.mxu0 %v4466
    %4651 = vmatpush.bf16.msra.mxu0 %v4463
    %4652 = vmatpush.bf16.msra.mxu0 %v4460
    %4653 = vmatmul.bf16.gmra.mxu0 %v3492
    %v4654 = vpop.f32.mrf.mxu0
    %v4655 = vadd.f32 %v4214, %v4654
    %v4656 = vpop.f32.mrf.mxu0
    %v4657 = vadd.f32 %v4214, %v4656
    %4658 = vdwg.mxu0
    %4659 = vmatpush.bf16.msra.mxu0 %v4505
    %4660 = vmatpush.bf16.msra.mxu0 %v4502
    %4661 = vmatpush.bf16.msra.mxu0 %v4499
    %4662 = vmatpush.bf16.msra.mxu0 %v4496
    %4663 = vmatpush.bf16.msra.mxu0 %v4493
    %4664 = vmatpush.bf16.msra.mxu0 %v4490
    %4665 = vmatpush.bf16.msra.mxu0 %v4487
    %4666 = vmatpush.bf16.msra.mxu0 %v4484
    %4667 = vmatmul.bf16.gmra.mxu0 %v3493
    %v4668 = vpop.f32.mrf.mxu0
    %v4669 = vadd.f32 %v4655, %v4668
    %v4670 = vpop.f32.mrf.mxu0
    %v4671 = vadd.f32 %v4657, %v4670
    %4672 = vdwg.mxu0
    %4673 = vmatpush.bf16.msra.mxu0 %v4529
    %4674 = vmatpush.bf16.msra.mxu0 %v4526
    %4675 = vmatpush.bf16.msra.mxu0 %v4523
    %4676 = vmatpush.bf16.msra.mxu0 %v4520
    %4677 = vmatpush.bf16.msra.mxu0 %v4517
    %4678 = vmatpush.bf16.msra.mxu0 %v4514
    %4679 = vmatpush.bf16.msra.mxu0 %v4511
    %4680 = vmatpush.bf16.msra.mxu0 %v4508
    %4681 = vmatmul.bf16.gmra.mxu0 %v3494
    %v4682 = vpop.f32.mrf.mxu0
    %v4683 = vadd.f32 %v4669, %v4682
    %v4684 = vpop.f32.mrf.mxu0
    %v4685 = vadd.f32 %v4671, %v4684
    %4686 = vdwg.mxu0
    %4687 = vmatpush.bf16.msra.mxu0 %v4482
    %4688 = vmatpush.bf16.msra.mxu0 %v4479
    %4689 = vmatpush.bf16.msra.mxu0 %v4476
    %4690 = vmatpush.bf16.msra.mxu0 %v4473
    %4691 = vmatpush.bf16.msra.mxu0 %v4470
    %4692 = vmatpush.bf16.msra.mxu0 %v4467
    %4693 = vmatpush.bf16.msra.mxu0 %v4464
    %4694 = vmatpush.bf16.msra.mxu0 %v4461
    %4695 = vmatmul.bf16.gmra.mxu0 %v3492
    %v4696 = vpop.f32.mrf.mxu0
    %v4697 = vadd.f32 %v4215, %v4696
    %v4698 = vpop.f32.mrf.mxu0
    %v4699 = vadd.f32 %v4215, %v4698
    %4700 = vdwg.mxu0
    %4701 = vmatpush.bf16.msra.mxu0 %v4506
    %4702 = vmatpush.bf16.msra.mxu0 %v4503
    %4703 = vmatpush.bf16.msra.mxu0 %v4500
    %4704 = vmatpush.bf16.msra.mxu0 %v4497
    %4705 = vmatpush.bf16.msra.mxu0 %v4494
    %4706 = vmatpush.bf16.msra.mxu0 %v4491
    %4707 = vmatpush.bf16.msra.mxu0 %v4488
    %4708 = vmatpush.bf16.msra.mxu0 %v4485
    %4709 = vmatmul.bf16.gmra.mxu0 %v3493
    %v4710 = vpop.f32.mrf.mxu0
    %v4711 = vadd.f32 %v4697, %v4710
    %v4712 = vpop.f32.mrf.mxu0
    %v4713 = vadd.f32 %v4699, %v4712
    %4714 = vdwg.mxu0
    %4715 = vmatpush.bf16.msra.mxu0 %v4530
    %4716 = vmatpush.bf16.msra.mxu0 %v4527
    %4717 = vmatpush.bf16.msra.mxu0 %v4524
    %4718 = vmatpush.bf16.msra.mxu0 %v4521
    %4719 = vmatpush.bf16.msra.mxu0 %v4518
    %4720 = vmatpush.bf16.msra.mxu0 %v4515
    %4721 = vmatpush.bf16.msra.mxu0 %v4512
    %4722 = vmatpush.bf16.msra.mxu0 %v4509
    %4723 = vmatmul.bf16.gmra.mxu0 %v3494
    %v4724 = vpop.f32.mrf.mxu0
    %v4725 = vadd.f32 %v4711, %v4724
    %v4726 = vpop.f32.mrf.mxu0
    %v4727 = vadd.f32 %v4713, %v4726
    %4728 = vdwg.mxu0
    %v4729 = vmax.f32 %v4641, 0.0
    %v4730 = vmax.f32 %v4683, 0.0
    %v4731 = vmax.f32 %v4725, 0.0
    %v4732 = vmax.f32 %v4643, 0.0
    %v4733 = vmax.f32 %v4685, 0.0
    %v4734 = vmax.f32 %v4727, 0.0
    %v4735 = vld [vmem:[#allocation14] sm:$0x7]
    %v4737 = vperm.slane %v4735, 0
    %v4738 = vperm.slane %v4735, 1
    %v4739 = vperm.slane %v4735, 2
    %v4743 = vmul.f32 %v4109, %v4737
    %v4744 = vmul.f32 %v4110, %v4738
    %v4745 = vmul.f32 %v4111, %v4739
    %v4746 = vmul.f32 %v4112, %v4737
    %v4747 = vmul.f32 %v4113, %v4738
    %v4748 = vmul.f32 %v4114, %v4739
    %v4749 = vadd.f32 %v4743, %v4744
    %v4750 = vadd.f32 %v4749, %v4745
    %4751 = vadd.xlane.f32.xlu0 %v4750
    %v4752 = vpop.xlane.xlu0 %4751
    %v4753 = vadd.f32 %v4746, %v4747
    %v4754 = vadd.f32 %v4753, %v4748
    %4755 = vadd.xlane.f32.xlu0 %v4754
    %v4756 = vpop.xlane.xlu0 %4755
    %v4759 = vlaneseq
    %v4760 = vand.u32 %v4759, 127
    %v4761 = vperm.slane %v4752, %v4760
    %v4762 = vperm.slane %v4756, %v4760
    %vm4763 = vcmask 1041409
    %v4764 = vsel %vm4763, %v4762, %v4761
    %vm4766 = vcmask 58368
    %v4767 = vsel %vm4766, %v4764, -inf
    %4768 = vmax.xlane.f32.xlu0 %v4767
    %v4769 = vpop.xlane.xlu0 %4768
    %v4771 = vperm.slane %v4769, 0
    %v4772 = vperm.slane %v4769, 1
    %v4775 = vsub.f32 %v4752, %v4771
    %v4776 = vsub.f32 %v4756, %v4772
    %v4777 = vmul.f32 %v4775, 1.442695
    %v4778 = vpow.pop %v4777
    %v4779 = vmul.f32 %v4776, 1.442695
    %v4780 = vpow.pop %v4779
    %4783 = vset.pattern.permute.xlu0 0
    %4784 = vperm.xlu0 %4783, %v4778
    %v4785 = vpop.permute.xlu0 %4784
    %4786 = vset.pattern.permute.xlu0 0
    %4787 = vperm.xlu0 %4786, %v4780
    %v4788 = vpop.permute.xlu0 %4787
    %v4789 = vperm.slane %v4785, %v4760
    %v4790 = vperm.slane %v4788, %v4760
    %v4791 = vsel %vm4763, %v4790, %v4789
    %v4793 = vsel %vm4766, %v4791, 0.0
    %4794 = vadd.xlane.f32.xlu0 %v4793
    %v4795 = vpop.xlane.xlu0 %4794
    %v4796 = vrcp.pop %v4795
    %v4798 = vperm.slane %v4796, 0
    %v4799 = vperm.slane %v4796, 1
    %v4802 = vmul.f32 %v4778, %v4798
    %v4803 = vmul.f32 %v4780, %v4799
    %4805 = vset.pattern.permute.xlu0 0
    %4806 = vperm.xlu0 %4805, %v4802
    %v4807 = vpop.permute.xlu0 %4806
    %4810 = vset.pattern.permute.xlu0 0
    %4811 = vperm.xlu0 %4810, %v4803
    %v4812 = vpop.permute.xlu0 %4811
    %v4814 = vmul.f32 %v4729, %v4807
    %v4815 = vmul.f32 %v4730, %v4807
    %v4816 = vmul.f32 %v4731, %v4807
    %v4817 = vmul.f32 %v4732, %v4812
    %v4818 = vmul.f32 %v4733, %v4812
    %v4819 = vmul.f32 %v4734, %v4812
    %v4820 = vrot.slane %v4814, 4
    %v4821 = vadd.f32 %v4814, %v4820
    %v4822 = vrot.slane %v4821, 2
    %v4823 = vadd.f32 %v4821, %v4822
    %v4824 = vrot.slane %v4823, 1
    %v4825 = vadd.f32 %v4823, %v4824
    %v4826 = vrot.slane %v4815, 4
    %v4827 = vadd.f32 %v4815, %v4826
    %v4828 = vrot.slane %v4827, 2
    %v4829 = vadd.f32 %v4827, %v4828
    %v4830 = vrot.slane %v4829, 1
    %v4831 = vadd.f32 %v4829, %v4830
    %v4832 = vrot.slane %v4816, 4
    %v4833 = vadd.f32 %v4816, %v4832
    %v4834 = vrot.slane %v4833, 2
    %v4835 = vadd.f32 %v4833, %v4834
    %v4836 = vrot.slane %v4835, 1
    %v4837 = vadd.f32 %v4835, %v4836
    %v4838 = vrot.slane %v4817, 4
    %v4839 = vadd.f32 %v4817, %v4838
    %v4840 = vrot.slane %v4839, 2
    %v4841 = vadd.f32 %v4839, %v4840
    %v4842 = vrot.slane %v4841, 1
    %v4843 = vadd.f32 %v4841, %v4842
    %v4844 = vrot.slane %v4818, 4
    %v4845 = vadd.f32 %v4818, %v4844
    %v4846 = vrot.slane %v4845, 2
    %v4847 = vadd.f32 %v4845, %v4846
    %v4848 = vrot.slane %v4847, 1
    %v4849 = vadd.f32 %v4847, %v4848
    %v4850 = vrot.slane %v4819, 4
    %v4851 = vadd.f32 %v4819, %v4850
    %v4852 = vrot.slane %v4851, 2
    %v4853 = vadd.f32 %v4851, %v4852
    %v4854 = vrot.slane %v4853, 1
    %v4855 = vadd.f32 %v4853, %v4854
    %v4862 = vrot.slane %v4831, 6
    %v4863 = vrot.slane %v4837, 4
    %v4864 = vrot.slane %v4849, 6
    %v4865 = vrot.slane %v4855, 4
    %vm4866 = vcmask 1041408
    %v4867 = vsel %vm4866, %v4825, %v4862
    %vm4868 = vcmask 1043456
    %v4869 = vsel %vm4868, %v4867, %v4863
    %v4870 = vsel %vm4866, %v4843, %v4864
    %v4871 = vsel %vm4868, %v4870, %v4865
    %vm4872 = vcmask 1044484
    %v4873 = vsel %vm4872, %v4869, %v4869
    %vm4874 = vcmask 1046534
    %v4875 = vsel %vm4874, %v4869, %v4873
    %v4876 = vrot.slane %v4871, 7
    %v4877 = vsel %vm4763, %v4876, %v4875
    %vm4878 = vcmask 1043459
    %v4879 = vsel %vm4878, %v4876, %v4877
    %vm4880 = vcmask 1045509
    %v4881 = vsel %vm4880, %v4876, %v4879
    %vm4882 = vcmask 1047559
    %v4883 = vsel %vm4882, %v4876, %v4881
    %4885 = vst [vmem:[#allocation16] sm:$0x3f] %v4883
    %4886 = vst.msk [vmem:[#allocation17] sm:$0x3] %vm4766, %v4764
    // Predicated region
    $region66: #{tpu_custom_call.1} parent=1 // pred_check
      _
    $region67: #{tpu_custom_call.1} parent=1 // pred_check_branch
      %4888 = sbr.rel (0) target = $region69
    $region68: #{tpu_custom_call.1} parent=1 // pred_region
      %4890 = vsyncadd [#allocation4], 0
      %s4892 = sshll.u32 [#allocation16], 4
      %s4893 = int_to_ptr.vmem [resolvable:$true] %s4892
      %s4894 = sshll.u32 %s8, 4
      %s4895 = int_to_ptr.hbm [resolvable:$true] %s4894
      %4897 = dma.vmem_to_hbm [thread:$0]  %s4893, 96, %s4895, [#allocation4]
    $region69: #{tpu_custom_call.1} parent=1 // pred_fallthru
      _
    // Predicated region
    $region70: #{tpu_custom_call.1} parent=1 // pred_check
      _
    $region71: #{tpu_custom_call.1} parent=1 // pred_check_branch
      %4899 = sbr.rel (0) target = $region73
    $region72: #{tpu_custom_call.1} parent=1 // pred_region
      %4901 = vsyncadd [#allocation18], 0
      %s4903 = sshll.u32 [#allocation17], 4
      %s4904 = int_to_ptr.vmem [resolvable:$true] %s4903
      %s4905 = sshll.u32 %s9, 4
      %s4906 = int_to_ptr.hbm [resolvable:$true] %s4905
      %4908 = dma.vmem_to_hbm [thread:$0]  %s4904, 32, %s4906, [#allocation18]
    $region73: #{tpu_custom_call.1} parent=1 // pred_fallthru
      _
    // Predicated region
    $region74: #{tpu_custom_call.1} parent=1 // pred_check
      _
    $region75: #{tpu_custom_call.1} parent=1 // pred_check_branch
      %4910 = sbr.rel (0) target = $region77
    $region76: #{tpu_custom_call.1} parent=1 // pred_region
      %4912 = dma.done [#allocation4], 96
    $region77: #{tpu_custom_call.1} parent=1 // pred_fallthru
      _
    // Predicated region
    $region78: #{tpu_custom_call.1} parent=1 // pred_check
      _
    $region79: #{tpu_custom_call.1} parent=1 // pred_check_branch
      %4914 = sbr.rel (0) target = $region81
    $region80: #{tpu_custom_call.1} parent=1 // pred_region
      %4916 = dma.done [#allocation18], 32
    $region81: #{tpu_custom_call.1} parent=1 // pred_fallthru
      _
    %4917 = vsyncpa [#allocation3], 1
    %4918 = vsyncpa [#allocation6], 1
    %4919 = vsyncpa [#allocation9], 1
    %4920 = vsyncpa [#allocation12], 1
    %4921 = vsyncpa [#allocation15], 1
    %4922 = vsyncpa [#allocation4], 1
    %4923 = vsyncpa [#allocation18], 1

</llo_original>
